<compile_context>
chip_gen: v7x
topology: tpu7x:2x2x1
jax: 0.10.0
libtpu: 0.0.40
codegen_flags: <defaults>
</compile_context>

<pallas_src>
"""Pallas TPU implementation of sharedNet (TAHAG_Independent) forward pass.

Single fused kernel: data_bn + three unit_gcn layers (adaptive=True,
attention=True, residual=True) + the final node mean.

Performance design
------------------
* grid = (batch_groups,), "parallel" (v7x shards groups over its two
  TensorCores); no intermediate activation ever round-trips through HBM.
* Each grid step lane-packs BT samples (default 2) along the lane axis:
  tiles become (C, BT*62) = (C, 124), i.e. near-full 128-lane vregs, so every
  1x1-conv matmul / BN affine / relu / SE scale is amortized across samples
  and the per-grid-step overhead is halved.
* Per-sample graph mixing (tanh-attention adjacency and x @ A3) is expressed
  with a block-diagonal adjacency: cross-sample attention blocks are masked
  out and PA is pre-expanded to kron(I_BT, PA), keeping everything a plain
  2-D MXU matmul (no batched dot_general, no lane concatenation/relayout).
* Per-sample node means (SE attention + final output) and the per-sample
  broadcast of the SE gate are tiny MXU matmuls against constant selector
  matrices instead of XLU reshapes/reductions across the packed lane axis.
* Inference-mode BatchNorm affines (running stats mean=0 / var=1 at init) and
  the 1/inter attention scale are folded into the 1x1-conv weights/biases at
  parameter-prep time; conv_a/conv_b share the input so they are stacked into
  a single matmul; per-channel bias/BN vectors are packed into one (K, 1)
  operand per layer; the three alpha scalars travel through SMEM.  Layer-1
  input channels are zero-padded 5 -> 8 once at init (weights) / per call (x).
* All weight operands use a constant block index, so they are DMA'd to VMEM
  once and stay resident across the whole grid.

TODO(synk): PyTorch default train-mode BatchNorm (batch statistics) is not
reproduced; BN is evaluated in inference mode with running stats.
"""

import math

import jax
import jax.numpy as jnp
from jax import lax
from jax.experimental import pallas as pl
from jax.experimental.pallas import tpu as pltpu

N_NODES = 62
IN_FEATS = 5
C_IN_PAD = 8          # layer-1 input channels zero-padded 5 -> 8 (sublane aligned)
BN_EPS = 1e-5
LAYER_WIDTHS = (32, 64, 128)
_LAYER_KEYS = ("wab", "bab", "wd", "wr", "w1", "w2", "bvec")   # "pa" handled separately


# ---------------------------- kernel ----------------------------

def _gcn_layer(x, alpha, dmask, mmean, mbcast,
               pa_ref, wab_ref, bab_ref, wd_ref, wr_ref, w1_ref, w2_ref, bv_ref):
    """One unit_gcn layer on a lane-packed tile x of shape (C_in, L = BT*N)."""
    f32 = jnp.float32
    inter = wab_ref.shape[0] // 2
    c_out = wd_ref.shape[0]
    c_half = w1_ref.shape[0]

    # packed per-channel vectors (conv biases with BN folded in, SE biases, global_bn)
    bd = bv_ref[pl.ds(0, c_out), :]
    br = bv_ref[pl.ds(c_out, c_out), :]
    b1 = bv_ref[pl.ds(2 * c_out, c_half), :]
    b2 = bv_ref[pl.ds(2 * c_out + c_half, c_out), :]
    gbn_s = bv_ref[pl.ds(3 * c_out + c_half, c_out), :]
    gbn_b = bv_ref[pl.ds(4 * c_out + c_half, c_out), :]

    # adaptive adjacency -- conv_a / conv_b share x, so one stacked matmul.
    ab = jnp.dot(wab_ref[...], x, preferred_element_type=f32) + bab_ref[...]   # (2I, L)
    a1 = ab[:inter]                       # conv_a rows (pre-scaled by 1/inter)
    a2 = ab[inter:]                       # conv_b rows
    # attn = tanh(a1^T @ a2); cross-sample blocks are junk and masked out below.
    attn = jnp.tanh(lax.dot_general(a1, a2, (((0,), (0,)), ((), ())),
                                    preferred_element_type=f32))               # (L, L)
    a3 = pa_ref[...] + (attn * alpha) * dmask        # block-diagonal adjacency (L, L)

    # y = BN(conv_d(x @ A3))        (BN scale folded into wd / bd)
    z = jnp.dot(x, a3, preferred_element_type=f32)                             # (C_in, L)
    y = jnp.dot(wd_ref[...], z, preferred_element_type=f32) + bd               # (C_out, L)
    # residual branch: BN(Conv1d(x)) (BN folded into wr / br)
    res = jnp.dot(wr_ref[...], x, preferred_element_type=f32) + br             # (C_out, L)
    y = jnp.maximum(y + res, 0.0)                                              # relu

    # squeeze-excite channel attention: per-sample node-mean and the broadcast
    # of the gate back over nodes are tiny MXU matmuls against constants.
    fe = jnp.dot(y, mmean, preferred_element_type=f32)                         # (C_out, BT)
    fe1 = jnp.maximum(jnp.dot(w1_ref[...], fe, preferred_element_type=f32) + b1, 0.0)
    fe2 = jax.nn.sigmoid(jnp.dot(w2_ref[...], fe1, preferred_element_type=f32) + b2)
    y = y * jnp.dot(fe2, mbcast, preferred_element_type=f32) + y               # (C_out, L)

    y = y * gbn_s + gbn_b            # global_bn (inference affine)
    y = y + res                      # residual=True: add_residual_gcn(x) added again
    return jnp.maximum(y, 0.0)       # global relu


def _shared_net_kernel(alphas_ref, x_ref, dbs_ref, dbb_ref,
                       dmask_ref, mmean_ref, mbcast_ref, *refs):
    l1 = refs[0:8]
    l2 = refs[8:16]
    l3 = refs[16:24]
    y1_ref, y2_ref, out_ref = refs[24], refs[25], refs[26]

    dmask = dmask_ref[...]
    mmean = mmean_ref[...]
    mbcast = mbcast_ref[...]

    # data_bn: per-input-channel inference affine (padded channels stay zero).
    x = x_ref[0] * dbs_ref[...] + dbb_ref[...]                   # (C_IN_PAD, L)

    y1 = _gcn_layer(x, alphas_ref[0], dmask, mmean, mbcast, *l1)   # (32, L)
    y1_ref[0] = y1
    y2 = _gcn_layer(y1, alphas_ref[1], dmask, mmean, mbcast, *l2)  # (64, L)
    y2_ref[0] = y2
    y3 = _gcn_layer(y2, alphas_ref[2], dmask, mmean, mbcast, *l3)  # (128, L)
    # per-sample node mean as one matmul (1/62 baked into mmean)
    out_ref[0] = jnp.dot(y3, mmean, preferred_element_type=jnp.float32)  # (128, BT)


# ---------------------------- wrapper ----------------------------

def shared_net_forward(x, params, batch_tile=None):
    """x: anything reshapeable to (-1, 62, 5). Returns (out, hid1, hid2)."""
    x = jnp.transpose(x.reshape(-1, N_NODES, IN_FEATS), (0, 2, 1)).astype(jnp.float32)
    B = x.shape[0]
    bt = batch_tile if batch_tile is not None else (2 if B >= 2 else 1)
    G = -(-B // bt)          # number of grid steps (batch groups)
    Bp = G * bt
    L = bt * N_NODES         # lane-packed width (124 for bt=2)

    if Bp != B:              # zero-pad batch to a multiple of the batch tile
        x = jnp.pad(x, ((0, Bp - B), (0, 0), (0, 0)))
    x = jnp.pad(x, ((0, 0), (0, C_IN_PAD - IN_FEATS), (0, 0)))          # (Bp, 8, 62)
    xp = x.reshape(G, bt, C_IN_PAD, N_NODES).transpose(0, 2, 1, 3).reshape(G, C_IN_PAD, L)

    # constant per-lane sample-id selectors (block-diag mask, mean / broadcast ops)
    sid = jnp.arange(L, dtype=jnp.int32) // N_NODES
    grp = jnp.arange(bt, dtype=jnp.int32)
    dmask = (sid[:, None] == sid[None, :]).astype(jnp.float32)              # (L, L)
    mmean = (sid[:, None] == grp[None, :]).astype(jnp.float32) / N_NODES    # (L, bt)
    mbcast = (grp[:, None] == sid[None, :]).astype(jnp.float32)             # (bt, L)

    operands = [params["alphas"], xp, params["data_bn_s"], params["data_bn_b"],
                dmask, mmean, mbcast]
    in_specs = [
        pl.BlockSpec(memory_space=pltpu.MemorySpace.SMEM),              # alphas (3,)
        pl.BlockSpec((1, C_IN_PAD, L), lambda g: (g, 0, 0)),            # x tile
        pl.BlockSpec((C_IN_PAD, 1), lambda g: (0, 0)),                  # data_bn scale
        pl.BlockSpec((C_IN_PAD, 1), lambda g: (0, 0)),                  # data_bn bias
        pl.BlockSpec((L, L), lambda g: (0, 0)),                         # block-diag mask
        pl.BlockSpec((L, bt), lambda g: (0, 0)),                        # node-mean op
        pl.BlockSpec((bt, L), lambda g: (0, 0)),                        # broadcast op
    ]
    eye_bt = jnp.eye(bt, dtype=jnp.float32)
    for lname in ("l1", "l2", "l3"):
        lp = params[lname]
        pa_bd = jnp.kron(eye_bt, lp["pa"])                              # (L, L) block-diag PA
        operands.append(pa_bd)
        in_specs.append(pl.BlockSpec((L, L), lambda g: (0, 0)))
        for key in _LAYER_KEYS:
            a = lp[key]
            operands.append(a)
            in_specs.append(pl.BlockSpec(a.shape, lambda g: (0, 0)))    # whole array

    c1, c2, c3 = LAYER_WIDTHS
    out_shape = (jax.ShapeDtypeStruct((G, c1, L), jnp.float32),
                 jax.ShapeDtypeStruct((G, c2, L), jnp.float32),
                 jax.ShapeDtypeStruct((G, c3, bt), jnp.float32))
    out_specs = (pl.BlockSpec((1, c1, L), lambda g: (g, 0, 0)),
                 pl.BlockSpec((1, c2, L), lambda g: (g, 0, 0)),
                 pl.BlockSpec((1, c3, bt), lambda g: (g, 0, 0)))

    y1, y2, y3m = pl.pallas_call(
        _shared_net_kernel,
        grid=(G,),
        out_shape=out_shape,
        in_specs=in_specs,
        out_specs=out_specs,
        compiler_params=pltpu.CompilerParams(
            dimension_semantics=("parallel",)),     # v7x: batch groups over 2 TCs
    )(*operands)

    def _unpack(y, c):
        y = y.reshape(G, c, bt, N_NODES).transpose(0, 2, 1, 3).reshape(Bp, c, N_NODES)
        return y[:B].reshape(B, c * N_NODES)        # == torch.reshape((B,c,62)->(B,62*c))

    hid1 = _unpack(y1, c1)
    hid2 = _unpack(y2, c2)
    out = jnp.transpose(y3m, (0, 2, 1)).reshape(Bp, c3)[:B]
    return out, hid1, hid2


# ---------------------------- parameter init ----------------------------

def make_unit_gcn_params(key, c_in, c_out, A, c_in_pad=None):
    """unit_gcn params with inference-mode BN + 1/inter scale folded in."""
    c_in_pad = c_in if c_in_pad is None else c_in_pad
    inter = c_out // 4          # coff_emb = 4
    c_half = c_out // 2         # attention reduction = 2
    k = jax.random.split(key, 5)
    inv = 1.0 / math.sqrt(1.0 + BN_EPS)     # BN: gamma / sqrt(var + eps), var=1, mean=0

    def conv_w(kk, o):
        # nn.init.kaiming_normal_(w, mode='fan_out'), kernel_size=1 -> fan_out = o
        w = jax.random.normal(kk, (o, c_in), jnp.float32) * math.sqrt(2.0 / o)
        if c_in_pad > c_in:     # zero-pad dead input channels (done once, at init)
            w = jnp.pad(w, ((0, 0), (0, c_in_pad - c_in)))
        return w

    wa = conv_w(k[0], inter)
    wb = conv_w(k[1], inter)
    wd = conv_w(k[2], c_out)
    wr = conv_w(k[3], c_out)
    ba = jnp.zeros((inter, 1), jnp.float32)
    bb = jnp.zeros((inter, 1), jnp.float32)
    bd = jnp.zeros((c_out, 1), jnp.float32)
    br = jnp.zeros((c_out, 1), jnp.float32)
    # fc1_fa: kaiming_normal_ (default fan_in = c_out); fc2_fa zero-initialized.
    w1 = jax.random.normal(k[4], (c_half, c_out), jnp.float32) * math.sqrt(2.0 / c_out)
    b1 = jnp.zeros((c_half, 1), jnp.float32)
    w2 = jnp.zeros((c_out, c_half), jnp.float32)
    b2 = jnp.zeros((c_out, 1), jnp.float32)

    # fold inference-mode BN affines into the conv weights / biases
    bn_s, bn_b = 1e-6 * inv, 0.0            # bn_init(self.bn, 1e-6)
    rbn_s, rbn_b = inv, 0.0                 # residual-branch BN (gamma = 1)
    wd_f, bd_f = wd * bn_s, bd * bn_s + bn_b
    wr_f, br_f = wr * rbn_s, br * rbn_s + rbn_b
    gbn_s = jnp.full((c_out, 1), inv, jnp.float32)
    gbn_b = jnp.zeros((c_out, 1), jnp.float32)

    return dict(
        pa=A.astype(jnp.float32),
        # conv_a (pre-scaled by 1/inter) stacked on top of conv_b
        wab=jnp.concatenate([wa / inter, wb], axis=0),
        bab=jnp.concatenate([ba / inter, bb], axis=0),
        wd=wd_f, wr=wr_f, w1=w1, w2=w2,
        bvec=jnp.concatenate([bd_f, br_f, b1, b2, gbn_s, gbn_b], axis=0),
    )


def make_shared_net_params(key, A):
    k1, k2, k3 = jax.random.split(key, 3)
    inv = 1.0 / math.sqrt(1.0 + BN_EPS)
    dbn_s = jnp.concatenate(
        [jnp.full((IN_FEATS, 1), inv, jnp.float32),
         jnp.zeros((C_IN_PAD - IN_FEATS, 1), jnp.float32)], axis=0)
    return dict(
        alphas=jnp.zeros((3,), jnp.float32),       # unit_gcn alpha params (init 0)
        data_bn_s=dbn_s,
        data_bn_b=jnp.zeros((C_IN_PAD, 1), jnp.float32),
        l1=make_unit_gcn_params(k1, IN_FEATS, 32, A, c_in_pad=C_IN_PAD),
        l2=make_unit_gcn_params(k2, 32, 64, A),
        l3=make_unit_gcn_params(k3, 64, 128, A),
    )


if __name__ == "__main__":
    key = jax.random.PRNGKey(0)
    k_in, k_params = jax.random.split(key)

    # deterministic normalized adjacency for 62 nodes (ring graph + self loops)
    eye = jnp.eye(N_NODES, dtype=jnp.float32)
    A = 0.5 * eye + 0.25 * jnp.roll(eye, 1, axis=1) + 0.25 * jnp.roll(eye, -1, axis=1)

    params = make_shared_net_params(k_params, A)
    x = jax.random.normal(k_in, (2, N_NODES, IN_FEATS), jnp.float32)   # B=2, 62 nodes, 5 feats

    fwd = jax.jit(shared_net_forward)
    out, h1, h2 = fwd(x, params)
    jax.block_until_ready((out, h1, h2))

    assert out.shape == (2, 128)
    assert h1.shape == (2, 62 * 32)
    assert h2.shape == (2, 62 * 64)
    assert bool(jnp.isfinite(out).all() & jnp.isfinite(h1).all() & jnp.isfinite(h2).all())
    print("KERNEL_OK")
</pallas_src>

<mosaic_0001>
module attributes {stable_mosaic.version = 11 : i64} {
  func.func @_shared_net_kernel(%arg0: i32, %arg1: memref<3xf32, #tpu.memory_space<smem>>, %arg2: memref<1x8x124xf32, #tpu.memory_space<vmem>>, %arg3: memref<8x1xf32, #tpu.memory_space<vmem>>, %arg4: memref<8x1xf32, #tpu.memory_space<vmem>>, %arg5: memref<124x124xf32, #tpu.memory_space<vmem>>, %arg6: memref<124x2xf32, #tpu.memory_space<vmem>>, %arg7: memref<2x124xf32, #tpu.memory_space<vmem>>, %arg8: memref<124x124xf32, #tpu.memory_space<vmem>>, %arg9: memref<16x8xf32, #tpu.memory_space<vmem>>, %arg10: memref<16x1xf32, #tpu.memory_space<vmem>>, %arg11: memref<32x8xf32, #tpu.memory_space<vmem>>, %arg12: memref<32x8xf32, #tpu.memory_space<vmem>>, %arg13: memref<16x32xf32, #tpu.memory_space<vmem>>, %arg14: memref<32x16xf32, #tpu.memory_space<vmem>>, %arg15: memref<176x1xf32, #tpu.memory_space<vmem>>, %arg16: memref<124x124xf32, #tpu.memory_space<vmem>>, %arg17: memref<32x32xf32, #tpu.memory_space<vmem>>, %arg18: memref<32x1xf32, #tpu.memory_space<vmem>>, %arg19: memref<64x32xf32, #tpu.memory_space<vmem>>, %arg20: memref<64x32xf32, #tpu.memory_space<vmem>>, %arg21: memref<32x64xf32, #tpu.memory_space<vmem>>, %arg22: memref<64x32xf32, #tpu.memory_space<vmem>>, %arg23: memref<352x1xf32, #tpu.memory_space<vmem>>, %arg24: memref<124x124xf32, #tpu.memory_space<vmem>>, %arg25: memref<64x64xf32, #tpu.memory_space<vmem>>, %arg26: memref<64x1xf32, #tpu.memory_space<vmem>>, %arg27: memref<128x64xf32, #tpu.memory_space<vmem>>, %arg28: memref<128x64xf32, #tpu.memory_space<vmem>>, %arg29: memref<64x128xf32, #tpu.memory_space<vmem>>, %arg30: memref<128x64xf32, #tpu.memory_space<vmem>>, %arg31: memref<704x1xf32, #tpu.memory_space<vmem>>, %arg32: memref<1x32x124xf32, #tpu.memory_space<vmem>>, %arg33: memref<1x64x124xf32, #tpu.memory_space<vmem>>, %arg34: memref<1x128x2xf32, #tpu.memory_space<vmem>>) attributes {dimension_semantics = [#tpu.dimension_semantics<parallel>], iteration_bounds = array<i64: 1>, scalar_prefetch = 0 : i64, scratch_operands = 0 : i64, tpu.core_type = #tpu.core_type<tc>, window_params = [{transform_indices = @transform_0, window_bounds = array<i64: 3>}, {transform_indices = @transform_1, window_bounds = array<i64: 1, 8, 124>}, {pipeline_mode = #tpu.pipeline_mode<synchronous>, transform_indices = @transform_2, window_bounds = array<i64: 8, 1>}, {pipeline_mode = #tpu.pipeline_mode<synchronous>, transform_indices = @transform_3, window_bounds = array<i64: 8, 1>}, {pipeline_mode = #tpu.pipeline_mode<synchronous>, transform_indices = @transform_4, window_bounds = array<i64: 124, 124>}, {pipeline_mode = #tpu.pipeline_mode<synchronous>, transform_indices = @transform_5, window_bounds = array<i64: 124, 2>}, {pipeline_mode = #tpu.pipeline_mode<synchronous>, transform_indices = @transform_6, window_bounds = array<i64: 2, 124>}, {pipeline_mode = #tpu.pipeline_mode<synchronous>, transform_indices = @transform_7, window_bounds = array<i64: 124, 124>}, {pipeline_mode = #tpu.pipeline_mode<synchronous>, transform_indices = @transform_8, window_bounds = array<i64: 16, 8>}, {pipeline_mode = #tpu.pipeline_mode<synchronous>, transform_indices = @transform_9, window_bounds = array<i64: 16, 1>}, {pipeline_mode = #tpu.pipeline_mode<synchronous>, transform_indices = @transform_10, window_bounds = array<i64: 32, 8>}, {pipeline_mode = #tpu.pipeline_mode<synchronous>, transform_indices = @transform_11, window_bounds = array<i64: 32, 8>}, {pipeline_mode = #tpu.pipeline_mode<synchronous>, transform_indices = @transform_12, window_bounds = array<i64: 16, 32>}, {pipeline_mode = #tpu.pipeline_mode<synchronous>, transform_indices = @transform_13, window_bounds = array<i64: 32, 16>}, {pipeline_mode = #tpu.pipeline_mode<synchronous>, transform_indices = @transform_14, window_bounds = array<i64: 176, 1>}, {pipeline_mode = #tpu.pipeline_mode<synchronous>, transform_indices = @transform_15, window_bounds = array<i64: 124, 124>}, {pipeline_mode = #tpu.pipeline_mode<synchronous>, transform_indices = @transform_16, window_bounds = array<i64: 32, 32>}, {pipeline_mode = #tpu.pipeline_mode<synchronous>, transform_indices = @transform_17, window_bounds = array<i64: 32, 1>}, {pipeline_mode = #tpu.pipeline_mode<synchronous>, transform_indices = @transform_18, window_bounds = array<i64: 64, 32>}, {pipeline_mode = #tpu.pipeline_mode<synchronous>, transform_indices = @transform_19, window_bounds = array<i64: 64, 32>}, {pipeline_mode = #tpu.pipeline_mode<synchronous>, transform_indices = @transform_20, window_bounds = array<i64: 32, 64>}, {pipeline_mode = #tpu.pipeline_mode<synchronous>, transform_indices = @transform_21, window_bounds = array<i64: 64, 32>}, {pipeline_mode = #tpu.pipeline_mode<synchronous>, transform_indices = @transform_22, window_bounds = array<i64: 352, 1>}, {pipeline_mode = #tpu.pipeline_mode<synchronous>, transform_indices = @transform_23, window_bounds = array<i64: 124, 124>}, {pipeline_mode = #tpu.pipeline_mode<synchronous>, transform_indices = @transform_24, window_bounds = array<i64: 64, 64>}, {pipeline_mode = #tpu.pipeline_mode<synchronous>, transform_indices = @transform_25, window_bounds = array<i64: 64, 1>}, {pipeline_mode = #tpu.pipeline_mode<synchronous>, transform_indices = @transform_26, window_bounds = array<i64: 128, 64>}, {pipeline_mode = #tpu.pipeline_mode<synchronous>, transform_indices = @transform_27, window_bounds = array<i64: 128, 64>}, {pipeline_mode = #tpu.pipeline_mode<synchronous>, transform_indices = @transform_28, window_bounds = array<i64: 64, 128>}, {pipeline_mode = #tpu.pipeline_mode<synchronous>, transform_indices = @transform_29, window_bounds = array<i64: 128, 64>}, {pipeline_mode = #tpu.pipeline_mode<synchronous>, transform_indices = @transform_30, window_bounds = array<i64: 704, 1>}, {transform_indices = @transform_31, window_bounds = array<i64: 1, 32, 124>}, {transform_indices = @transform_32, window_bounds = array<i64: 1, 64, 124>}, {transform_indices = @transform_33, window_bounds = array<i64: 1, 128, 2>}]} {
    %c0 = arith.constant 0 : index
    %c0_0 = arith.constant 0 : index
    %0 = vector.load %arg5[%c0, %c0_0] : memref<124x124xf32, #tpu.memory_space<vmem>>, vector<124x124xf32>
    %c0_1 = arith.constant 0 : index
    %c0_2 = arith.constant 0 : index
    %1 = vector.load %arg6[%c0_1, %c0_2] : memref<124x2xf32, #tpu.memory_space<vmem>>, vector<124x2xf32>
    %c0_3 = arith.constant 0 : index
    %c0_4 = arith.constant 0 : index
    %2 = vector.load %arg7[%c0_3, %c0_4] : memref<2x124xf32, #tpu.memory_space<vmem>>, vector<2x124xf32>
    %c0_5 = arith.constant 0 : index
    %c0_6 = arith.constant 0 : index
    %c0_7 = arith.constant 0 : index
    %3 = vector.load %arg2[%c0_5, %c0_6, %c0_7] : memref<1x8x124xf32, #tpu.memory_space<vmem>>, vector<1x8x124xf32>
    %4 = vector.shape_cast %3 : vector<1x8x124xf32> to vector<8x124xf32>
    %c0_8 = arith.constant 0 : index
    %c0_9 = arith.constant 0 : index
    %5 = vector.load %arg3[%c0_8, %c0_9] : memref<8x1xf32, #tpu.memory_space<vmem>>, vector<8x1xf32>
    %6 = vector.broadcast %5 : vector<8x1xf32> to vector<8x124xf32>
    %7 = arith.mulf %4, %6 : vector<8x124xf32>
    %c0_10 = arith.constant 0 : index
    %c0_11 = arith.constant 0 : index
    %8 = vector.load %arg4[%c0_10, %c0_11] : memref<8x1xf32, #tpu.memory_space<vmem>>, vector<8x1xf32>
    %9 = vector.broadcast %8 : vector<8x1xf32> to vector<8x124xf32>
    %10 = arith.addf %7, %9 : vector<8x124xf32>
    %c0_12 = arith.constant 0 : index
    %11 = memref.load %arg1[%c0_12] : memref<3xf32, #tpu.memory_space<smem>>
    %c0_13 = arith.constant 0 : index
    %c0_14 = arith.constant 0 : index
    %12 = vector.load %arg15[%c0_13, %c0_14] : memref<176x1xf32, #tpu.memory_space<vmem>>, vector<32x1xf32>
    %c32 = arith.constant 32 : index
    %c0_15 = arith.constant 0 : index
    %13 = vector.load %arg15[%c32, %c0_15] : memref<176x1xf32, #tpu.memory_space<vmem>>, vector<32x1xf32>
    %c64 = arith.constant 64 : index
    %c0_16 = arith.constant 0 : index
    %14 = vector.load %arg15[%c64, %c0_16] : memref<176x1xf32, #tpu.memory_space<vmem>>, vector<16x1xf32>
    %c80 = arith.constant 80 : index
    %c0_17 = arith.constant 0 : index
    %15 = vector.load %arg15[%c80, %c0_17] : memref<176x1xf32, #tpu.memory_space<vmem>>, vector<32x1xf32>
    %c112 = arith.constant 112 : index
    %c0_18 = arith.constant 0 : index
    %16 = vector.load %arg15[%c112, %c0_18] : memref<176x1xf32, #tpu.memory_space<vmem>>, vector<32x1xf32>
    %c144 = arith.constant 144 : index
    %c0_19 = arith.constant 0 : index
    %17 = vector.load %arg15[%c144, %c0_19] : memref<176x1xf32, #tpu.memory_space<vmem>>, vector<32x1xf32>
    %c0_20 = arith.constant 0 : index
    %c0_21 = arith.constant 0 : index
    %18 = vector.load %arg9[%c0_20, %c0_21] : memref<16x8xf32, #tpu.memory_space<vmem>>, vector<16x8xf32>
    %cst = arith.constant dense<0.000000e+00> : vector<16x124xf32>
    %19 = tpu.matmul %18, %10, %cst {dimension_numbers = #tpu.dot_dimension_numbers<[1], [0], [0], [1], [0, 0, 1, 1], [], []>} : vector<16x8xf32>, vector<8x124xf32>, vector<16x124xf32> -> vector<16x124xf32>
    %c0_22 = arith.constant 0 : index
    %c0_23 = arith.constant 0 : index
    %20 = vector.load %arg10[%c0_22, %c0_23] : memref<16x1xf32, #tpu.memory_space<vmem>>, vector<16x1xf32>
    %21 = vector.broadcast %20 : vector<16x1xf32> to vector<16x124xf32>
    %22 = arith.addf %19, %21 : vector<16x124xf32>
    %23 = vector.extract_strided_slice %22 {offsets = [0, 0], sizes = [8, 124], strides = [1, 1]} : vector<16x124xf32> to vector<8x124xf32>
    %24 = vector.extract_strided_slice %22 {offsets = [8, 0], sizes = [8, 124], strides = [1, 1]} : vector<16x124xf32> to vector<8x124xf32>
    %cst_24 = arith.constant dense<0.000000e+00> : vector<124x124xf32>
    %25 = tpu.matmul %23, %24, %cst_24 {dimension_numbers = #tpu.dot_dimension_numbers<[0], [0], [1], [1], [0, 1, 1, 1], [], []>} : vector<8x124xf32>, vector<8x124xf32>, vector<124x124xf32> -> vector<124x124xf32>
    %26 = math.tanh %25 : vector<124x124xf32>
    %c0_25 = arith.constant 0 : index
    %c0_26 = arith.constant 0 : index
    %27 = vector.load %arg8[%c0_25, %c0_26] : memref<124x124xf32, #tpu.memory_space<vmem>>, vector<124x124xf32>
    %28 = vector.broadcast %11 : f32 to vector<124x124xf32>
    %29 = arith.mulf %26, %28 : vector<124x124xf32>
    %30 = arith.mulf %29, %0 : vector<124x124xf32>
    %31 = arith.addf %27, %30 : vector<124x124xf32>
    %cst_27 = arith.constant dense<0.000000e+00> : vector<8x124xf32>
    %32 = tpu.matmul %10, %31, %cst_27 {dimension_numbers = #tpu.dot_dimension_numbers<[1], [0], [0], [1], [0, 0, 1, 1], [], []>} : vector<8x124xf32>, vector<124x124xf32>, vector<8x124xf32> -> vector<8x124xf32>
    %c0_28 = arith.constant 0 : index
    %c0_29 = arith.constant 0 : index
    %33 = vector.load %arg11[%c0_28, %c0_29] : memref<32x8xf32, #tpu.memory_space<vmem>>, vector<32x8xf32>
    %cst_30 = arith.constant dense<0.000000e+00> : vector<32x124xf32>
    %34 = tpu.matmul %33, %32, %cst_30 {dimension_numbers = #tpu.dot_dimension_numbers<[1], [0], [0], [1], [0, 0, 1, 1], [], []>} : vector<32x8xf32>, vector<8x124xf32>, vector<32x124xf32> -> vector<32x124xf32>
    %35 = vector.broadcast %12 : vector<32x1xf32> to vector<32x124xf32>
    %36 = arith.addf %34, %35 : vector<32x124xf32>
    %c0_31 = arith.constant 0 : index
    %c0_32 = arith.constant 0 : index
    %37 = vector.load %arg12[%c0_31, %c0_32] : memref<32x8xf32, #tpu.memory_space<vmem>>, vector<32x8xf32>
    %cst_33 = arith.constant dense<0.000000e+00> : vector<32x124xf32>
    %38 = tpu.matmul %37, %10, %cst_33 {dimension_numbers = #tpu.dot_dimension_numbers<[1], [0], [0], [1], [0, 0, 1, 1], [], []>} : vector<32x8xf32>, vector<8x124xf32>, vector<32x124xf32> -> vector<32x124xf32>
    %39 = vector.broadcast %13 : vector<32x1xf32> to vector<32x124xf32>
    %40 = arith.addf %38, %39 : vector<32x124xf32>
    %41 = arith.addf %36, %40 : vector<32x124xf32>
    %cst_34 = arith.constant 0.000000e+00 : f32
    %42 = vector.broadcast %cst_34 : f32 to vector<32x124xf32>
    %43 = arith.maximumf %41, %42 : vector<32x124xf32>
    %cst_35 = arith.constant dense<0.000000e+00> : vector<32x2xf32>
    %44 = tpu.matmul %43, %1, %cst_35 {dimension_numbers = #tpu.dot_dimension_numbers<[1], [0], [0], [1], [0, 0, 1, 1], [], []>} : vector<32x124xf32>, vector<124x2xf32>, vector<32x2xf32> -> vector<32x2xf32>
    %c0_36 = arith.constant 0 : index
    %c0_37 = arith.constant 0 : index
    %45 = vector.load %arg13[%c0_36, %c0_37] : memref<16x32xf32, #tpu.memory_space<vmem>>, vector<16x32xf32>
    %cst_38 = arith.constant dense<0.000000e+00> : vector<16x2xf32>
    %46 = tpu.matmul %45, %44, %cst_38 {dimension_numbers = #tpu.dot_dimension_numbers<[1], [0], [0], [1], [0, 0, 1, 1], [], []>} : vector<16x32xf32>, vector<32x2xf32>, vector<16x2xf32> -> vector<16x2xf32>
    %47 = vector.broadcast %14 : vector<16x1xf32> to vector<16x2xf32>
    %48 = arith.addf %46, %47 : vector<16x2xf32>
    %cst_39 = arith.constant 0.000000e+00 : f32
    %49 = vector.broadcast %cst_39 : f32 to vector<16x2xf32>
    %50 = arith.maximumf %48, %49 : vector<16x2xf32>
    %c0_40 = arith.constant 0 : index
    %c0_41 = arith.constant 0 : index
    %51 = vector.load %arg14[%c0_40, %c0_41] : memref<32x16xf32, #tpu.memory_space<vmem>>, vector<32x16xf32>
    %cst_42 = arith.constant dense<0.000000e+00> : vector<32x2xf32>
    %52 = tpu.matmul %51, %50, %cst_42 {dimension_numbers = #tpu.dot_dimension_numbers<[1], [0], [0], [1], [0, 0, 1, 1], [], []>} : vector<32x16xf32>, vector<16x2xf32>, vector<32x2xf32> -> vector<32x2xf32>
    %53 = vector.broadcast %15 : vector<32x1xf32> to vector<32x2xf32>
    %54 = arith.addf %52, %53 : vector<32x2xf32>
    %55 = arith.negf %54 : vector<32x2xf32>
    %56 = math.exp %55 : vector<32x2xf32>
    %cst_43 = arith.constant 1.000000e+00 : f32
    %57 = vector.broadcast %cst_43 : f32 to vector<32x2xf32>
    %58 = arith.addf %57, %56 : vector<32x2xf32>
    %59 = arith.divf %57, %58 : vector<32x2xf32>
    %cst_44 = arith.constant dense<0.000000e+00> : vector<32x124xf32>
    %60 = tpu.matmul %59, %2, %cst_44 {dimension_numbers = #tpu.dot_dimension_numbers<[1], [0], [0], [1], [0, 0, 1, 1], [], []>} : vector<32x2xf32>, vector<2x124xf32>, vector<32x124xf32> -> vector<32x124xf32>
    %61 = arith.mulf %43, %60 : vector<32x124xf32>
    %62 = arith.addf %61, %43 : vector<32x124xf32>
    %63 = vector.broadcast %16 : vector<32x1xf32> to vector<32x124xf32>
    %64 = arith.mulf %62, %63 : vector<32x124xf32>
    %65 = vector.broadcast %17 : vector<32x1xf32> to vector<32x124xf32>
    %66 = arith.addf %64, %65 : vector<32x124xf32>
    %67 = arith.addf %66, %40 : vector<32x124xf32>
    %cst_45 = arith.constant 0.000000e+00 : f32
    %68 = vector.broadcast %cst_45 : f32 to vector<32x124xf32>
    %69 = arith.maximumf %67, %68 : vector<32x124xf32>
    %c0_46 = arith.constant 0 : index
    %c0_47 = arith.constant 0 : index
    %c0_48 = arith.constant 0 : index
    %70 = vector.load %arg32[%c0_46, %c0_47, %c0_48] : memref<1x32x124xf32, #tpu.memory_space<vmem>>, vector<1x32x124xf32>
    %71 = vector.shape_cast %70 : vector<1x32x124xf32> to vector<32x124xf32>
    %72 = vector.shape_cast %69 : vector<32x124xf32> to vector<1x32x124xf32>
    tpu.vector_store %arg32[%c0_46, %c0_47, %c0_48], %72 {strides = array<i32>} : memref<1x32x124xf32, #tpu.memory_space<vmem>>, vector<1x32x124xf32>,
    %c1 = arith.constant 1 : index
    %73 = memref.load %arg1[%c1] : memref<3xf32, #tpu.memory_space<smem>>
    %c0_49 = arith.constant 0 : index
    %c0_50 = arith.constant 0 : index
    %74 = vector.load %arg23[%c0_49, %c0_50] : memref<352x1xf32, #tpu.memory_space<vmem>>, vector<64x1xf32>
    %c64_51 = arith.constant 64 : index
    %c0_52 = arith.constant 0 : index
    %75 = vector.load %arg23[%c64_51, %c0_52] : memref<352x1xf32, #tpu.memory_space<vmem>>, vector<64x1xf32>
    %c128 = arith.constant 128 : index
    %c0_53 = arith.constant 0 : index
    %76 = vector.load %arg23[%c128, %c0_53] : memref<352x1xf32, #tpu.memory_space<vmem>>, vector<32x1xf32>
    %c160 = arith.constant 160 : index
    %c0_54 = arith.constant 0 : index
    %77 = vector.load %arg23[%c160, %c0_54] : memref<352x1xf32, #tpu.memory_space<vmem>>, vector<64x1xf32>
    %c224 = arith.constant 224 : index
    %c0_55 = arith.constant 0 : index
    %78 = vector.load %arg23[%c224, %c0_55] : memref<352x1xf32, #tpu.memory_space<vmem>>, vector<64x1xf32>
    %c288 = arith.constant 288 : index
    %c0_56 = arith.constant 0 : index
    %79 = vector.load %arg23[%c288, %c0_56] : memref<352x1xf32, #tpu.memory_space<vmem>>, vector<64x1xf32>
    %c0_57 = arith.constant 0 : index
    %c0_58 = arith.constant 0 : index
    %80 = vector.load %arg17[%c0_57, %c0_58] : memref<32x32xf32, #tpu.memory_space<vmem>>, vector<32x32xf32>
    %cst_59 = arith.constant dense<0.000000e+00> : vector<32x124xf32>
    %81 = tpu.matmul %80, %69, %cst_59 {dimension_numbers = #tpu.dot_dimension_numbers<[1], [0], [0], [1], [0, 0, 1, 1], [], []>} : vector<32x32xf32>, vector<32x124xf32>, vector<32x124xf32> -> vector<32x124xf32>
    %c0_60 = arith.constant 0 : index
    %c0_61 = arith.constant 0 : index
    %82 = vector.load %arg18[%c0_60, %c0_61] : memref<32x1xf32, #tpu.memory_space<vmem>>, vector<32x1xf32>
    %83 = vector.broadcast %82 : vector<32x1xf32> to vector<32x124xf32>
    %84 = arith.addf %81, %83 : vector<32x124xf32>
    %85 = vector.extract_strided_slice %84 {offsets = [0, 0], sizes = [16, 124], strides = [1, 1]} : vector<32x124xf32> to vector<16x124xf32>
    %86 = vector.extract_strided_slice %84 {offsets = [16, 0], sizes = [16, 124], strides = [1, 1]} : vector<32x124xf32> to vector<16x124xf32>
    %cst_62 = arith.constant dense<0.000000e+00> : vector<124x124xf32>
    %87 = tpu.matmul %85, %86, %cst_62 {dimension_numbers = #tpu.dot_dimension_numbers<[0], [0], [1], [1], [0, 1, 1, 1], [], []>} : vector<16x124xf32>, vector<16x124xf32>, vector<124x124xf32> -> vector<124x124xf32>
    %88 = math.tanh %87 : vector<124x124xf32>
    %c0_63 = arith.constant 0 : index
    %c0_64 = arith.constant 0 : index
    %89 = vector.load %arg16[%c0_63, %c0_64] : memref<124x124xf32, #tpu.memory_space<vmem>>, vector<124x124xf32>
    %90 = vector.broadcast %73 : f32 to vector<124x124xf32>
    %91 = arith.mulf %88, %90 : vector<124x124xf32>
    %92 = arith.mulf %91, %0 : vector<124x124xf32>
    %93 = arith.addf %89, %92 : vector<124x124xf32>
    %cst_65 = arith.constant dense<0.000000e+00> : vector<32x124xf32>
    %94 = tpu.matmul %69, %93, %cst_65 {dimension_numbers = #tpu.dot_dimension_numbers<[1], [0], [0], [1], [0, 0, 1, 1], [], []>} : vector<32x124xf32>, vector<124x124xf32>, vector<32x124xf32> -> vector<32x124xf32>
    %c0_66 = arith.constant 0 : index
    %c0_67 = arith.constant 0 : index
    %95 = vector.load %arg19[%c0_66, %c0_67] : memref<64x32xf32, #tpu.memory_space<vmem>>, vector<64x32xf32>
    %cst_68 = arith.constant dense<0.000000e+00> : vector<64x124xf32>
    %96 = tpu.matmul %95, %94, %cst_68 {dimension_numbers = #tpu.dot_dimension_numbers<[1], [0], [0], [1], [0, 0, 1, 1], [], []>} : vector<64x32xf32>, vector<32x124xf32>, vector<64x124xf32> -> vector<64x124xf32>
    %97 = vector.broadcast %74 : vector<64x1xf32> to vector<64x124xf32>
    %98 = arith.addf %96, %97 : vector<64x124xf32>
    %c0_69 = arith.constant 0 : index
    %c0_70 = arith.constant 0 : index
    %99 = vector.load %arg20[%c0_69, %c0_70] : memref<64x32xf32, #tpu.memory_space<vmem>>, vector<64x32xf32>
    %cst_71 = arith.constant dense<0.000000e+00> : vector<64x124xf32>
    %100 = tpu.matmul %99, %69, %cst_71 {dimension_numbers = #tpu.dot_dimension_numbers<[1], [0], [0], [1], [0, 0, 1, 1], [], []>} : vector<64x32xf32>, vector<32x124xf32>, vector<64x124xf32> -> vector<64x124xf32>
    %101 = vector.broadcast %75 : vector<64x1xf32> to vector<64x124xf32>
    %102 = arith.addf %100, %101 : vector<64x124xf32>
    %103 = arith.addf %98, %102 : vector<64x124xf32>
    %cst_72 = arith.constant 0.000000e+00 : f32
    %104 = vector.broadcast %cst_72 : f32 to vector<64x124xf32>
    %105 = arith.maximumf %103, %104 : vector<64x124xf32>
    %cst_73 = arith.constant dense<0.000000e+00> : vector<64x2xf32>
    %106 = tpu.matmul %105, %1, %cst_73 {dimension_numbers = #tpu.dot_dimension_numbers<[1], [0], [0], [1], [0, 0, 1, 1], [], []>} : vector<64x124xf32>, vector<124x2xf32>, vector<64x2xf32> -> vector<64x2xf32>
    %c0_74 = arith.constant 0 : index
    %c0_75 = arith.constant 0 : index
    %107 = vector.load %arg21[%c0_74, %c0_75] : memref<32x64xf32, #tpu.memory_space<vmem>>, vector<32x64xf32>
    %cst_76 = arith.constant dense<0.000000e+00> : vector<32x2xf32>
    %108 = tpu.matmul %107, %106, %cst_76 {dimension_numbers = #tpu.dot_dimension_numbers<[1], [0], [0], [1], [0, 0, 1, 1], [], []>} : vector<32x64xf32>, vector<64x2xf32>, vector<32x2xf32> -> vector<32x2xf32>
    %109 = vector.broadcast %76 : vector<32x1xf32> to vector<32x2xf32>
    %110 = arith.addf %108, %109 : vector<32x2xf32>
    %cst_77 = arith.constant 0.000000e+00 : f32
    %111 = vector.broadcast %cst_77 : f32 to vector<32x2xf32>
    %112 = arith.maximumf %110, %111 : vector<32x2xf32>
    %c0_78 = arith.constant 0 : index
    %c0_79 = arith.constant 0 : index
    %113 = vector.load %arg22[%c0_78, %c0_79] : memref<64x32xf32, #tpu.memory_space<vmem>>, vector<64x32xf32>
    %cst_80 = arith.constant dense<0.000000e+00> : vector<64x2xf32>
    %114 = tpu.matmul %113, %112, %cst_80 {dimension_numbers = #tpu.dot_dimension_numbers<[1], [0], [0], [1], [0, 0, 1, 1], [], []>} : vector<64x32xf32>, vector<32x2xf32>, vector<64x2xf32> -> vector<64x2xf32>
    %115 = vector.broadcast %77 : vector<64x1xf32> to vector<64x2xf32>
    %116 = arith.addf %114, %115 : vector<64x2xf32>
    %117 = arith.negf %116 : vector<64x2xf32>
    %118 = math.exp %117 : vector<64x2xf32>
    %cst_81 = arith.constant 1.000000e+00 : f32
    %119 = vector.broadcast %cst_81 : f32 to vector<64x2xf32>
    %120 = arith.addf %119, %118 : vector<64x2xf32>
    %121 = arith.divf %119, %120 : vector<64x2xf32>
    %cst_82 = arith.constant dense<0.000000e+00> : vector<64x124xf32>
    %122 = tpu.matmul %121, %2, %cst_82 {dimension_numbers = #tpu.dot_dimension_numbers<[1], [0], [0], [1], [0, 0, 1, 1], [], []>} : vector<64x2xf32>, vector<2x124xf32>, vector<64x124xf32> -> vector<64x124xf32>
    %123 = arith.mulf %105, %122 : vector<64x124xf32>
    %124 = arith.addf %123, %105 : vector<64x124xf32>
    %125 = vector.broadcast %78 : vector<64x1xf32> to vector<64x124xf32>
    %126 = arith.mulf %124, %125 : vector<64x124xf32>
    %127 = vector.broadcast %79 : vector<64x1xf32> to vector<64x124xf32>
    %128 = arith.addf %126, %127 : vector<64x124xf32>
    %129 = arith.addf %128, %102 : vector<64x124xf32>
    %cst_83 = arith.constant 0.000000e+00 : f32
    %130 = vector.broadcast %cst_83 : f32 to vector<64x124xf32>
    %131 = arith.maximumf %129, %130 : vector<64x124xf32>
    %c0_84 = arith.constant 0 : index
    %c0_85 = arith.constant 0 : index
    %c0_86 = arith.constant 0 : index
    %132 = vector.load %arg33[%c0_84, %c0_85, %c0_86] : memref<1x64x124xf32, #tpu.memory_space<vmem>>, vector<1x64x124xf32>
    %133 = vector.shape_cast %132 : vector<1x64x124xf32> to vector<64x124xf32>
    %134 = vector.shape_cast %131 : vector<64x124xf32> to vector<1x64x124xf32>
    tpu.vector_store %arg33[%c0_84, %c0_85, %c0_86], %134 {strides = array<i32>} : memref<1x64x124xf32, #tpu.memory_space<vmem>>, vector<1x64x124xf32>,
    %c2 = arith.constant 2 : index
    %135 = memref.load %arg1[%c2] : memref<3xf32, #tpu.memory_space<smem>>
    %c0_87 = arith.constant 0 : index
    %c0_88 = arith.constant 0 : index
    %136 = vector.load %arg31[%c0_87, %c0_88] : memref<704x1xf32, #tpu.memory_space<vmem>>, vector<128x1xf32>
    %c128_89 = arith.constant 128 : index
    %c0_90 = arith.constant 0 : index
    %137 = vector.load %arg31[%c128_89, %c0_90] : memref<704x1xf32, #tpu.memory_space<vmem>>, vector<128x1xf32>
    %c256 = arith.constant 256 : index
    %c0_91 = arith.constant 0 : index
    %138 = vector.load %arg31[%c256, %c0_91] : memref<704x1xf32, #tpu.memory_space<vmem>>, vector<64x1xf32>
    %c320 = arith.constant 320 : index
    %c0_92 = arith.constant 0 : index
    %139 = vector.load %arg31[%c320, %c0_92] : memref<704x1xf32, #tpu.memory_space<vmem>>, vector<128x1xf32>
    %c448 = arith.constant 448 : index
    %c0_93 = arith.constant 0 : index
    %140 = vector.load %arg31[%c448, %c0_93] : memref<704x1xf32, #tpu.memory_space<vmem>>, vector<128x1xf32>
    %c576 = arith.constant 576 : index
    %c0_94 = arith.constant 0 : index
    %141 = vector.load %arg31[%c576, %c0_94] : memref<704x1xf32, #tpu.memory_space<vmem>>, vector<128x1xf32>
    %c0_95 = arith.constant 0 : index
    %c0_96 = arith.constant 0 : index
    %142 = vector.load %arg25[%c0_95, %c0_96] : memref<64x64xf32, #tpu.memory_space<vmem>>, vector<64x64xf32>
    %cst_97 = arith.constant dense<0.000000e+00> : vector<64x124xf32>
    %143 = tpu.matmul %142, %131, %cst_97 {dimension_numbers = #tpu.dot_dimension_numbers<[1], [0], [0], [1], [0, 0, 1, 1], [], []>} : vector<64x64xf32>, vector<64x124xf32>, vector<64x124xf32> -> vector<64x124xf32>
    %c0_98 = arith.constant 0 : index
    %c0_99 = arith.constant 0 : index
    %144 = vector.load %arg26[%c0_98, %c0_99] : memref<64x1xf32, #tpu.memory_space<vmem>>, vector<64x1xf32>
    %145 = vector.broadcast %144 : vector<64x1xf32> to vector<64x124xf32>
    %146 = arith.addf %143, %145 : vector<64x124xf32>
    %147 = vector.extract_strided_slice %146 {offsets = [0, 0], sizes = [32, 124], strides = [1, 1]} : vector<64x124xf32> to vector<32x124xf32>
    %148 = vector.extract_strided_slice %146 {offsets = [32, 0], sizes = [32, 124], strides = [1, 1]} : vector<64x124xf32> to vector<32x124xf32>
    %cst_100 = arith.constant dense<0.000000e+00> : vector<124x124xf32>
    %149 = tpu.matmul %147, %148, %cst_100 {dimension_numbers = #tpu.dot_dimension_numbers<[0], [0], [1], [1], [0, 1, 1, 1], [], []>} : vector<32x124xf32>, vector<32x124xf32>, vector<124x124xf32> -> vector<124x124xf32>
    %150 = math.tanh %149 : vector<124x124xf32>
    %c0_101 = arith.constant 0 : index
    %c0_102 = arith.constant 0 : index
    %151 = vector.load %arg24[%c0_101, %c0_102] : memref<124x124xf32, #tpu.memory_space<vmem>>, vector<124x124xf32>
    %152 = vector.broadcast %135 : f32 to vector<124x124xf32>
    %153 = arith.mulf %150, %152 : vector<124x124xf32>
    %154 = arith.mulf %153, %0 : vector<124x124xf32>
    %155 = arith.addf %151, %154 : vector<124x124xf32>
    %cst_103 = arith.constant dense<0.000000e+00> : vector<64x124xf32>
    %156 = tpu.matmul %131, %155, %cst_103 {dimension_numbers = #tpu.dot_dimension_numbers<[1], [0], [0], [1], [0, 0, 1, 1], [], []>} : vector<64x124xf32>, vector<124x124xf32>, vector<64x124xf32> -> vector<64x124xf32>
    %c0_104 = arith.constant 0 : index
    %c0_105 = arith.constant 0 : index
    %157 = vector.load %arg27[%c0_104, %c0_105] : memref<128x64xf32, #tpu.memory_space<vmem>>, vector<128x64xf32>
    %cst_106 = arith.constant dense<0.000000e+00> : vector<128x124xf32>
    %158 = tpu.matmul %157, %156, %cst_106 {dimension_numbers = #tpu.dot_dimension_numbers<[1], [0], [0], [1], [0, 0, 1, 1], [], []>} : vector<128x64xf32>, vector<64x124xf32>, vector<128x124xf32> -> vector<128x124xf32>
    %159 = vector.broadcast %136 : vector<128x1xf32> to vector<128x124xf32>
    %160 = arith.addf %158, %159 : vector<128x124xf32>
    %c0_107 = arith.constant 0 : index
    %c0_108 = arith.constant 0 : index
    %161 = vector.load %arg28[%c0_107, %c0_108] : memref<128x64xf32, #tpu.memory_space<vmem>>, vector<128x64xf32>
    %cst_109 = arith.constant dense<0.000000e+00> : vector<128x124xf32>
    %162 = tpu.matmul %161, %131, %cst_109 {dimension_numbers = #tpu.dot_dimension_numbers<[1], [0], [0], [1], [0, 0, 1, 1], [], []>} : vector<128x64xf32>, vector<64x124xf32>, vector<128x124xf32> -> vector<128x124xf32>
    %163 = vector.broadcast %137 : vector<128x1xf32> to vector<128x124xf32>
    %164 = arith.addf %162, %163 : vector<128x124xf32>
    %165 = arith.addf %160, %164 : vector<128x124xf32>
    %cst_110 = arith.constant 0.000000e+00 : f32
    %166 = vector.broadcast %cst_110 : f32 to vector<128x124xf32>
    %167 = arith.maximumf %165, %166 : vector<128x124xf32>
    %cst_111 = arith.constant dense<0.000000e+00> : vector<128x2xf32>
    %168 = tpu.matmul %167, %1, %cst_111 {dimension_numbers = #tpu.dot_dimension_numbers<[1], [0], [0], [1], [0, 0, 1, 1], [], []>} : vector<128x124xf32>, vector<124x2xf32>, vector<128x2xf32> -> vector<128x2xf32>
    %c0_112 = arith.constant 0 : index
    %c0_113 = arith.constant 0 : index
    %169 = vector.load %arg29[%c0_112, %c0_113] : memref<64x128xf32, #tpu.memory_space<vmem>>, vector<64x128xf32>
    %cst_114 = arith.constant dense<0.000000e+00> : vector<64x2xf32>
    %170 = tpu.matmul %169, %168, %cst_114 {dimension_numbers = #tpu.dot_dimension_numbers<[1], [0], [0], [1], [0, 0, 1, 1], [], []>} : vector<64x128xf32>, vector<128x2xf32>, vector<64x2xf32> -> vector<64x2xf32>
    %171 = vector.broadcast %138 : vector<64x1xf32> to vector<64x2xf32>
    %172 = arith.addf %170, %171 : vector<64x2xf32>
    %cst_115 = arith.constant 0.000000e+00 : f32
    %173 = vector.broadcast %cst_115 : f32 to vector<64x2xf32>
    %174 = arith.maximumf %172, %173 : vector<64x2xf32>
    %c0_116 = arith.constant 0 : index
    %c0_117 = arith.constant 0 : index
    %175 = vector.load %arg30[%c0_116, %c0_117] : memref<128x64xf32, #tpu.memory_space<vmem>>, vector<128x64xf32>
    %cst_118 = arith.constant dense<0.000000e+00> : vector<128x2xf32>
    %176 = tpu.matmul %175, %174, %cst_118 {dimension_numbers = #tpu.dot_dimension_numbers<[1], [0], [0], [1], [0, 0, 1, 1], [], []>} : vector<128x64xf32>, vector<64x2xf32>, vector<128x2xf32> -> vector<128x2xf32>
    %177 = vector.broadcast %139 : vector<128x1xf32> to vector<128x2xf32>
    %178 = arith.addf %176, %177 : vector<128x2xf32>
    %179 = arith.negf %178 : vector<128x2xf32>
    %180 = math.exp %179 : vector<128x2xf32>
    %cst_119 = arith.constant 1.000000e+00 : f32
    %181 = vector.broadcast %cst_119 : f32 to vector<128x2xf32>
    %182 = arith.addf %181, %180 : vector<128x2xf32>
    %183 = arith.divf %181, %182 : vector<128x2xf32>
    %cst_120 = arith.constant dense<0.000000e+00> : vector<128x124xf32>
    %184 = tpu.matmul %183, %2, %cst_120 {dimension_numbers = #tpu.dot_dimension_numbers<[1], [0], [0], [1], [0, 0, 1, 1], [], []>} : vector<128x2xf32>, vector<2x124xf32>, vector<128x124xf32> -> vector<128x124xf32>
    %185 = arith.mulf %167, %184 : vector<128x124xf32>
    %186 = arith.addf %185, %167 : vector<128x124xf32>
    %187 = vector.broadcast %140 : vector<128x1xf32> to vector<128x124xf32>
    %188 = arith.mulf %186, %187 : vector<128x124xf32>
    %189 = vector.broadcast %141 : vector<128x1xf32> to vector<128x124xf32>
    %190 = arith.addf %188, %189 : vector<128x124xf32>
    %191 = arith.addf %190, %164 : vector<128x124xf32>
    %cst_121 = arith.constant 0.000000e+00 : f32
    %192 = vector.broadcast %cst_121 : f32 to vector<128x124xf32>
    %193 = arith.maximumf %191, %192 : vector<128x124xf32>
    %cst_122 = arith.constant dense<0.000000e+00> : vector<128x2xf32>
    %194 = tpu.matmul %193, %1, %cst_122 {dimension_numbers = #tpu.dot_dimension_numbers<[1], [0], [0], [1], [0, 0, 1, 1], [], []>} : vector<128x124xf32>, vector<124x2xf32>, vector<128x2xf32> -> vector<128x2xf32>
    %c0_123 = arith.constant 0 : index
    %c0_124 = arith.constant 0 : index
    %c0_125 = arith.constant 0 : index
    %195 = vector.load %arg34[%c0_123, %c0_124, %c0_125] : memref<1x128x2xf32, #tpu.memory_space<vmem>>, vector<1x128x2xf32>
    %196 = vector.shape_cast %195 : vector<1x128x2xf32> to vector<128x2xf32>
    %197 = vector.shape_cast %194 : vector<128x2xf32> to vector<1x128x2xf32>
    tpu.vector_store %arg34[%c0_123, %c0_124, %c0_125], %197 {strides = array<i32>} : memref<1x128x2xf32, #tpu.memory_space<vmem>>, vector<1x128x2xf32>,
    return
  }
  func.func @transform_0(%arg0: i32) -> i32 {
    %c0_i32 = arith.constant 0 : i32
    %c0_i32_0 = arith.constant 0 : i32
    return %c0_i32 : i32
  }
  func.func @transform_1(%arg0: i32) -> (i32, i32, i32) {
    %c0_i32 = arith.constant 0 : i32
    %c0_i32_0 = arith.constant 0 : i32
    %c0_i32_1 = arith.constant 0 : i32
    return %arg0, %c0_i32, %c0_i32_0 : i32, i32, i32
  }
  func.func @transform_2(%arg0: i32) -> (i32, i32) {
    %c0_i32 = arith.constant 0 : i32
    %c0_i32_0 = arith.constant 0 : i32
    %c0_i32_1 = arith.constant 0 : i32
    return %c0_i32, %c0_i32_0 : i32, i32
  }
  func.func @transform_3(%arg0: i32) -> (i32, i32) {
    %c0_i32 = arith.constant 0 : i32
    %c0_i32_0 = arith.constant 0 : i32
    %c0_i32_1 = arith.constant 0 : i32
    return %c0_i32, %c0_i32_0 : i32, i32
  }
  func.func @transform_4(%arg0: i32) -> (i32, i32) {
    %c0_i32 = arith.constant 0 : i32
    %c0_i32_0 = arith.constant 0 : i32
    %c0_i32_1 = arith.constant 0 : i32
    return %c0_i32, %c0_i32_0 : i32, i32
  }
  func.func @transform_5(%arg0: i32) -> (i32, i32) {
    %c0_i32 = arith.constant 0 : i32
    %c0_i32_0 = arith.constant 0 : i32
    %c0_i32_1 = arith.constant 0 : i32
    return %c0_i32, %c0_i32_0 : i32, i32
  }
  func.func @transform_6(%arg0: i32) -> (i32, i32) {
    %c0_i32 = arith.constant 0 : i32
    %c0_i32_0 = arith.constant 0 : i32
    %c0_i32_1 = arith.constant 0 : i32
    return %c0_i32, %c0_i32_0 : i32, i32
  }
  func.func @transform_7(%arg0: i32) -> (i32, i32) {
    %c0_i32 = arith.constant 0 : i32
    %c0_i32_0 = arith.constant 0 : i32
    %c0_i32_1 = arith.constant 0 : i32
    return %c0_i32, %c0_i32_0 : i32, i32
  }
  func.func @transform_8(%arg0: i32) -> (i32, i32) {
    %c0_i32 = arith.constant 0 : i32
    %c0_i32_0 = arith.constant 0 : i32
    %c0_i32_1 = arith.constant 0 : i32
    return %c0_i32, %c0_i32_0 : i32, i32
  }
  func.func @transform_9(%arg0: i32) -> (i32, i32) {
    %c0_i32 = arith.constant 0 : i32
    %c0_i32_0 = arith.constant 0 : i32
    %c0_i32_1 = arith.constant 0 : i32
    return %c0_i32, %c0_i32_0 : i32, i32
  }
  func.func @transform_10(%arg0: i32) -> (i32, i32) {
    %c0_i32 = arith.constant 0 : i32
    %c0_i32_0 = arith.constant 0 : i32
    %c0_i32_1 = arith.constant 0 : i32
    return %c0_i32, %c0_i32_0 : i32, i32
  }
  func.func @transform_11(%arg0: i32) -> (i32, i32) {
    %c0_i32 = arith.constant 0 : i32
    %c0_i32_0 = arith.constant 0 : i32
    %c0_i32_1 = arith.constant 0 : i32
    return %c0_i32, %c0_i32_0 : i32, i32
  }
  func.func @transform_12(%arg0: i32) -> (i32, i32) {
    %c0_i32 = arith.constant 0 : i32
    %c0_i32_0 = arith.constant 0 : i32
    %c0_i32_1 = arith.constant 0 : i32
    return %c0_i32, %c0_i32_0 : i32, i32
  }
  func.func @transform_13(%arg0: i32) -> (i32, i32) {
    %c0_i32 = arith.constant 0 : i32
    %c0_i32_0 = arith.constant 0 : i32
    %c0_i32_1 = arith.constant 0 : i32
    return %c0_i32, %c0_i32_0 : i32, i32
  }
  func.func @transform_14(%arg0: i32) -> (i32, i32) {
    %c0_i32 = arith.constant 0 : i32
    %c0_i32_0 = arith.constant 0 : i32
    %c0_i32_1 = arith.constant 0 : i32
    return %c0_i32, %c0_i32_0 : i32, i32
  }
  func.func @transform_15(%arg0: i32) -> (i32, i32) {
    %c0_i32 = arith.constant 0 : i32
    %c0_i32_0 = arith.constant 0 : i32
    %c0_i32_1 = arith.constant 0 : i32
    return %c0_i32, %c0_i32_0 : i32, i32
  }
  func.func @transform_16(%arg0: i32) -> (i32, i32) {
    %c0_i32 = arith.constant 0 : i32
    %c0_i32_0 = arith.constant 0 : i32
    %c0_i32_1 = arith.constant 0 : i32
    return %c0_i32, %c0_i32_0 : i32, i32
  }
  func.func @transform_17(%arg0: i32) -> (i32, i32) {
    %c0_i32 = arith.constant 0 : i32
    %c0_i32_0 = arith.constant 0 : i32
    %c0_i32_1 = arith.constant 0 : i32
    return %c0_i32, %c0_i32_0 : i32, i32
  }
  func.func @transform_18(%arg0: i32) -> (i32, i32) {
    %c0_i32 = arith.constant 0 : i32
    %c0_i32_0 = arith.constant 0 : i32
    %c0_i32_1 = arith.constant 0 : i32
    return %c0_i32, %c0_i32_0 : i32, i32
  }
  func.func @transform_19(%arg0: i32) -> (i32, i32) {
    %c0_i32 = arith.constant 0 : i32
    %c0_i32_0 = arith.constant 0 : i32
    %c0_i32_1 = arith.constant 0 : i32
    return %c0_i32, %c0_i32_0 : i32, i32
  }
  func.func @transform_20(%arg0: i32) -> (i32, i32) {
    %c0_i32 = arith.constant 0 : i32
    %c0_i32_0 = arith.constant 0 : i32
    %c0_i32_1 = arith.constant 0 : i32
    return %c0_i32, %c0_i32_0 : i32, i32
  }
  func.func @transform_21(%arg0: i32) -> (i32, i32) {
    %c0_i32 = arith.constant 0 : i32
    %c0_i32_0 = arith.constant 0 : i32
    %c0_i32_1 = arith.constant 0 : i32
    return %c0_i32, %c0_i32_0 : i32, i32
  }
  func.func @transform_22(%arg0: i32) -> (i32, i32) {
    %c0_i32 = arith.constant 0 : i32
    %c0_i32_0 = arith.constant 0 : i32
    %c0_i32_1 = arith.constant 0 : i32
    return %c0_i32, %c0_i32_0 : i32, i32
  }
  func.func @transform_23(%arg0: i32) -> (i32, i32) {
    %c0_i32 = arith.constant 0 : i32
    %c0_i32_0 = arith.constant 0 : i32
    %c0_i32_1 = arith.constant 0 : i32
    return %c0_i32, %c0_i32_0 : i32, i32
  }
  func.func @transform_24(%arg0: i32) -> (i32, i32) {
    %c0_i32 = arith.constant 0 : i32
    %c0_i32_0 = arith.constant 0 : i32
    %c0_i32_1 = arith.constant 0 : i32
    return %c0_i32, %c0_i32_0 : i32, i32
  }
  func.func @transform_25(%arg0: i32) -> (i32, i32) {
    %c0_i32 = arith.constant 0 : i32
    %c0_i32_0 = arith.constant 0 : i32
    %c0_i32_1 = arith.constant 0 : i32
    return %c0_i32, %c0_i32_0 : i32, i32
  }
  func.func @transform_26(%arg0: i32) -> (i32, i32) {
    %c0_i32 = arith.constant 0 : i32
    %c0_i32_0 = arith.constant 0 : i32
    %c0_i32_1 = arith.constant 0 : i32
    return %c0_i32, %c0_i32_0 : i32, i32
  }
  func.func @transform_27(%arg0: i32) -> (i32, i32) {
    %c0_i32 = arith.constant 0 : i32
    %c0_i32_0 = arith.constant 0 : i32
    %c0_i32_1 = arith.constant 0 : i32
    return %c0_i32, %c0_i32_0 : i32, i32
  }
  func.func @transform_28(%arg0: i32) -> (i32, i32) {
    %c0_i32 = arith.constant 0 : i32
    %c0_i32_0 = arith.constant 0 : i32
    %c0_i32_1 = arith.constant 0 : i32
    return %c0_i32, %c0_i32_0 : i32, i32
  }
  func.func @transform_29(%arg0: i32) -> (i32, i32) {
    %c0_i32 = arith.constant 0 : i32
    %c0_i32_0 = arith.constant 0 : i32
    %c0_i32_1 = arith.constant 0 : i32
    return %c0_i32, %c0_i32_0 : i32, i32
  }
  func.func @transform_30(%arg0: i32) -> (i32, i32) {
    %c0_i32 = arith.constant 0 : i32
    %c0_i32_0 = arith.constant 0 : i32
    %c0_i32_1 = arith.constant 0 : i32
    return %c0_i32, %c0_i32_0 : i32, i32
  }
  func.func @transform_31(%arg0: i32) -> (i32, i32, i32) {
    %c0_i32 = arith.constant 0 : i32
    %c0_i32_0 = arith.constant 0 : i32
    %c0_i32_1 = arith.constant 0 : i32
    return %arg0, %c0_i32, %c0_i32_0 : i32, i32, i32
  }
  func.func @transform_32(%arg0: i32) -> (i32, i32, i32) {
    %c0_i32 = arith.constant 0 : i32
    %c0_i32_0 = arith.constant 0 : i32
    %c0_i32_1 = arith.constant 0 : i32
    return %arg0, %c0_i32, %c0_i32_0 : i32, i32, i32
  }
  func.func @transform_33(%arg0: i32) -> (i32, i32, i32) {
    %c0_i32 = arith.constant 0 : i32
    %c0_i32_0 = arith.constant 0 : i32
    %c0_i32_1 = arith.constant 0 : i32
    return %arg0, %c0_i32, %c0_i32_0 : i32, i32, i32
  }
}

</mosaic_0001>

<llo_original>
// kernel: shared_net_forward.1
$region0: #{shared_net_forward.1}
  #allocation0 [shape = 'u32[]', space=smem, size = 0x4, offset = 0x4, fixed_abs, tag = 'smem constant byte address 0x4 - core index']
  #allocation1 [shape = 'u32[144,128]{1,0:T(1,128)}', space=vmem, size = 0x12000, scoped, tag = 'internal scratch']
  %s0 = inlined_call_operand.smem [shape: u32[34], index: -1, kind: input, shape index: {}]
  %s1 = sld [smem:[%s0]]
  %s2 = scalar_lea.smem %s0, 1
  %s3 = sld [smem:[%s2]]
  %s4 = scalar_lea.smem %s0, 2
  %s5 = sld [smem:[%s4]]
  %s6 = scalar_lea.smem %s0, 3
  %s7 = sld [smem:[%s6]]
  %s8 = scalar_lea.smem %s0, 4
  %s9 = sld [smem:[%s8]]
  %s10 = scalar_lea.smem %s0, 5
  %s11 = sld [smem:[%s10]]
  %s12 = scalar_lea.smem %s0, 6
  %s13 = sld [smem:[%s12]]
  %s14 = scalar_lea.smem %s0, 7
  %s15 = sld [smem:[%s14]]
  %s16 = scalar_lea.smem %s0, 8
  %s17 = sld [smem:[%s16]]
  %s18 = scalar_lea.smem %s0, 9
  %s19 = sld [smem:[%s18]]
  %s20 = scalar_lea.smem %s0, 10
  %s21 = sld [smem:[%s20]]
  %s22 = scalar_lea.smem %s0, 11
  %s23 = sld [smem:[%s22]]
  %s24 = scalar_lea.smem %s0, 12
  %s25 = sld [smem:[%s24]]
  %s26 = scalar_lea.smem %s0, 13
  %s27 = sld [smem:[%s26]]
  %s28 = scalar_lea.smem %s0, 14
  %s29 = sld [smem:[%s28]]
  %s30 = scalar_lea.smem %s0, 15
  %s31 = sld [smem:[%s30]]
  %s32 = scalar_lea.smem %s0, 16
  %s33 = sld [smem:[%s32]]
  %s34 = scalar_lea.smem %s0, 17
  %s35 = sld [smem:[%s34]]
  %s36 = scalar_lea.smem %s0, 18
  %s37 = sld [smem:[%s36]]
  %s38 = scalar_lea.smem %s0, 19
  %s39 = sld [smem:[%s38]]
  %s40 = scalar_lea.smem %s0, 20
  %s41 = sld [smem:[%s40]]
  %s42 = scalar_lea.smem %s0, 21
  %s43 = sld [smem:[%s42]]
  %s44 = scalar_lea.smem %s0, 22
  %s45 = sld [smem:[%s44]]
  %s46 = scalar_lea.smem %s0, 23
  %s47 = sld [smem:[%s46]]
  %s48 = scalar_lea.smem %s0, 24
  %s49 = sld [smem:[%s48]]
  %s50 = scalar_lea.smem %s0, 25
  %s51 = sld [smem:[%s50]]
  %s52 = scalar_lea.smem %s0, 26
  %s53 = sld [smem:[%s52]]
  %s54 = scalar_lea.smem %s0, 27
  %s55 = sld [smem:[%s54]]
  %s56 = scalar_lea.smem %s0, 28
  %s57 = sld [smem:[%s56]]
  %s58 = scalar_lea.smem %s0, 29
  %s59 = sld [smem:[%s58]]
  %s60 = scalar_lea.smem %s0, 30
  %s61 = sld [smem:[%s60]]
  %s62 = scalar_lea.smem %s0, 31
  %s63 = sld [smem:[%s62]]
  %s64 = scalar_lea.smem %s0, 32
  %s65 = sld [smem:[%s64]]
  %s66 = scalar_lea.smem %s0, 33
  %s67 = sld [smem:[%s66]]
  %68 = xla_tuple %s63, %s65, %s67
  %s69 = sld [smem:[#allocation0]]
  $region154: #{shared_net_forward.1} parent=0
    _
  %s71 = ssub.s32 1, %s69
  %s72 = scalar_select 0, %s71, %s69
  $region1: #{shared_net_forward.1} parent=0
    #allocation2 [shape = 'u8[512]{0}', space=smem, size = 0x200, scoped, tag = 'input window, operand 0, single buffered']
    #allocation3 [shape = 's32[1]{0}', space=sflag, size = 0x4, scoped, tag = 'scoped memory for shared_net_forward.1']
    %73 = vsyncpa [#allocation3], 0
    // Predicated region
    $region2: #{shared_net_forward.1} parent=1 // pred_check
      _
    $region3: #{shared_net_forward.1} parent=1 // pred_check_branch
      %75 = sbr.rel (0) target = $region5
    $region4: #{shared_net_forward.1} parent=1 // pred_region
      %s77 = ssub.s32 16, 16
      %78 = vsyncadd [#allocation3], %s77
      %s80 = sshll.u32 %s1, 4
      %s81 = int_to_ptr.vmem [resolvable:$true] %s80
      %83 = dma.vmem_to_smem %s81, 16, [#allocation2], [#allocation3]
    $region5: #{shared_net_forward.1} parent=1 // pred_fallthru
      _
    // Predicated region
    $region6: #{shared_net_forward.1} parent=1 // pred_check
      _
    $region7: #{shared_net_forward.1} parent=1 // pred_check_branch
      %85 = sbr.rel (0) target = $region9
    $region8: #{shared_net_forward.1} parent=1 // pred_region
      _
    $region9: #{shared_net_forward.1} parent=1 // pred_fallthru
      _
    // Predicated region
    $region10: #{shared_net_forward.1} parent=1 // pred_check
      _
    $region11: #{shared_net_forward.1} parent=1 // pred_check_branch
      %87 = sbr.rel (0) target = $region13
    $region12: #{shared_net_forward.1} parent=1 // pred_region
      _
    $region13: #{shared_net_forward.1} parent=1 // pred_fallthru
      _
    // Predicated region
    $region14: #{shared_net_forward.1} parent=1 // pred_check
      _
    $region15: #{shared_net_forward.1} parent=1 // pred_check_branch
      %89 = sbr.rel (0) target = $region17
    $region16: #{shared_net_forward.1} parent=1 // pred_region
      _
    $region17: #{shared_net_forward.1} parent=1 // pred_fallthru
      _
    // Predicated region
    $region18: #{shared_net_forward.1} parent=1 // pred_check
      _
    $region19: #{shared_net_forward.1} parent=1 // pred_check_branch
      %91 = sbr.rel (0) target = $region21
    $region20: #{shared_net_forward.1} parent=1 // pred_region
      _
    $region21: #{shared_net_forward.1} parent=1 // pred_fallthru
      _
    // Predicated region
    $region22: #{shared_net_forward.1} parent=1 // pred_check
      _
    $region23: #{shared_net_forward.1} parent=1 // pred_check_branch
      %93 = sbr.rel (0) target = $region25
    $region24: #{shared_net_forward.1} parent=1 // pred_region
      _
    $region25: #{shared_net_forward.1} parent=1 // pred_fallthru
      _
    // Predicated region
    $region26: #{shared_net_forward.1} parent=1 // pred_check
      _
    $region27: #{shared_net_forward.1} parent=1 // pred_check_branch
      %95 = sbr.rel (0) target = $region29
    $region28: #{shared_net_forward.1} parent=1 // pred_region
      _
    $region29: #{shared_net_forward.1} parent=1 // pred_fallthru
      _
    // Predicated region
    $region30: #{shared_net_forward.1} parent=1 // pred_check
      _
    $region31: #{shared_net_forward.1} parent=1 // pred_check_branch
      %97 = sbr.rel (0) target = $region33
    $region32: #{shared_net_forward.1} parent=1 // pred_region
      _
    $region33: #{shared_net_forward.1} parent=1 // pred_fallthru
      _
    // Predicated region
    $region34: #{shared_net_forward.1} parent=1 // pred_check
      _
    $region35: #{shared_net_forward.1} parent=1 // pred_check_branch
      %99 = sbr.rel (0) target = $region37
    $region36: #{shared_net_forward.1} parent=1 // pred_region
      _
    $region37: #{shared_net_forward.1} parent=1 // pred_fallthru
      _
    // Predicated region
    $region38: #{shared_net_forward.1} parent=1 // pred_check
      _
    $region39: #{shared_net_forward.1} parent=1 // pred_check_branch
      %101 = sbr.rel (0) target = $region41
    $region40: #{shared_net_forward.1} parent=1 // pred_region
      _
    $region41: #{shared_net_forward.1} parent=1 // pred_fallthru
      _
    // Predicated region
    $region42: #{shared_net_forward.1} parent=1 // pred_check
      _
    $region43: #{shared_net_forward.1} parent=1 // pred_check_branch
      %103 = sbr.rel (0) target = $region45
    $region44: #{shared_net_forward.1} parent=1 // pred_region
      _
    $region45: #{shared_net_forward.1} parent=1 // pred_fallthru
      _
    // Predicated region
    $region46: #{shared_net_forward.1} parent=1 // pred_check
      _
    $region47: #{shared_net_forward.1} parent=1 // pred_check_branch
      %105 = sbr.rel (0) target = $region49
    $region48: #{shared_net_forward.1} parent=1 // pred_region
      _
    $region49: #{shared_net_forward.1} parent=1 // pred_fallthru
      _
    // Predicated region
    $region50: #{shared_net_forward.1} parent=1 // pred_check
      _
    $region51: #{shared_net_forward.1} parent=1 // pred_check_branch
      %107 = sbr.rel (0) target = $region53
    $region52: #{shared_net_forward.1} parent=1 // pred_region
      _
    $region53: #{shared_net_forward.1} parent=1 // pred_fallthru
      _
    // Predicated region
    $region54: #{shared_net_forward.1} parent=1 // pred_check
      _
    $region55: #{shared_net_forward.1} parent=1 // pred_check_branch
      %109 = sbr.rel (0) target = $region57
    $region56: #{shared_net_forward.1} parent=1 // pred_region
      _
    $region57: #{shared_net_forward.1} parent=1 // pred_fallthru
      _
    // Predicated region
    $region58: #{shared_net_forward.1} parent=1 // pred_check
      _
    $region59: #{shared_net_forward.1} parent=1 // pred_check_branch
      %111 = sbr.rel (0) target = $region61
    $region60: #{shared_net_forward.1} parent=1 // pred_region
      _
    $region61: #{shared_net_forward.1} parent=1 // pred_fallthru
      _
    // Predicated region
    $region62: #{shared_net_forward.1} parent=1 // pred_check
      _
    $region63: #{shared_net_forward.1} parent=1 // pred_check_branch
      %113 = sbr.rel (0) target = $region65
    $region64: #{shared_net_forward.1} parent=1 // pred_region
      _
    $region65: #{shared_net_forward.1} parent=1 // pred_fallthru
      _
    // Predicated region
    $region66: #{shared_net_forward.1} parent=1 // pred_check
      _
    $region67: #{shared_net_forward.1} parent=1 // pred_check_branch
      %115 = sbr.rel (0) target = $region69
    $region68: #{shared_net_forward.1} parent=1 // pred_region
      _
    $region69: #{shared_net_forward.1} parent=1 // pred_fallthru
      _
    // Predicated region
    $region70: #{shared_net_forward.1} parent=1 // pred_check
      _
    $region71: #{shared_net_forward.1} parent=1 // pred_check_branch
      %117 = sbr.rel (0) target = $region73
    $region72: #{shared_net_forward.1} parent=1 // pred_region
      _
    $region73: #{shared_net_forward.1} parent=1 // pred_fallthru
      _
    // Predicated region
    $region74: #{shared_net_forward.1} parent=1 // pred_check
      _
    $region75: #{shared_net_forward.1} parent=1 // pred_check_branch
      %119 = sbr.rel (0) target = $region77
    $region76: #{shared_net_forward.1} parent=1 // pred_region
      _
    $region77: #{shared_net_forward.1} parent=1 // pred_fallthru
      _
    // Predicated region
    $region78: #{shared_net_forward.1} parent=1 // pred_check
      _
    $region79: #{shared_net_forward.1} parent=1 // pred_check_branch
      %121 = sbr.rel (0) target = $region81
    $region80: #{shared_net_forward.1} parent=1 // pred_region
      _
    $region81: #{shared_net_forward.1} parent=1 // pred_fallthru
      _
    // Predicated region
    $region82: #{shared_net_forward.1} parent=1 // pred_check
      _
    $region83: #{shared_net_forward.1} parent=1 // pred_check_branch
      %123 = sbr.rel (0) target = $region85
    $region84: #{shared_net_forward.1} parent=1 // pred_region
      _
    $region85: #{shared_net_forward.1} parent=1 // pred_fallthru
      _
    // Predicated region
    $region86: #{shared_net_forward.1} parent=1 // pred_check
      _
    $region87: #{shared_net_forward.1} parent=1 // pred_check_branch
      %125 = sbr.rel (0) target = $region89
    $region88: #{shared_net_forward.1} parent=1 // pred_region
      _
    $region89: #{shared_net_forward.1} parent=1 // pred_fallthru
      _
    // Predicated region
    $region90: #{shared_net_forward.1} parent=1 // pred_check
      _
    $region91: #{shared_net_forward.1} parent=1 // pred_check_branch
      %127 = sbr.rel (0) target = $region93
    $region92: #{shared_net_forward.1} parent=1 // pred_region
      _
    $region93: #{shared_net_forward.1} parent=1 // pred_fallthru
      _
    // Predicated region
    $region94: #{shared_net_forward.1} parent=1 // pred_check
      _
    $region95: #{shared_net_forward.1} parent=1 // pred_check_branch
      %129 = sbr.rel (0) target = $region97
    $region96: #{shared_net_forward.1} parent=1 // pred_region
      _
    $region97: #{shared_net_forward.1} parent=1 // pred_fallthru
      _
    // Predicated region
    $region98: #{shared_net_forward.1} parent=1 // pred_check
      _
    $region99: #{shared_net_forward.1} parent=1 // pred_check_branch
      %131 = sbr.rel (0) target = $region101
    $region100: #{shared_net_forward.1} parent=1 // pred_region
      _
    $region101: #{shared_net_forward.1} parent=1 // pred_fallthru
      _
    // Predicated region
    $region102: #{shared_net_forward.1} parent=1 // pred_check
      _
    $region103: #{shared_net_forward.1} parent=1 // pred_check_branch
      %133 = sbr.rel (0) target = $region105
    $region104: #{shared_net_forward.1} parent=1 // pred_region
      _
    $region105: #{shared_net_forward.1} parent=1 // pred_fallthru
      _
    // Predicated region
    $region106: #{shared_net_forward.1} parent=1 // pred_check
      _
    $region107: #{shared_net_forward.1} parent=1 // pred_check_branch
      %135 = sbr.rel (0) target = $region109
    $region108: #{shared_net_forward.1} parent=1 // pred_region
      _
    $region109: #{shared_net_forward.1} parent=1 // pred_fallthru
      _
    // Predicated region
    $region110: #{shared_net_forward.1} parent=1 // pred_check
      _
    $region111: #{shared_net_forward.1} parent=1 // pred_check_branch
      %137 = sbr.rel (0) target = $region113
    $region112: #{shared_net_forward.1} parent=1 // pred_region
      _
    $region113: #{shared_net_forward.1} parent=1 // pred_fallthru
      _
    // Predicated region
    $region114: #{shared_net_forward.1} parent=1 // pred_check
      _
    $region115: #{shared_net_forward.1} parent=1 // pred_check_branch
      %139 = sbr.rel (0) target = $region117
    $region116: #{shared_net_forward.1} parent=1 // pred_region
      _
    $region117: #{shared_net_forward.1} parent=1 // pred_fallthru
      _
    // Predicated region
    $region118: #{shared_net_forward.1} parent=1 // pred_check
      _
    $region119: #{shared_net_forward.1} parent=1 // pred_check_branch
      %141 = sbr.rel (0) target = $region121
    $region120: #{shared_net_forward.1} parent=1 // pred_region
      _
    $region121: #{shared_net_forward.1} parent=1 // pred_fallthru
      _
    // Predicated region
    $region122: #{shared_net_forward.1} parent=1 // pred_check
      _
    $region123: #{shared_net_forward.1} parent=1 // pred_check_branch
      %143 = sbr.rel (0) target = $region125
    $region124: #{shared_net_forward.1} parent=1 // pred_region
      _
    $region125: #{shared_net_forward.1} parent=1 // pred_fallthru
      _
    // Predicated region
    $region126: #{shared_net_forward.1} parent=1 // pred_check
      _
    $region127: #{shared_net_forward.1} parent=1 // pred_check_branch
      %145 = sbr.rel (0) target = $region129
    $region128: #{shared_net_forward.1} parent=1 // pred_region
      %146 = dma.done [#allocation3], 16
    $region129: #{shared_net_forward.1} parent=1 // pred_fallthru
      _
    %147 = sfence
    %v148 = vld [vmem:[%s9] sm:$0xff]
    %v149 = vld [vmem:[%s9 + $0x8] sm:$0xff]
    %v150 = vld [vmem:[%s9 + $0x10] sm:$0xff]
    %v151 = vld [vmem:[%s9 + $0x18] sm:$0xff]
    %v152 = vld [vmem:[%s9 + $0x20] sm:$0xff]
    %v153 = vld [vmem:[%s9 + $0x28] sm:$0xff]
    %v154 = vld [vmem:[%s9 + $0x30] sm:$0xff]
    %v155 = vld [vmem:[%s9 + $0x38] sm:$0xff]
    %v156 = vld [vmem:[%s9 + $0x40] sm:$0xff]
    %v157 = vld [vmem:[%s9 + $0x48] sm:$0xff]
    %v158 = vld [vmem:[%s9 + $0x50] sm:$0xff]
    %v159 = vld [vmem:[%s9 + $0x58] sm:$0xff]
    %v160 = vld [vmem:[%s9 + $0x60] sm:$0xff]
    %v161 = vld [vmem:[%s9 + $0x68] sm:$0xff]
    %v162 = vld [vmem:[%s9 + $0x70] sm:$0xff]
    %v163 = vld [vmem:[%s9 + $0x78] sm:$0xf]
    %v164 = vld [vmem:[%s11] sm:$0xff]
    %v165 = vld [vmem:[%s11 + $0x8] sm:$0xff]
    %v166 = vld [vmem:[%s11 + $0x10] sm:$0xff]
    %v167 = vld [vmem:[%s11 + $0x18] sm:$0xff]
    %v168 = vld [vmem:[%s11 + $0x20] sm:$0xff]
    %v169 = vld [vmem:[%s11 + $0x28] sm:$0xff]
    %v170 = vld [vmem:[%s11 + $0x30] sm:$0xff]
    %v171 = vld [vmem:[%s11 + $0x38] sm:$0xff]
    %v172 = vld [vmem:[%s11 + $0x40] sm:$0xff]
    %v173 = vld [vmem:[%s11 + $0x48] sm:$0xff]
    %v174 = vld [vmem:[%s11 + $0x50] sm:$0xff]
    %v175 = vld [vmem:[%s11 + $0x58] sm:$0xff]
    %v176 = vld [vmem:[%s11 + $0x60] sm:$0xff]
    %v177 = vld [vmem:[%s11 + $0x68] sm:$0xff]
    %v178 = vld [vmem:[%s11 + $0x70] sm:$0xff]
    %v179 = vld [vmem:[%s11 + $0x78] sm:$0xf]
    %v180 = vld [vmem:[%s13] sm:$0x3]
    %v181 = vld [vmem:[%s3] sm:$0xff]
    %v182 = vld [vmem:[%s5] sm:$0xff]
    %184 = vset.pattern.permute.xlu0 0
    %185 = vperm.xlu0 %184, %v182
    %v186 = vpop.permute.xlu0 %185
    %v188 = vmul.f32 %v181, %v186
    %v189 = vld [vmem:[%s7] sm:$0xff]
    %191 = vset.pattern.permute.xlu0 0
    %192 = vperm.xlu0 %191, %v189
    %v193 = vpop.permute.xlu0 %192
    %v195 = vadd.f32 %v188, %v193
    %s196 = sld [smem:[#allocation2]]
    %v197 = vld [vmem:[%s29] sm:$0xff]
    %v198 = vld [vmem:[%s29 + $0x8] sm:$0xff]
    %v199 = vld [vmem:[%s29 + $0x10] sm:$0xff]
    %v200 = vld [vmem:[%s29 + $0x18] sm:$0xff]
    %v201 = vld [vmem:[%s29 + $0x20] sm:$0xff]
    %v202 = vld [vmem:[%s29 + $0x28] sm:$0xff]
    %v203 = vld [vmem:[%s29 + $0x30] sm:$0xff]
    %v204 = vld [vmem:[%s29 + $0x38] sm:$0xff]
    %v205 = vld [vmem:[%s29 + $0x40] sm:$0xff]
    %v206 = vld [vmem:[%s29 + $0x48] sm:$0xff]
    %v207 = vld [vmem:[%s29 + $0x50] sm:$0xff]
    %v208 = vld [vmem:[%s29 + $0x58] sm:$0xff]
    %v209 = vld [vmem:[%s29 + $0x60] sm:$0xff]
    %v210 = vld [vmem:[%s29 + $0x68] sm:$0xff]
    %v211 = vld [vmem:[%s29 + $0x70] sm:$0xff]
    %v212 = vld [vmem:[%s29 + $0x78] sm:$0xff]
    %v213 = vld [vmem:[%s29 + $0x80] sm:$0xff]
    %v214 = vld [vmem:[%s29 + $0x88] sm:$0xff]
    %v215 = vld [vmem:[%s29 + $0x90] sm:$0xff]
    %v216 = vld [vmem:[%s29 + $0x98] sm:$0xff]
    %v217 = vld [vmem:[%s29 + $0xa0] sm:$0xff]
    %v218 = vld [vmem:[%s29 + $0xa8] sm:$0xff]
    %v219 = vld [vmem:[%s17] sm:$0xff]
    %v220 = vld [vmem:[%s17 + $0x8] sm:$0xff]
    %v221 = vld [vmem:[%s19] sm:$0xff]
    %v222 = vld [vmem:[%s19 + $0x8] sm:$0xff]
    %224 = vset.pattern.permute.xlu0 0
    %225 = vperm.xlu0 %224, %v221
    %v226 = vpop.permute.xlu0 %225
    %229 = vset.pattern.permute.xlu0 0
    %230 = vperm.xlu0 %229, %v222
    %v231 = vpop.permute.xlu0 %230
    %vm233 = vcmask 64512
    %v235 = vsel %vm233, %v219, 0
    %v238 = vsel %vm233, %v220, 0
    %240 = vmatprep.subr.mxu0 0.0
    %241 = vmatpush1.msra.mxu0 %v195
    %242 = vmatprep.subr.mxu0 0.0
    %243 = vmatpush1.msra.mxu0 0.0
    %244 = vmatprep.subr.mxu0 0.0
    %245 = vmatpush1.msra.mxu0 0.0
    %246 = vmatprep.subr.mxu0 0.0
    %247 = vmatpush1.msra.mxu0 0.0
    %248 = vmatprep.subr.mxu0 0.0
    %249 = vmatpush1.msra.mxu0 0.0
    %250 = vmatprep.subr.mxu0 0.0
    %251 = vmatpush1.msra.mxu0 0.0
    %252 = vmatprep.subr.mxu0 0.0
    %253 = vmatpush1.msra.mxu0 0.0
    %254 = vmatprep.subr.mxu0 0.0
    %255 = vmatpush1.msra.mxu0 0.0
    %256 = vmatprep.subr.mxu0 0.0
    %257 = vmatpush1.msra.mxu0 0.0
    %258 = vmatprep.subr.mxu0 0.0
    %259 = vmatpush1.msra.mxu0 0.0
    %260 = vmatprep.subr.mxu0 0.0
    %261 = vmatpush1.msra.mxu0 0.0
    %262 = vmatprep.subr.mxu0 0.0
    %263 = vmatpush1.msra.mxu0 0.0
    %264 = vmatprep.subr.mxu0 0.0
    %265 = vmatpush1.msra.mxu0 0.0
    %266 = vmatprep.subr.mxu0 0.0
    %267 = vmatpush1.msra.mxu0 0.0
    %268 = vmatprep.subr.mxu0 0.0
    %269 = vmatpush1.msra.mxu0 0.0
    %270 = vmatprep.subr.mxu0 0.0
    %271 = vmatpush1.msra.mxu0 0.0
    %272 = vmatprep.subr.mxu0 0.0
    %273 = vmatpush1.msra.mxu0 0.0
    %274 = vmatprep.subr.mxu0 0.0
    %275 = vmatpush1.msra.mxu0 0.0
    %276 = vmatprep.subr.mxu0 0.0
    %277 = vmatpush1.msra.mxu0 0.0
    %278 = vmatprep.subr.mxu0 0.0
    %279 = vmatpush1.msra.mxu0 0.0
    %280 = vmatprep.subr.mxu0 0.0
    %281 = vmatpush1.msra.mxu0 0.0
    %282 = vmatprep.subr.mxu0 0.0
    %283 = vmatpush1.msra.mxu0 0.0
    %284 = vmatprep.subr.mxu0 0.0
    %285 = vmatpush1.msra.mxu0 0.0
    %286 = vmatprep.subr.mxu0 0.0
    %287 = vmatpush1.msra.mxu0 0.0
    %288 = vmatprep.subr.mxu0 0.0
    %289 = vmatpush1.msra.mxu0 0.0
    %290 = vmatprep.subr.mxu0 0.0
    %291 = vmatpush1.msra.mxu0 0.0
    %292 = vmatprep.subr.mxu0 0.0
    %293 = vmatpush1.msra.mxu0 0.0
    %294 = vmatprep.subr.mxu0 0.0
    %295 = vmatpush1.msra.mxu0 0.0
    %296 = vmatprep.subr.mxu0 0.0
    %297 = vmatpush1.msra.mxu0 0.0
    %298 = vmatprep.subr.mxu0 0.0
    %299 = vmatpush1.msra.mxu0 0.0
    %300 = vmatprep.subr.mxu0 0.0
    %301 = vmatpush1.msra.mxu0 0.0
    %302 = vmatprep.subr.mxu0 0.0
    %303 = vmatpush1.msra.mxu0 0.0
    %304 = vmatprep.mubr.f32.mxu0 0.0
    %305 = vmatmul.mubr.f32.gmra.mrb[0].mxu0 %v235
    %v306 = vpop.f32.mrb[0].mxu0
    %v307 = vadd.f32 %v226, %v306
    %v308 = vpop.f32.mrb[0].mxu0
    %309 = vmatprep.mubr.f32.mxu0 0.0
    %310 = vmatmul.mubr.f32.gmra.mrb[0].mxu0 %v238
    %v311 = vpop.f32.mrb[0].mxu0
    %v312 = vadd.f32 %v231, %v311
    %v313 = vpop.f32.mrb[0].mxu0
    %314 = vdwg.mxu0
    %315 = vxpose.xlu0.b32.start [1/16] %v307, 128
    %316 = vxpose.xlu0.b32.cont [2/16] 0.0, 128
    %317 = vxpose.xlu0.b32.cont [3/16] 0.0, 128
    %318 = vxpose.xlu0.b32.cont [4/16] 0.0, 128
    %319 = vxpose.xlu0.b32.cont [5/16] 0.0, 128
    %320 = vxpose.xlu0.b32.cont [6/16] 0.0, 128
    %321 = vxpose.xlu0.b32.cont [7/16] 0.0, 128
    %322 = vxpose.xlu0.b32.cont [8/16] 0.0, 128
    %323 = vxpose.xlu0.b32.cont [9/16] 0.0, 128
    %324 = vxpose.xlu0.b32.cont [10/16] 0.0, 128
    %325 = vxpose.xlu0.b32.cont [11/16] 0.0, 128
    %326 = vxpose.xlu0.b32.cont [12/16] 0.0, 128
    %327 = vxpose.xlu0.b32.cont [13/16] 0.0, 128
    %328 = vxpose.xlu0.b32.cont [14/16] 0.0, 128
    %329 = vxpose.xlu0.b32.cont [15/16] 0.0, 128
    %330 = vxpose.xlu0.b32.end [16/16] 0.0, 128
    %v331 = vpop.trf.xlu0
    %v332 = vpop.trf.xlu0
    %v333 = vpop.trf.xlu0
    %v334 = vpop.trf.xlu0
    %v335 = vpop.trf.xlu0
    %v336 = vpop.trf.xlu0
    %v337 = vpop.trf.xlu0
    %v338 = vpop.trf.xlu0
    %v339 = vpop.trf.xlu0
    %v340 = vpop.trf.xlu0
    %v341 = vpop.trf.xlu0
    %v342 = vpop.trf.xlu0
    %v343 = vpop.trf.xlu0
    %v344 = vpop.trf.xlu0
    %v345 = vpop.trf.xlu0
    %v346 = vpop.trf.xlu0
    %v348 = vsel %vm233, %v331, 0
    %v351 = vsel %vm233, %v332, 0
    %v354 = vsel %vm233, %v333, 0
    %v357 = vsel %vm233, %v334, 0
    %v360 = vsel %vm233, %v335, 0
    %v363 = vsel %vm233, %v336, 0
    %v366 = vsel %vm233, %v337, 0
    %v369 = vsel %vm233, %v338, 0
    %v372 = vsel %vm233, %v339, 0
    %v375 = vsel %vm233, %v340, 0
    %v378 = vsel %vm233, %v341, 0
    %v381 = vsel %vm233, %v342, 0
    %v384 = vsel %vm233, %v343, 0
    %v387 = vsel %vm233, %v344, 0
    %v390 = vsel %vm233, %v345, 0
    %v393 = vsel %vm233, %v346, 0
    %395 = vmatprep.subr.mxu0 0.0
    %396 = vmatpush1.msra.mxu0 %v312
    %397 = vmatprep.subr.mxu0 0.0
    %398 = vmatpush1.msra.mxu0 0.0
    %399 = vmatprep.subr.mxu0 0.0
    %400 = vmatpush1.msra.mxu0 0.0
    %401 = vmatprep.subr.mxu0 0.0
    %402 = vmatpush1.msra.mxu0 0.0
    %403 = vmatprep.subr.mxu0 0.0
    %404 = vmatpush1.msra.mxu0 0.0
    %405 = vmatprep.subr.mxu0 0.0
    %406 = vmatpush1.msra.mxu0 0.0
    %407 = vmatprep.subr.mxu0 0.0
    %408 = vmatpush1.msra.mxu0 0.0
    %409 = vmatprep.subr.mxu0 0.0
    %410 = vmatpush1.msra.mxu0 0.0
    %411 = vmatprep.subr.mxu0 0.0
    %412 = vmatpush1.msra.mxu0 0.0
    %413 = vmatprep.subr.mxu0 0.0
    %414 = vmatpush1.msra.mxu0 0.0
    %415 = vmatprep.subr.mxu0 0.0
    %416 = vmatpush1.msra.mxu0 0.0
    %417 = vmatprep.subr.mxu0 0.0
    %418 = vmatpush1.msra.mxu0 0.0
    %419 = vmatprep.subr.mxu0 0.0
    %420 = vmatpush1.msra.mxu0 0.0
    %421 = vmatprep.subr.mxu0 0.0
    %422 = vmatpush1.msra.mxu0 0.0
    %423 = vmatprep.subr.mxu0 0.0
    %424 = vmatpush1.msra.mxu0 0.0
    %425 = vmatprep.subr.mxu0 0.0
    %426 = vmatpush1.msra.mxu0 0.0
    %427 = vmatprep.subr.mxu0 0.0
    %428 = vmatpush1.msra.mxu0 0.0
    %429 = vmatprep.subr.mxu0 0.0
    %430 = vmatpush1.msra.mxu0 0.0
    %431 = vmatprep.subr.mxu0 0.0
    %432 = vmatpush1.msra.mxu0 0.0
    %433 = vmatprep.subr.mxu0 0.0
    %434 = vmatpush1.msra.mxu0 0.0
    %435 = vmatprep.subr.mxu0 0.0
    %436 = vmatpush1.msra.mxu0 0.0
    %437 = vmatprep.subr.mxu0 0.0
    %438 = vmatpush1.msra.mxu0 0.0
    %439 = vmatprep.subr.mxu0 0.0
    %440 = vmatpush1.msra.mxu0 0.0
    %441 = vmatprep.subr.mxu0 0.0
    %442 = vmatpush1.msra.mxu0 0.0
    %443 = vmatprep.subr.mxu0 0.0
    %444 = vmatpush1.msra.mxu0 0.0
    %445 = vmatprep.subr.mxu0 0.0
    %446 = vmatpush1.msra.mxu0 0.0
    %447 = vmatprep.subr.mxu0 0.0
    %448 = vmatpush1.msra.mxu0 0.0
    %449 = vmatprep.subr.mxu0 0.0
    %450 = vmatpush1.msra.mxu0 0.0
    %451 = vmatprep.subr.mxu0 0.0
    %452 = vmatpush1.msra.mxu0 0.0
    %453 = vmatprep.subr.mxu0 0.0
    %454 = vmatpush1.msra.mxu0 0.0
    %455 = vmatprep.subr.mxu0 0.0
    %456 = vmatpush1.msra.mxu0 0.0
    %457 = vmatprep.subr.mxu0 0.0
    %458 = vmatpush1.msra.mxu0 0.0
    %459 = vmatprep.mubr.f32.mxu0 0.0
    %460 = vmatmul.mubr.f32.gmra.mrb[0].mxu0 %v348
    %v461 = vpop.f32.mrb[0].mxu0
    %v462 = vadd.f32 0.0, %v461
    %v463 = vpop.f32.mrb[0].mxu0
    %464 = vmatprep.mubr.f32.mxu0 0.0
    %465 = vmatmul.mubr.f32.gmra.mrb[0].mxu0 %v351
    %v466 = vpop.f32.mrb[0].mxu0
    %v467 = vadd.f32 0.0, %v466
    %v468 = vpop.f32.mrb[0].mxu0
    %469 = vmatprep.mubr.f32.mxu0 0.0
    %470 = vmatmul.mubr.f32.gmra.mrb[0].mxu0 %v354
    %v471 = vpop.f32.mrb[0].mxu0
    %v472 = vadd.f32 0.0, %v471
    %v473 = vpop.f32.mrb[0].mxu0
    %474 = vmatprep.mubr.f32.mxu0 0.0
    %475 = vmatmul.mubr.f32.gmra.mrb[0].mxu0 %v357
    %v476 = vpop.f32.mrb[0].mxu0
    %v477 = vadd.f32 0.0, %v476
    %v478 = vpop.f32.mrb[0].mxu0
    %479 = vmatprep.mubr.f32.mxu0 0.0
    %480 = vmatmul.mubr.f32.gmra.mrb[0].mxu0 %v360
    %v481 = vpop.f32.mrb[0].mxu0
    %v482 = vadd.f32 0.0, %v481
    %v483 = vpop.f32.mrb[0].mxu0
    %484 = vmatprep.mubr.f32.mxu0 0.0
    %485 = vmatmul.mubr.f32.gmra.mrb[0].mxu0 %v363
    %v486 = vpop.f32.mrb[0].mxu0
    %v487 = vadd.f32 0.0, %v486
    %v488 = vpop.f32.mrb[0].mxu0
    %489 = vmatprep.mubr.f32.mxu0 0.0
    %490 = vmatmul.mubr.f32.gmra.mrb[0].mxu0 %v366
    %v491 = vpop.f32.mrb[0].mxu0
    %v492 = vadd.f32 0.0, %v491
    %v493 = vpop.f32.mrb[0].mxu0
    %494 = vmatprep.mubr.f32.mxu0 0.0
    %495 = vmatmul.mubr.f32.gmra.mrb[0].mxu0 %v369
    %v496 = vpop.f32.mrb[0].mxu0
    %v497 = vadd.f32 0.0, %v496
    %v498 = vpop.f32.mrb[0].mxu0
    %499 = vmatprep.mubr.f32.mxu0 0.0
    %500 = vmatmul.mubr.f32.gmra.mrb[0].mxu0 %v372
    %v501 = vpop.f32.mrb[0].mxu0
    %v502 = vadd.f32 0.0, %v501
    %v503 = vpop.f32.mrb[0].mxu0
    %504 = vmatprep.mubr.f32.mxu0 0.0
    %505 = vmatmul.mubr.f32.gmra.mrb[0].mxu0 %v375
    %v506 = vpop.f32.mrb[0].mxu0
    %v507 = vadd.f32 0.0, %v506
    %v508 = vpop.f32.mrb[0].mxu0
    %509 = vmatprep.mubr.f32.mxu0 0.0
    %510 = vmatmul.mubr.f32.gmra.mrb[0].mxu0 %v378
    %v511 = vpop.f32.mrb[0].mxu0
    %v512 = vadd.f32 0.0, %v511
    %v513 = vpop.f32.mrb[0].mxu0
    %514 = vmatprep.mubr.f32.mxu0 0.0
    %515 = vmatmul.mubr.f32.gmra.mrb[0].mxu0 %v381
    %v516 = vpop.f32.mrb[0].mxu0
    %v517 = vadd.f32 0.0, %v516
    %v518 = vpop.f32.mrb[0].mxu0
    %519 = vmatprep.mubr.f32.mxu0 0.0
    %520 = vmatmul.mubr.f32.gmra.mrb[0].mxu0 %v384
    %v521 = vpop.f32.mrb[0].mxu0
    %v522 = vadd.f32 0.0, %v521
    %v523 = vpop.f32.mrb[0].mxu0
    %524 = vmatprep.mubr.f32.mxu0 0.0
    %525 = vmatmul.mubr.f32.gmra.mrb[0].mxu0 %v387
    %v526 = vpop.f32.mrb[0].mxu0
    %v527 = vadd.f32 0.0, %v526
    %v528 = vpop.f32.mrb[0].mxu0
    %529 = vmatprep.mubr.f32.mxu0 0.0
    %530 = vmatmul.mubr.f32.gmra.mrb[0].mxu0 %v390
    %v531 = vpop.f32.mrb[0].mxu0
    %v532 = vadd.f32 0.0, %v531
    %v533 = vpop.f32.mrb[0].mxu0
    %534 = vmatprep.mubr.f32.mxu0 0.0
    %535 = vmatmul.mubr.f32.gmra.mrb[0].mxu0 %v393
    %v536 = vpop.f32.mrb[0].mxu0
    %v537 = vadd.f32 0.0, %v536
    %v538 = vpop.f32.mrb[0].mxu0
    %539 = vdwg.mxu0
    %v540 = vtanh.pop %v462
    %v541 = vtanh.pop %v467
    %v542 = vtanh.pop %v472
    %v543 = vtanh.pop %v477
    %v544 = vtanh.pop %v482
    %v545 = vtanh.pop %v487
    %v546 = vtanh.pop %v492
    %v547 = vtanh.pop %v497
    %v548 = vtanh.pop %v502
    %v549 = vtanh.pop %v507
    %v550 = vtanh.pop %v512
    %v551 = vtanh.pop %v517
    %v552 = vtanh.pop %v522
    %v553 = vtanh.pop %v527
    %v554 = vtanh.pop %v532
    %v555 = vtanh.pop %v537
    %v556 = vld [vmem:[%s15] sm:$0xff]
    %v557 = vld [vmem:[%s15 + $0x8] sm:$0xff]
    %v558 = vld [vmem:[%s15 + $0x10] sm:$0xff]
    %v559 = vld [vmem:[%s15 + $0x18] sm:$0xff]
    %v560 = vld [vmem:[%s15 + $0x20] sm:$0xff]
    %v561 = vld [vmem:[%s15 + $0x28] sm:$0xff]
    %v562 = vld [vmem:[%s15 + $0x30] sm:$0xff]
    %v563 = vld [vmem:[%s15 + $0x38] sm:$0xff]
    %v564 = vld [vmem:[%s15 + $0x40] sm:$0xff]
    %v565 = vld [vmem:[%s15 + $0x48] sm:$0xff]
    %v566 = vld [vmem:[%s15 + $0x50] sm:$0xff]
    %v567 = vld [vmem:[%s15 + $0x58] sm:$0xff]
    %v568 = vld [vmem:[%s15 + $0x60] sm:$0xff]
    %v569 = vld [vmem:[%s15 + $0x68] sm:$0xff]
    %v570 = vld [vmem:[%s15 + $0x70] sm:$0xff]
    %v571 = vld [vmem:[%s15 + $0x78] sm:$0xf]
    %v572 = vstv %s196
    %v573 = vmul.f32 %v540, %v572
    %v574 = vmul.f32 %v541, %v572
    %v575 = vmul.f32 %v542, %v572
    %v576 = vmul.f32 %v543, %v572
    %v577 = vmul.f32 %v544, %v572
    %v578 = vmul.f32 %v545, %v572
    %v579 = vmul.f32 %v546, %v572
    %v580 = vmul.f32 %v547, %v572
    %v581 = vmul.f32 %v548, %v572
    %v582 = vmul.f32 %v549, %v572
    %v583 = vmul.f32 %v550, %v572
    %v584 = vmul.f32 %v551, %v572
    %v585 = vmul.f32 %v552, %v572
    %v586 = vmul.f32 %v553, %v572
    %v587 = vmul.f32 %v554, %v572
    %v588 = vmul.f32 %v555, %v572
    %v589 = vmul.f32 %v573, %v148
    %v590 = vmul.f32 %v574, %v149
    %v591 = vmul.f32 %v575, %v150
    %v592 = vmul.f32 %v576, %v151
    %v593 = vmul.f32 %v577, %v152
    %v594 = vmul.f32 %v578, %v153
    %v595 = vmul.f32 %v579, %v154
    %v596 = vmul.f32 %v580, %v155
    %v597 = vmul.f32 %v581, %v156
    %v598 = vmul.f32 %v582, %v157
    %v599 = vmul.f32 %v583, %v158
    %v600 = vmul.f32 %v584, %v159
    %v601 = vmul.f32 %v585, %v160
    %v602 = vmul.f32 %v586, %v161
    %v603 = vmul.f32 %v587, %v162
    %v604 = vmul.f32 %v588, %v163
    %v605 = vadd.f32 %v556, %v589
    %v606 = vadd.f32 %v557, %v590
    %v607 = vadd.f32 %v558, %v591
    %v608 = vadd.f32 %v559, %v592
    %v609 = vadd.f32 %v560, %v593
    %v610 = vadd.f32 %v561, %v594
    %v611 = vadd.f32 %v562, %v595
    %v612 = vadd.f32 %v563, %v596
    %v613 = vadd.f32 %v564, %v597
    %v614 = vadd.f32 %v565, %v598
    %v615 = vadd.f32 %v566, %v599
    %v616 = vadd.f32 %v567, %v600
    %v617 = vadd.f32 %v568, %v601
    %v618 = vadd.f32 %v569, %v602
    %v619 = vadd.f32 %v570, %v603
    %v620 = vadd.f32 %v571, %v604
    %vm621 = vcmask 1014784
    %v623 = vsel %vm621, %v195, 0
    %vm625 = vcmask 1043456
    %v627 = vsel %vm625, %v620, 0
    %629 = vmatprep.subr.mxu0 0.0
    %630 = vmatpush1.msra.mxu0 %v605
    %631 = vmatprep.subr.mxu0 0.0
    %632 = vmatpush1.msra.mxu0 %v606
    %633 = vmatprep.subr.mxu0 0.0
    %634 = vmatpush1.msra.mxu0 %v607
    %635 = vmatprep.subr.mxu0 0.0
    %636 = vmatpush1.msra.mxu0 %v608
    %637 = vmatprep.subr.mxu0 0.0
    %638 = vmatpush1.msra.mxu0 %v609
    %639 = vmatprep.subr.mxu0 0.0
    %640 = vmatpush1.msra.mxu0 %v610
    %641 = vmatprep.subr.mxu0 0.0
    %642 = vmatpush1.msra.mxu0 %v611
    %643 = vmatprep.subr.mxu0 0.0
    %644 = vmatpush1.msra.mxu0 %v612
    %645 = vmatprep.subr.mxu0 0.0
    %646 = vmatpush1.msra.mxu0 %v613
    %647 = vmatprep.subr.mxu0 0.0
    %648 = vmatpush1.msra.mxu0 %v614
    %649 = vmatprep.subr.mxu0 0.0
    %650 = vmatpush1.msra.mxu0 %v615
    %651 = vmatprep.subr.mxu0 0.0
    %652 = vmatpush1.msra.mxu0 %v616
    %653 = vmatprep.subr.mxu0 0.0
    %654 = vmatpush1.msra.mxu0 %v617
    %655 = vmatprep.subr.mxu0 0.0
    %656 = vmatpush1.msra.mxu0 %v618
    %657 = vmatprep.subr.mxu0 0.0
    %658 = vmatpush1.msra.mxu0 %v619
    %659 = vmatprep.subr.mxu0 0.0
    %660 = vmatpush1.msra.mxu0 %v627
    %661 = vmatprep.subr.mxu0 0.0
    %662 = vmatpush1.msra.mxu0 0.0
    %663 = vmatprep.subr.mxu0 0.0
    %664 = vmatpush1.msra.mxu0 0.0
    %665 = vmatprep.subr.mxu0 0.0
    %666 = vmatpush1.msra.mxu0 0.0
    %667 = vmatprep.subr.mxu0 0.0
    %668 = vmatpush1.msra.mxu0 0.0
    %669 = vmatprep.subr.mxu0 0.0
    %670 = vmatpush1.msra.mxu0 0.0
    %671 = vmatprep.subr.mxu0 0.0
    %672 = vmatpush1.msra.mxu0 0.0
    %673 = vmatprep.subr.mxu0 0.0
    %674 = vmatpush1.msra.mxu0 0.0
    %675 = vmatprep.subr.mxu0 0.0
    %676 = vmatpush1.msra.mxu0 0.0
    %677 = vmatprep.subr.mxu0 0.0
    %678 = vmatpush1.msra.mxu0 0.0
    %679 = vmatprep.subr.mxu0 0.0
    %680 = vmatpush1.msra.mxu0 0.0
    %681 = vmatprep.subr.mxu0 0.0
    %682 = vmatpush1.msra.mxu0 0.0
    %683 = vmatprep.subr.mxu0 0.0
    %684 = vmatpush1.msra.mxu0 0.0
    %685 = vmatprep.subr.mxu0 0.0
    %686 = vmatpush1.msra.mxu0 0.0
    %687 = vmatprep.subr.mxu0 0.0
    %688 = vmatpush1.msra.mxu0 0.0
    %689 = vmatprep.subr.mxu0 0.0
    %690 = vmatpush1.msra.mxu0 0.0
    %691 = vmatprep.subr.mxu0 0.0
    %692 = vmatpush1.msra.mxu0 0.0
    %693 = vmatprep.mubr.f32.mxu0 0.0
    %694 = vmatmul.mubr.f32.gmra.mrb[0].mxu0 %v623
    %v695 = vpop.f32.mrb[0].mxu0
    %v696 = vadd.f32 0.0, %v695
    %v697 = vpop.f32.mrb[0].mxu0
    %698 = vdwg.mxu0
    %v699 = vld [vmem:[%s21] sm:$0xff]
    %v700 = vld [vmem:[%s21 + $0x8] sm:$0xff]
    %v701 = vld [vmem:[%s21 + $0x10] sm:$0xff]
    %v702 = vld [vmem:[%s21 + $0x18] sm:$0xff]
    %704 = vset.pattern.permute.xlu0 0
    %705 = vperm.xlu0 %704, %v197
    %v706 = vpop.permute.xlu0 %705
    %709 = vset.pattern.permute.xlu0 0
    %710 = vperm.xlu0 %709, %v198
    %v711 = vpop.permute.xlu0 %710
    %714 = vset.pattern.permute.xlu0 0
    %715 = vperm.xlu0 %714, %v199
    %v716 = vpop.permute.xlu0 %715
    %719 = vset.pattern.permute.xlu0 0
    %720 = vperm.xlu0 %719, %v200
    %v721 = vpop.permute.xlu0 %720
    %v724 = vsel %vm233, %v699, 0
    %v727 = vsel %vm233, %v700, 0
    %v730 = vsel %vm233, %v701, 0
    %v733 = vsel %vm233, %v702, 0
    %735 = vmatprep.subr.mxu0 0.0
    %736 = vmatpush1.msra.mxu0 %v696
    %737 = vmatprep.subr.mxu0 0.0
    %738 = vmatpush1.msra.mxu0 0.0
    %739 = vmatprep.subr.mxu0 0.0
    %740 = vmatpush1.msra.mxu0 0.0
    %741 = vmatprep.subr.mxu0 0.0
    %742 = vmatpush1.msra.mxu0 0.0
    %743 = vmatprep.subr.mxu0 0.0
    %744 = vmatpush1.msra.mxu0 0.0
    %745 = vmatprep.subr.mxu0 0.0
    %746 = vmatpush1.msra.mxu0 0.0
    %747 = vmatprep.subr.mxu0 0.0
    %748 = vmatpush1.msra.mxu0 0.0
    %749 = vmatprep.subr.mxu0 0.0
    %750 = vmatpush1.msra.mxu0 0.0
    %751 = vmatprep.subr.mxu0 0.0
    %752 = vmatpush1.msra.mxu0 0.0
    %753 = vmatprep.subr.mxu0 0.0
    %754 = vmatpush1.msra.mxu0 0.0
    %755 = vmatprep.subr.mxu0 0.0
    %756 = vmatpush1.msra.mxu0 0.0
    %757 = vmatprep.subr.mxu0 0.0
    %758 = vmatpush1.msra.mxu0 0.0
    %759 = vmatprep.subr.mxu0 0.0
    %760 = vmatpush1.msra.mxu0 0.0
    %761 = vmatprep.subr.mxu0 0.0
    %762 = vmatpush1.msra.mxu0 0.0
    %763 = vmatprep.subr.mxu0 0.0
    %764 = vmatpush1.msra.mxu0 0.0
    %765 = vmatprep.subr.mxu0 0.0
    %766 = vmatpush1.msra.mxu0 0.0
    %767 = vmatprep.subr.mxu0 0.0
    %768 = vmatpush1.msra.mxu0 0.0
    %769 = vmatprep.subr.mxu0 0.0
    %770 = vmatpush1.msra.mxu0 0.0
    %771 = vmatprep.subr.mxu0 0.0
    %772 = vmatpush1.msra.mxu0 0.0
    %773 = vmatprep.subr.mxu0 0.0
    %774 = vmatpush1.msra.mxu0 0.0
    %775 = vmatprep.subr.mxu0 0.0
    %776 = vmatpush1.msra.mxu0 0.0
    %777 = vmatprep.subr.mxu0 0.0
    %778 = vmatpush1.msra.mxu0 0.0
    %779 = vmatprep.subr.mxu0 0.0
    %780 = vmatpush1.msra.mxu0 0.0
    %781 = vmatprep.subr.mxu0 0.0
    %782 = vmatpush1.msra.mxu0 0.0
    %783 = vmatprep.subr.mxu0 0.0
    %784 = vmatpush1.msra.mxu0 0.0
    %785 = vmatprep.subr.mxu0 0.0
    %786 = vmatpush1.msra.mxu0 0.0
    %787 = vmatprep.subr.mxu0 0.0
    %788 = vmatpush1.msra.mxu0 0.0
    %789 = vmatprep.subr.mxu0 0.0
    %790 = vmatpush1.msra.mxu0 0.0
    %791 = vmatprep.subr.mxu0 0.0
    %792 = vmatpush1.msra.mxu0 0.0
    %793 = vmatprep.subr.mxu0 0.0
    %794 = vmatpush1.msra.mxu0 0.0
    %795 = vmatprep.subr.mxu0 0.0
    %796 = vmatpush1.msra.mxu0 0.0
    %797 = vmatprep.subr.mxu0 0.0
    %798 = vmatpush1.msra.mxu0 0.0
    %799 = vmatprep.mubr.f32.mxu0 0.0
    %800 = vmatmul.mubr.f32.gmra.mrb[0].mxu0 %v724
    %v801 = vpop.f32.mrb[0].mxu0
    %v802 = vadd.f32 %v706, %v801
    %v803 = vpop.f32.mrb[0].mxu0
    %804 = vmatprep.mubr.f32.mxu0 0.0
    %805 = vmatmul.mubr.f32.gmra.mrb[0].mxu0 %v727
    %v806 = vpop.f32.mrb[0].mxu0
    %v807 = vadd.f32 %v711, %v806
    %v808 = vpop.f32.mrb[0].mxu0
    %809 = vmatprep.mubr.f32.mxu0 0.0
    %810 = vmatmul.mubr.f32.gmra.mrb[0].mxu0 %v730
    %v811 = vpop.f32.mrb[0].mxu0
    %v812 = vadd.f32 %v716, %v811
    %v813 = vpop.f32.mrb[0].mxu0
    %814 = vmatprep.mubr.f32.mxu0 0.0
    %815 = vmatmul.mubr.f32.gmra.mrb[0].mxu0 %v733
    %v816 = vpop.f32.mrb[0].mxu0
    %v817 = vadd.f32 %v721, %v816
    %v818 = vpop.f32.mrb[0].mxu0
    %819 = vdwg.mxu0
    %v820 = vld [vmem:[%s23] sm:$0xff]
    %v821 = vld [vmem:[%s23 + $0x8] sm:$0xff]
    %v822 = vld [vmem:[%s23 + $0x10] sm:$0xff]
    %v823 = vld [vmem:[%s23 + $0x18] sm:$0xff]
    %825 = vset.pattern.permute.xlu0 0
    %826 = vperm.xlu0 %825, %v201
    %v827 = vpop.permute.xlu0 %826
    %830 = vset.pattern.permute.xlu0 0
    %831 = vperm.xlu0 %830, %v202
    %v832 = vpop.permute.xlu0 %831
    %835 = vset.pattern.permute.xlu0 0
    %836 = vperm.xlu0 %835, %v203
    %v837 = vpop.permute.xlu0 %836
    %840 = vset.pattern.permute.xlu0 0
    %841 = vperm.xlu0 %840, %v204
    %v842 = vpop.permute.xlu0 %841
    %v845 = vsel %vm233, %v820, 0
    %v848 = vsel %vm233, %v821, 0
    %v851 = vsel %vm233, %v822, 0
    %v854 = vsel %vm233, %v823, 0
    %856 = vmatprep.subr.mxu0 0.0
    %857 = vmatpush1.msra.mxu0 %v195
    %858 = vmatprep.subr.mxu0 0.0
    %859 = vmatpush1.msra.mxu0 0.0
    %860 = vmatprep.subr.mxu0 0.0
    %861 = vmatpush1.msra.mxu0 0.0
    %862 = vmatprep.subr.mxu0 0.0
    %863 = vmatpush1.msra.mxu0 0.0
    %864 = vmatprep.subr.mxu0 0.0
    %865 = vmatpush1.msra.mxu0 0.0
    %866 = vmatprep.subr.mxu0 0.0
    %867 = vmatpush1.msra.mxu0 0.0
    %868 = vmatprep.subr.mxu0 0.0
    %869 = vmatpush1.msra.mxu0 0.0
    %870 = vmatprep.subr.mxu0 0.0
    %871 = vmatpush1.msra.mxu0 0.0
    %872 = vmatprep.subr.mxu0 0.0
    %873 = vmatpush1.msra.mxu0 0.0
    %874 = vmatprep.subr.mxu0 0.0
    %875 = vmatpush1.msra.mxu0 0.0
    %876 = vmatprep.subr.mxu0 0.0
    %877 = vmatpush1.msra.mxu0 0.0
    %878 = vmatprep.subr.mxu0 0.0
    %879 = vmatpush1.msra.mxu0 0.0
    %880 = vmatprep.subr.mxu0 0.0
    %881 = vmatpush1.msra.mxu0 0.0
    %882 = vmatprep.subr.mxu0 0.0
    %883 = vmatpush1.msra.mxu0 0.0
    %884 = vmatprep.subr.mxu0 0.0
    %885 = vmatpush1.msra.mxu0 0.0
    %886 = vmatprep.subr.mxu0 0.0
    %887 = vmatpush1.msra.mxu0 0.0
    %888 = vmatprep.subr.mxu0 0.0
    %889 = vmatpush1.msra.mxu0 0.0
    %890 = vmatprep.subr.mxu0 0.0
    %891 = vmatpush1.msra.mxu0 0.0
    %892 = vmatprep.subr.mxu0 0.0
    %893 = vmatpush1.msra.mxu0 0.0
    %894 = vmatprep.subr.mxu0 0.0
    %895 = vmatpush1.msra.mxu0 0.0
    %896 = vmatprep.subr.mxu0 0.0
    %897 = vmatpush1.msra.mxu0 0.0
    %898 = vmatprep.subr.mxu0 0.0
    %899 = vmatpush1.msra.mxu0 0.0
    %900 = vmatprep.subr.mxu0 0.0
    %901 = vmatpush1.msra.mxu0 0.0
    %902 = vmatprep.subr.mxu0 0.0
    %903 = vmatpush1.msra.mxu0 0.0
    %904 = vmatprep.subr.mxu0 0.0
    %905 = vmatpush1.msra.mxu0 0.0
    %906 = vmatprep.subr.mxu0 0.0
    %907 = vmatpush1.msra.mxu0 0.0
    %908 = vmatprep.subr.mxu0 0.0
    %909 = vmatpush1.msra.mxu0 0.0
    %910 = vmatprep.subr.mxu0 0.0
    %911 = vmatpush1.msra.mxu0 0.0
    %912 = vmatprep.subr.mxu0 0.0
    %913 = vmatpush1.msra.mxu0 0.0
    %914 = vmatprep.subr.mxu0 0.0
    %915 = vmatpush1.msra.mxu0 0.0
    %916 = vmatprep.subr.mxu0 0.0
    %917 = vmatpush1.msra.mxu0 0.0
    %918 = vmatprep.subr.mxu0 0.0
    %919 = vmatpush1.msra.mxu0 0.0
    %920 = vmatprep.mubr.f32.mxu0 0.0
    %921 = vmatmul.mubr.f32.gmra.mrb[0].mxu0 %v845
    %v922 = vpop.f32.mrb[0].mxu0
    %v923 = vadd.f32 %v827, %v922
    %v924 = vpop.f32.mrb[0].mxu0
    %925 = vmatprep.mubr.f32.mxu0 0.0
    %926 = vmatmul.mubr.f32.gmra.mrb[0].mxu0 %v848
    %v927 = vpop.f32.mrb[0].mxu0
    %v928 = vadd.f32 %v832, %v927
    %v929 = vpop.f32.mrb[0].mxu0
    %930 = vmatprep.mubr.f32.mxu0 0.0
    %931 = vmatmul.mubr.f32.gmra.mrb[0].mxu0 %v851
    %v932 = vpop.f32.mrb[0].mxu0
    %v933 = vadd.f32 %v837, %v932
    %v934 = vpop.f32.mrb[0].mxu0
    %935 = vmatprep.mubr.f32.mxu0 0.0
    %936 = vmatmul.mubr.f32.gmra.mrb[0].mxu0 %v854
    %v937 = vpop.f32.mrb[0].mxu0
    %v938 = vadd.f32 %v842, %v937
    %v939 = vpop.f32.mrb[0].mxu0
    %940 = vdwg.mxu0
    %v941 = vadd.f32 %v802, %v923
    %v942 = vadd.f32 %v807, %v928
    %v943 = vadd.f32 %v812, %v933
    %v944 = vadd.f32 %v817, %v938
    %v945 = vmax.f32 %v941, 0.0
    %v946 = vmax.f32 %v942, 0.0
    %v947 = vmax.f32 %v943, 0.0
    %v948 = vmax.f32 %v944, 0.0
    %v950 = vsel %vm621, %v945, 0
    %v953 = vsel %vm621, %v946, 0
    %v956 = vsel %vm621, %v947, 0
    %v959 = vsel %vm621, %v948, 0
    %v962 = vsel %vm625, %v179, 0
    %964 = vmatprep.subr.mxu0 0.0
    %965 = vmatpush1.msra.mxu0 %v164
    %966 = vmatprep.subr.mxu0 0.0
    %967 = vmatpush1.msra.mxu0 %v165
    %968 = vmatprep.subr.mxu0 0.0
    %969 = vmatpush1.msra.mxu0 %v166
    %970 = vmatprep.subr.mxu0 0.0
    %971 = vmatpush1.msra.mxu0 %v167
    %972 = vmatprep.subr.mxu0 0.0
    %973 = vmatpush1.msra.mxu0 %v168
    %974 = vmatprep.subr.mxu0 0.0
    %975 = vmatpush1.msra.mxu0 %v169
    %976 = vmatprep.subr.mxu0 0.0
    %977 = vmatpush1.msra.mxu0 %v170
    %978 = vmatprep.subr.mxu0 0.0
    %979 = vmatpush1.msra.mxu0 %v171
    %980 = vmatprep.subr.mxu0 0.0
    %981 = vmatpush1.msra.mxu0 %v172
    %982 = vmatprep.subr.mxu0 0.0
    %983 = vmatpush1.msra.mxu0 %v173
    %984 = vmatprep.subr.mxu0 0.0
    %985 = vmatpush1.msra.mxu0 %v174
    %986 = vmatprep.subr.mxu0 0.0
    %987 = vmatpush1.msra.mxu0 %v175
    %988 = vmatprep.subr.mxu0 0.0
    %989 = vmatpush1.msra.mxu0 %v176
    %990 = vmatprep.subr.mxu0 0.0
    %991 = vmatpush1.msra.mxu0 %v177
    %992 = vmatprep.subr.mxu0 0.0
    %993 = vmatpush1.msra.mxu0 %v178
    %994 = vmatprep.subr.mxu0 0.0
    %995 = vmatpush1.msra.mxu0 %v962
    %996 = vmatprep.subr.mxu0 0.0
    %997 = vmatpush1.msra.mxu0 0.0
    %998 = vmatprep.subr.mxu0 0.0
    %999 = vmatpush1.msra.mxu0 0.0
    %1000 = vmatprep.subr.mxu0 0.0
    %1001 = vmatpush1.msra.mxu0 0.0
    %1002 = vmatprep.subr.mxu0 0.0
    %1003 = vmatpush1.msra.mxu0 0.0
    %1004 = vmatprep.subr.mxu0 0.0
    %1005 = vmatpush1.msra.mxu0 0.0
    %1006 = vmatprep.subr.mxu0 0.0
    %1007 = vmatpush1.msra.mxu0 0.0
    %1008 = vmatprep.subr.mxu0 0.0
    %1009 = vmatpush1.msra.mxu0 0.0
    %1010 = vmatprep.subr.mxu0 0.0
    %1011 = vmatpush1.msra.mxu0 0.0
    %1012 = vmatprep.subr.mxu0 0.0
    %1013 = vmatpush1.msra.mxu0 0.0
    %1014 = vmatprep.subr.mxu0 0.0
    %1015 = vmatpush1.msra.mxu0 0.0
    %1016 = vmatprep.subr.mxu0 0.0
    %1017 = vmatpush1.msra.mxu0 0.0
    %1018 = vmatprep.subr.mxu0 0.0
    %1019 = vmatpush1.msra.mxu0 0.0
    %1020 = vmatprep.subr.mxu0 0.0
    %1021 = vmatpush1.msra.mxu0 0.0
    %1022 = vmatprep.subr.mxu0 0.0
    %1023 = vmatpush1.msra.mxu0 0.0
    %1024 = vmatprep.subr.mxu0 0.0
    %1025 = vmatpush1.msra.mxu0 0.0
    %1026 = vmatprep.subr.mxu0 0.0
    %1027 = vmatpush1.msra.mxu0 0.0
    %1028 = vmatprep.mubr.f32.mxu0 0.0
    %1029 = vmatmul.mubr.f32.gmra.mrb[0].mxu0 %v950
    %v1030 = vpop.f32.mrb[0].mxu0
    %v1031 = vadd.f32 0.0, %v1030
    %v1032 = vpop.f32.mrb[0].mxu0
    %1033 = vmatprep.mubr.f32.mxu0 0.0
    %1034 = vmatmul.mubr.f32.gmra.mrb[0].mxu0 %v953
    %v1035 = vpop.f32.mrb[0].mxu0
    %v1036 = vadd.f32 0.0, %v1035
    %v1037 = vpop.f32.mrb[0].mxu0
    %1038 = vmatprep.mubr.f32.mxu0 0.0
    %1039 = vmatmul.mubr.f32.gmra.mrb[0].mxu0 %v956
    %v1040 = vpop.f32.mrb[0].mxu0
    %v1041 = vadd.f32 0.0, %v1040
    %v1042 = vpop.f32.mrb[0].mxu0
    %1043 = vmatprep.mubr.f32.mxu0 0.0
    %1044 = vmatmul.mubr.f32.gmra.mrb[0].mxu0 %v959
    %v1045 = vpop.f32.mrb[0].mxu0
    %v1046 = vadd.f32 0.0, %v1045
    %v1047 = vpop.f32.mrb[0].mxu0
    %1048 = vdwg.mxu0
    %v1049 = vld [vmem:[%s25] sm:$0xff]
    %v1050 = vld [vmem:[%s25 + $0x8] sm:$0xff]
    %1052 = vset.pattern.permute.xlu0 0
    %1053 = vperm.xlu0 %1052, %v205
    %v1054 = vpop.permute.xlu0 %1053
    %1057 = vset.pattern.permute.xlu0 0
    %1058 = vperm.xlu0 %1057, %v206
    %v1059 = vpop.permute.xlu0 %1058
    %vm1061 = vcmask 261120
    %v1063 = vsel %vm1061, %v1049, 0
    %v1066 = vsel %vm1061, %v1050, 0
    %1068 = vmatprep.subr.mxu0 0.0
    %1069 = vmatpush1.msra.mxu0 %v1031
    %1070 = vmatprep.subr.mxu0 0.0
    %1071 = vmatpush1.msra.mxu0 %v1036
    %1072 = vmatprep.subr.mxu0 0.0
    %1073 = vmatpush1.msra.mxu0 %v1041
    %1074 = vmatprep.subr.mxu0 0.0
    %1075 = vmatpush1.msra.mxu0 %v1046
    %1076 = vmatprep.subr.mxu0 0.0
    %1077 = vmatpush1.msra.mxu0 0.0
    %1078 = vmatprep.subr.mxu0 0.0
    %1079 = vmatpush1.msra.mxu0 0.0
    %1080 = vmatprep.subr.mxu0 0.0
    %1081 = vmatpush1.msra.mxu0 0.0
    %1082 = vmatprep.subr.mxu0 0.0
    %1083 = vmatpush1.msra.mxu0 0.0
    %1084 = vmatprep.subr.mxu0 0.0
    %1085 = vmatpush1.msra.mxu0 0.0
    %1086 = vmatprep.subr.mxu0 0.0
    %1087 = vmatpush1.msra.mxu0 0.0
    %1088 = vmatprep.subr.mxu0 0.0
    %1089 = vmatpush1.msra.mxu0 0.0
    %1090 = vmatprep.subr.mxu0 0.0
    %1091 = vmatpush1.msra.mxu0 0.0
    %1092 = vmatprep.subr.mxu0 0.0
    %1093 = vmatpush1.msra.mxu0 0.0
    %1094 = vmatprep.subr.mxu0 0.0
    %1095 = vmatpush1.msra.mxu0 0.0
    %1096 = vmatprep.subr.mxu0 0.0
    %1097 = vmatpush1.msra.mxu0 0.0
    %1098 = vmatprep.subr.mxu0 0.0
    %1099 = vmatpush1.msra.mxu0 0.0
    %1100 = vmatprep.subr.mxu0 0.0
    %1101 = vmatpush1.msra.mxu0 0.0
    %1102 = vmatprep.subr.mxu0 0.0
    %1103 = vmatpush1.msra.mxu0 0.0
    %1104 = vmatprep.subr.mxu0 0.0
    %1105 = vmatpush1.msra.mxu0 0.0
    %1106 = vmatprep.subr.mxu0 0.0
    %1107 = vmatpush1.msra.mxu0 0.0
    %1108 = vmatprep.subr.mxu0 0.0
    %1109 = vmatpush1.msra.mxu0 0.0
    %1110 = vmatprep.subr.mxu0 0.0
    %1111 = vmatpush1.msra.mxu0 0.0
    %1112 = vmatprep.subr.mxu0 0.0
    %1113 = vmatpush1.msra.mxu0 0.0
    %1114 = vmatprep.subr.mxu0 0.0
    %1115 = vmatpush1.msra.mxu0 0.0
    %1116 = vmatprep.subr.mxu0 0.0
    %1117 = vmatpush1.msra.mxu0 0.0
    %1118 = vmatprep.subr.mxu0 0.0
    %1119 = vmatpush1.msra.mxu0 0.0
    %1120 = vmatprep.subr.mxu0 0.0
    %1121 = vmatpush1.msra.mxu0 0.0
    %1122 = vmatprep.subr.mxu0 0.0
    %1123 = vmatpush1.msra.mxu0 0.0
    %1124 = vmatprep.subr.mxu0 0.0
    %1125 = vmatpush1.msra.mxu0 0.0
    %1126 = vmatprep.subr.mxu0 0.0
    %1127 = vmatpush1.msra.mxu0 0.0
    %1128 = vmatprep.subr.mxu0 0.0
    %1129 = vmatpush1.msra.mxu0 0.0
    %1130 = vmatprep.subr.mxu0 0.0
    %1131 = vmatpush1.msra.mxu0 0.0
    %1132 = vmatprep.mubr.f32.mxu0 0.0
    %1133 = vmatmul.mubr.f32.gmra.mrb[0].mxu0 %v1063
    %v1134 = vpop.f32.mrb[0].mxu0
    %v1135 = vadd.f32 %v1054, %v1134
    %v1136 = vpop.f32.mrb[0].mxu0
    %1137 = vmatprep.mubr.f32.mxu0 0.0
    %1138 = vmatmul.mubr.f32.gmra.mrb[0].mxu0 %v1066
    %v1139 = vpop.f32.mrb[0].mxu0
    %v1140 = vadd.f32 %v1059, %v1139
    %v1141 = vpop.f32.mrb[0].mxu0
    %1142 = vdwg.mxu0
    %v1143 = vmax.f32 %v1135, 0.0
    %v1144 = vmax.f32 %v1140, 0.0
    %v1145 = vld [vmem:[%s27] sm:$0xff]
    %v1146 = vld [vmem:[%s27 + $0x8] sm:$0xff]
    %v1147 = vld [vmem:[%s27 + $0x10] sm:$0xff]
    %v1148 = vld [vmem:[%s27 + $0x18] sm:$0xff]
    %1150 = vset.pattern.permute.xlu0 0
    %1151 = vperm.xlu0 %1150, %v207
    %v1152 = vpop.permute.xlu0 %1151
    %1155 = vset.pattern.permute.xlu0 0
    %1156 = vperm.xlu0 %1155, %v208
    %v1157 = vpop.permute.xlu0 %1156
    %1160 = vset.pattern.permute.xlu0 0
    %1161 = vperm.xlu0 %1160, %v209
    %v1162 = vpop.permute.xlu0 %1161
    %1165 = vset.pattern.permute.xlu0 0
    %1166 = vperm.xlu0 %1165, %v210
    %v1167 = vpop.permute.xlu0 %1166
    %vm1169 = vcmask 130048
    %v1171 = vsel %vm1169, %v1145, 0
    %v1174 = vsel %vm1169, %v1146, 0
    %v1177 = vsel %vm1169, %v1147, 0
    %v1180 = vsel %vm1169, %v1148, 0
    %1182 = vmatprep.subr.mxu0 0.0
    %1183 = vmatpush1.msra.mxu0 %v1143
    %1184 = vmatprep.subr.mxu0 0.0
    %1185 = vmatpush1.msra.mxu0 %v1144
    %1186 = vmatprep.subr.mxu0 0.0
    %1187 = vmatpush1.msra.mxu0 0.0
    %1188 = vmatprep.subr.mxu0 0.0
    %1189 = vmatpush1.msra.mxu0 0.0
    %1190 = vmatprep.subr.mxu0 0.0
    %1191 = vmatpush1.msra.mxu0 0.0
    %1192 = vmatprep.subr.mxu0 0.0
    %1193 = vmatpush1.msra.mxu0 0.0
    %1194 = vmatprep.subr.mxu0 0.0
    %1195 = vmatpush1.msra.mxu0 0.0
    %1196 = vmatprep.subr.mxu0 0.0
    %1197 = vmatpush1.msra.mxu0 0.0
    %1198 = vmatprep.subr.mxu0 0.0
    %1199 = vmatpush1.msra.mxu0 0.0
    %1200 = vmatprep.subr.mxu0 0.0
    %1201 = vmatpush1.msra.mxu0 0.0
    %1202 = vmatprep.subr.mxu0 0.0
    %1203 = vmatpush1.msra.mxu0 0.0
    %1204 = vmatprep.subr.mxu0 0.0
    %1205 = vmatpush1.msra.mxu0 0.0
    %1206 = vmatprep.subr.mxu0 0.0
    %1207 = vmatpush1.msra.mxu0 0.0
    %1208 = vmatprep.subr.mxu0 0.0
    %1209 = vmatpush1.msra.mxu0 0.0
    %1210 = vmatprep.subr.mxu0 0.0
    %1211 = vmatpush1.msra.mxu0 0.0
    %1212 = vmatprep.subr.mxu0 0.0
    %1213 = vmatpush1.msra.mxu0 0.0
    %1214 = vmatprep.subr.mxu0 0.0
    %1215 = vmatpush1.msra.mxu0 0.0
    %1216 = vmatprep.subr.mxu0 0.0
    %1217 = vmatpush1.msra.mxu0 0.0
    %1218 = vmatprep.subr.mxu0 0.0
    %1219 = vmatpush1.msra.mxu0 0.0
    %1220 = vmatprep.subr.mxu0 0.0
    %1221 = vmatpush1.msra.mxu0 0.0
    %1222 = vmatprep.subr.mxu0 0.0
    %1223 = vmatpush1.msra.mxu0 0.0
    %1224 = vmatprep.subr.mxu0 0.0
    %1225 = vmatpush1.msra.mxu0 0.0
    %1226 = vmatprep.subr.mxu0 0.0
    %1227 = vmatpush1.msra.mxu0 0.0
    %1228 = vmatprep.subr.mxu0 0.0
    %1229 = vmatpush1.msra.mxu0 0.0
    %1230 = vmatprep.subr.mxu0 0.0
    %1231 = vmatpush1.msra.mxu0 0.0
    %1232 = vmatprep.subr.mxu0 0.0
    %1233 = vmatpush1.msra.mxu0 0.0
    %1234 = vmatprep.subr.mxu0 0.0
    %1235 = vmatpush1.msra.mxu0 0.0
    %1236 = vmatprep.subr.mxu0 0.0
    %1237 = vmatpush1.msra.mxu0 0.0
    %1238 = vmatprep.subr.mxu0 0.0
    %1239 = vmatpush1.msra.mxu0 0.0
    %1240 = vmatprep.subr.mxu0 0.0
    %1241 = vmatpush1.msra.mxu0 0.0
    %1242 = vmatprep.subr.mxu0 0.0
    %1243 = vmatpush1.msra.mxu0 0.0
    %1244 = vmatprep.subr.mxu0 0.0
    %1245 = vmatpush1.msra.mxu0 0.0
    %1246 = vmatprep.mubr.f32.mxu0 0.0
    %1247 = vmatmul.mubr.f32.gmra.mrb[0].mxu0 %v1171
    %v1248 = vpop.f32.mrb[0].mxu0
    %v1249 = vadd.f32 %v1152, %v1248
    %v1250 = vpop.f32.mrb[0].mxu0
    %1251 = vmatprep.mubr.f32.mxu0 0.0
    %1252 = vmatmul.mubr.f32.gmra.mrb[0].mxu0 %v1174
    %v1253 = vpop.f32.mrb[0].mxu0
    %v1254 = vadd.f32 %v1157, %v1253
    %v1255 = vpop.f32.mrb[0].mxu0
    %1256 = vmatprep.mubr.f32.mxu0 0.0
    %1257 = vmatmul.mubr.f32.gmra.mrb[0].mxu0 %v1177
    %v1258 = vpop.f32.mrb[0].mxu0
    %v1259 = vadd.f32 %v1162, %v1258
    %v1260 = vpop.f32.mrb[0].mxu0
    %1261 = vmatprep.mubr.f32.mxu0 0.0
    %1262 = vmatmul.mubr.f32.gmra.mrb[0].mxu0 %v1180
    %v1263 = vpop.f32.mrb[0].mxu0
    %v1264 = vadd.f32 %v1167, %v1263
    %v1265 = vpop.f32.mrb[0].mxu0
    %1266 = vdwg.mxu0
    %v1267 = vxor.u32 %v1249, 2147483648
    %v1268 = vxor.u32 %v1254, 2147483648
    %v1269 = vxor.u32 %v1259, 2147483648
    %v1270 = vxor.u32 %v1264, 2147483648
    %v1271 = vmul.f32 %v1267, 1.442695
    %v1272 = vpow.pop %v1271
    %v1273 = vmul.f32 %v1268, 1.442695
    %v1274 = vpow.pop %v1273
    %v1275 = vmul.f32 %v1269, 1.442695
    %v1276 = vpow.pop %v1275
    %v1277 = vmul.f32 %v1270, 1.442695
    %v1278 = vpow.pop %v1277
    %v1279 = vadd.f32 %v1272, 1.0
    %v1280 = vadd.f32 %v1274, 1.0
    %v1281 = vadd.f32 %v1276, 1.0
    %v1282 = vadd.f32 %v1278, 1.0
    %v1283 = vrcp.pop %v1279
    %v1284 = vmul.f32 1.0, %v1283
    %v1285 = vrcp.pop %v1280
    %v1286 = vmul.f32 1.0, %v1285
    %v1287 = vrcp.pop %v1281
    %v1288 = vmul.f32 1.0, %v1287
    %v1289 = vrcp.pop %v1282
    %v1290 = vmul.f32 1.0, %v1289
    %vm1291 = vcmask 15360
    %v1293 = vsel %vm1291, %v1284, 0
    %v1296 = vsel %vm1291, %v1286, 0
    %v1299 = vsel %vm1291, %v1288, 0
    %v1302 = vsel %vm1291, %v1290, 0
    %vm1304 = vcmask 1041408
    %v1306 = vsel %vm1304, %v180, 0
    %1308 = vmatprep.subr.mxu0 0.0
    %1309 = vmatpush1.msra.mxu0 %v1306
    %1310 = vmatprep.subr.mxu0 0.0
    %1311 = vmatpush1.msra.mxu0 0.0
    %1312 = vmatprep.subr.mxu0 0.0
    %1313 = vmatpush1.msra.mxu0 0.0
    %1314 = vmatprep.subr.mxu0 0.0
    %1315 = vmatpush1.msra.mxu0 0.0
    %1316 = vmatprep.subr.mxu0 0.0
    %1317 = vmatpush1.msra.mxu0 0.0
    %1318 = vmatprep.subr.mxu0 0.0
    %1319 = vmatpush1.msra.mxu0 0.0
    %1320 = vmatprep.subr.mxu0 0.0
    %1321 = vmatpush1.msra.mxu0 0.0
    %1322 = vmatprep.subr.mxu0 0.0
    %1323 = vmatpush1.msra.mxu0 0.0
    %1324 = vmatprep.subr.mxu0 0.0
    %1325 = vmatpush1.msra.mxu0 0.0
    %1326 = vmatprep.subr.mxu0 0.0
    %1327 = vmatpush1.msra.mxu0 0.0
    %1328 = vmatprep.subr.mxu0 0.0
    %1329 = vmatpush1.msra.mxu0 0.0
    %1330 = vmatprep.subr.mxu0 0.0
    %1331 = vmatpush1.msra.mxu0 0.0
    %1332 = vmatprep.subr.mxu0 0.0
    %1333 = vmatpush1.msra.mxu0 0.0
    %1334 = vmatprep.subr.mxu0 0.0
    %1335 = vmatpush1.msra.mxu0 0.0
    %1336 = vmatprep.subr.mxu0 0.0
    %1337 = vmatpush1.msra.mxu0 0.0
    %1338 = vmatprep.subr.mxu0 0.0
    %1339 = vmatpush1.msra.mxu0 0.0
    %1340 = vmatprep.subr.mxu0 0.0
    %1341 = vmatpush1.msra.mxu0 0.0
    %1342 = vmatprep.subr.mxu0 0.0
    %1343 = vmatpush1.msra.mxu0 0.0
    %1344 = vmatprep.subr.mxu0 0.0
    %1345 = vmatpush1.msra.mxu0 0.0
    %1346 = vmatprep.subr.mxu0 0.0
    %1347 = vmatpush1.msra.mxu0 0.0
    %1348 = vmatprep.subr.mxu0 0.0
    %1349 = vmatpush1.msra.mxu0 0.0
    %1350 = vmatprep.subr.mxu0 0.0
    %1351 = vmatpush1.msra.mxu0 0.0
    %1352 = vmatprep.subr.mxu0 0.0
    %1353 = vmatpush1.msra.mxu0 0.0
    %1354 = vmatprep.subr.mxu0 0.0
    %1355 = vmatpush1.msra.mxu0 0.0
    %1356 = vmatprep.subr.mxu0 0.0
    %1357 = vmatpush1.msra.mxu0 0.0
    %1358 = vmatprep.subr.mxu0 0.0
    %1359 = vmatpush1.msra.mxu0 0.0
    %1360 = vmatprep.subr.mxu0 0.0
    %1361 = vmatpush1.msra.mxu0 0.0
    %1362 = vmatprep.subr.mxu0 0.0
    %1363 = vmatpush1.msra.mxu0 0.0
    %1364 = vmatprep.subr.mxu0 0.0
    %1365 = vmatpush1.msra.mxu0 0.0
    %1366 = vmatprep.subr.mxu0 0.0
    %1367 = vmatpush1.msra.mxu0 0.0
    %1368 = vmatprep.subr.mxu0 0.0
    %1369 = vmatpush1.msra.mxu0 0.0
    %1370 = vmatprep.subr.mxu0 0.0
    %1371 = vmatpush1.msra.mxu0 0.0
    %1372 = vmatprep.mubr.f32.mxu0 0.0
    %1373 = vmatmul.mubr.f32.gmra.mrb[0].mxu0 %v1293
    %v1374 = vpop.f32.mrb[0].mxu0
    %v1375 = vadd.f32 0.0, %v1374
    %v1376 = vpop.f32.mrb[0].mxu0
    %1377 = vmatprep.mubr.f32.mxu0 0.0
    %1378 = vmatmul.mubr.f32.gmra.mrb[0].mxu0 %v1296
    %v1379 = vpop.f32.mrb[0].mxu0
    %v1380 = vadd.f32 0.0, %v1379
    %v1381 = vpop.f32.mrb[0].mxu0
    %1382 = vmatprep.mubr.f32.mxu0 0.0
    %1383 = vmatmul.mubr.f32.gmra.mrb[0].mxu0 %v1299
    %v1384 = vpop.f32.mrb[0].mxu0
    %v1385 = vadd.f32 0.0, %v1384
    %v1386 = vpop.f32.mrb[0].mxu0
    %1387 = vmatprep.mubr.f32.mxu0 0.0
    %1388 = vmatmul.mubr.f32.gmra.mrb[0].mxu0 %v1302
    %v1389 = vpop.f32.mrb[0].mxu0
    %v1390 = vadd.f32 0.0, %v1389
    %v1391 = vpop.f32.mrb[0].mxu0
    %1392 = vdwg.mxu0
    %v1393 = vmul.f32 %v945, %v1375
    %v1394 = vmul.f32 %v946, %v1380
    %v1395 = vmul.f32 %v947, %v1385
    %v1396 = vmul.f32 %v948, %v1390
    %v1397 = vadd.f32 %v1393, %v945
    %v1398 = vadd.f32 %v1394, %v946
    %v1399 = vadd.f32 %v1395, %v947
    %v1400 = vadd.f32 %v1396, %v948
    %1402 = vset.pattern.permute.xlu0 0
    %1403 = vperm.xlu0 %1402, %v211
    %v1404 = vpop.permute.xlu0 %1403
    %1407 = vset.pattern.permute.xlu0 0
    %1408 = vperm.xlu0 %1407, %v212
    %v1409 = vpop.permute.xlu0 %1408
    %1412 = vset.pattern.permute.xlu0 0
    %1413 = vperm.xlu0 %1412, %v213
    %v1414 = vpop.permute.xlu0 %1413
    %1417 = vset.pattern.permute.xlu0 0
    %1418 = vperm.xlu0 %1417, %v214
    %v1419 = vpop.permute.xlu0 %1418
    %v1421 = vmul.f32 %v1397, %v1404
    %v1422 = vmul.f32 %v1398, %v1409
    %v1423 = vmul.f32 %v1399, %v1414
    %v1424 = vmul.f32 %v1400, %v1419
    %1426 = vset.pattern.permute.xlu0 0
    %1427 = vperm.xlu0 %1426, %v215
    %v1428 = vpop.permute.xlu0 %1427
    %1431 = vset.pattern.permute.xlu0 0
    %1432 = vperm.xlu0 %1431, %v216
    %v1433 = vpop.permute.xlu0 %1432
    %1436 = vset.pattern.permute.xlu0 0
    %1437 = vperm.xlu0 %1436, %v217
    %v1438 = vpop.permute.xlu0 %1437
    %1441 = vset.pattern.permute.xlu0 0
    %1442 = vperm.xlu0 %1441, %v218
    %v1443 = vpop.permute.xlu0 %1442
    %v1445 = vadd.f32 %v1421, %v1428
    %v1446 = vadd.f32 %v1422, %v1433
    %v1447 = vadd.f32 %v1423, %v1438
    %v1448 = vadd.f32 %v1424, %v1443
    %v1449 = vadd.f32 %v1445, %v923
    %v1450 = vadd.f32 %v1446, %v928
    %v1451 = vadd.f32 %v1447, %v933
    %v1452 = vadd.f32 %v1448, %v938
    %v1453 = vmax.f32 %v1449, 0.0
    %v1454 = vmax.f32 %v1450, 0.0
    %v1455 = vmax.f32 %v1451, 0.0
    %v1456 = vmax.f32 %v1452, 0.0
    %1457 = vst.msk [vmem:[%s63] sm:$0xff] %vm621, %v1453
    %1458 = vst.msk [vmem:[%s63 + $0x8] sm:$0xff] %vm621, %v1454
    %1459 = vst.msk [vmem:[%s63 + $0x10] sm:$0xff] %vm621, %v1455
    %1460 = vst.msk [vmem:[%s63 + $0x18] sm:$0xff] %vm621, %v1456
    %s1461 = sld [smem:[#allocation2 + $0x1]]
    %v1462 = vld [vmem:[%s45] sm:$0xff]
    %v1463 = vld [vmem:[%s45 + $0x8] sm:$0xff]
    %v1464 = vld [vmem:[%s45 + $0x10] sm:$0xff]
    %v1465 = vld [vmem:[%s45 + $0x18] sm:$0xff]
    %v1466 = vld [vmem:[%s45 + $0x20] sm:$0xff]
    %v1467 = vld [vmem:[%s45 + $0x28] sm:$0xff]
    %v1468 = vld [vmem:[%s45 + $0x30] sm:$0xff]
    %v1469 = vld [vmem:[%s45 + $0x38] sm:$0xff]
    %v1470 = vld [vmem:[%s45 + $0x40] sm:$0xff]
    %v1471 = vld [vmem:[%s45 + $0x48] sm:$0xff]
    %v1472 = vld [vmem:[%s45 + $0x50] sm:$0xff]
    %v1473 = vld [vmem:[%s45 + $0x58] sm:$0xff]
    %v1474 = vld [vmem:[%s45 + $0x60] sm:$0xff]
    %v1475 = vld [vmem:[%s45 + $0x68] sm:$0xff]
    %v1476 = vld [vmem:[%s45 + $0x70] sm:$0xff]
    %v1477 = vld [vmem:[%s45 + $0x78] sm:$0xff]
    %v1478 = vld [vmem:[%s45 + $0x80] sm:$0xff]
    %v1479 = vld [vmem:[%s45 + $0x88] sm:$0xff]
    %v1480 = vld [vmem:[%s45 + $0x90] sm:$0xff]
    %v1481 = vld [vmem:[%s45 + $0x98] sm:$0xff]
    %v1482 = vld [vmem:[%s45 + $0xa0] sm:$0xff]
    %v1483 = vld [vmem:[%s45 + $0xa8] sm:$0xff]
    %v1484 = vld [vmem:[%s45 + $0xb0] sm:$0xff]
    %v1485 = vld [vmem:[%s45 + $0xb8] sm:$0xff]
    %v1486 = vld [vmem:[%s45 + $0xc0] sm:$0xff]
    %v1487 = vld [vmem:[%s45 + $0xc8] sm:$0xff]
    %v1488 = vld [vmem:[%s45 + $0xd0] sm:$0xff]
    %v1489 = vld [vmem:[%s45 + $0xd8] sm:$0xff]
    %v1490 = vld [vmem:[%s45 + $0xe0] sm:$0xff]
    %v1491 = vld [vmem:[%s45 + $0xe8] sm:$0xff]
    %v1492 = vld [vmem:[%s45 + $0xf0] sm:$0xff]
    %v1493 = vld [vmem:[%s45 + $0xf8] sm:$0xff]
    %v1494 = vld [vmem:[%s45 + $0x100] sm:$0xff]
    %v1495 = vld [vmem:[%s45 + $0x108] sm:$0xff]
    %v1496 = vld [vmem:[%s45 + $0x110] sm:$0xff]
    %v1497 = vld [vmem:[%s45 + $0x118] sm:$0xff]
    %v1498 = vld [vmem:[%s45 + $0x120] sm:$0xff]
    %v1499 = vld [vmem:[%s45 + $0x128] sm:$0xff]
    %v1500 = vld [vmem:[%s45 + $0x130] sm:$0xff]
    %v1501 = vld [vmem:[%s45 + $0x138] sm:$0xff]
    %v1502 = vld [vmem:[%s45 + $0x140] sm:$0xff]
    %v1503 = vld [vmem:[%s45 + $0x148] sm:$0xff]
    %v1504 = vld [vmem:[%s45 + $0x150] sm:$0xff]
    %v1505 = vld [vmem:[%s45 + $0x158] sm:$0xff]
    %v1506 = vld [vmem:[%s33] sm:$0xff]
    %v1507 = vld [vmem:[%s33 + $0x8] sm:$0xff]
    %v1508 = vld [vmem:[%s33 + $0x10] sm:$0xff]
    %v1509 = vld [vmem:[%s33 + $0x18] sm:$0xff]
    %v1510 = vld [vmem:[%s35] sm:$0xff]
    %v1511 = vld [vmem:[%s35 + $0x8] sm:$0xff]
    %v1512 = vld [vmem:[%s35 + $0x10] sm:$0xff]
    %v1513 = vld [vmem:[%s35 + $0x18] sm:$0xff]
    %1515 = vset.pattern.permute.xlu0 0
    %1516 = vperm.xlu0 %1515, %v1510
    %v1517 = vpop.permute.xlu0 %1516
    %1520 = vset.pattern.permute.xlu0 0
    %1521 = vperm.xlu0 %1520, %v1511
    %v1522 = vpop.permute.xlu0 %1521
    %1525 = vset.pattern.permute.xlu0 0
    %1526 = vperm.xlu0 %1525, %v1512
    %v1527 = vpop.permute.xlu0 %1526
    %1530 = vset.pattern.permute.xlu0 0
    %1531 = vperm.xlu0 %1530, %v1513
    %v1532 = vpop.permute.xlu0 %1531
    %v1535 = vsel %vm1061, %v1506, 0
    %v1538 = vsel %vm1061, %v1507, 0
    %v1541 = vsel %vm1061, %v1508, 0
    %v1544 = vsel %vm1061, %v1509, 0
    %1546 = vmatprep.subr.mxu0 0.0
    %1547 = vmatpush1.msra.mxu0 %v1453
    %1548 = vmatprep.subr.mxu0 0.0
    %1549 = vmatpush1.msra.mxu0 %v1454
    %1550 = vmatprep.subr.mxu0 0.0
    %1551 = vmatpush1.msra.mxu0 %v1455
    %1552 = vmatprep.subr.mxu0 0.0
    %1553 = vmatpush1.msra.mxu0 %v1456
    %1554 = vmatprep.subr.mxu0 0.0
    %1555 = vmatpush1.msra.mxu0 0.0
    %1556 = vmatprep.subr.mxu0 0.0
    %1557 = vmatpush1.msra.mxu0 0.0
    %1558 = vmatprep.subr.mxu0 0.0
    %1559 = vmatpush1.msra.mxu0 0.0
    %1560 = vmatprep.subr.mxu0 0.0
    %1561 = vmatpush1.msra.mxu0 0.0
    %1562 = vmatprep.subr.mxu0 0.0
    %1563 = vmatpush1.msra.mxu0 0.0
    %1564 = vmatprep.subr.mxu0 0.0
    %1565 = vmatpush1.msra.mxu0 0.0
    %1566 = vmatprep.subr.mxu0 0.0
    %1567 = vmatpush1.msra.mxu0 0.0
    %1568 = vmatprep.subr.mxu0 0.0
    %1569 = vmatpush1.msra.mxu0 0.0
    %1570 = vmatprep.subr.mxu0 0.0
    %1571 = vmatpush1.msra.mxu0 0.0
    %1572 = vmatprep.subr.mxu0 0.0
    %1573 = vmatpush1.msra.mxu0 0.0
    %1574 = vmatprep.subr.mxu0 0.0
    %1575 = vmatpush1.msra.mxu0 0.0
    %1576 = vmatprep.subr.mxu0 0.0
    %1577 = vmatpush1.msra.mxu0 0.0
    %1578 = vmatprep.subr.mxu0 0.0
    %1579 = vmatpush1.msra.mxu0 0.0
    %1580 = vmatprep.subr.mxu0 0.0
    %1581 = vmatpush1.msra.mxu0 0.0
    %1582 = vmatprep.subr.mxu0 0.0
    %1583 = vmatpush1.msra.mxu0 0.0
    %1584 = vmatprep.subr.mxu0 0.0
    %1585 = vmatpush1.msra.mxu0 0.0
    %1586 = vmatprep.subr.mxu0 0.0
    %1587 = vmatpush1.msra.mxu0 0.0
    %1588 = vmatprep.subr.mxu0 0.0
    %1589 = vmatpush1.msra.mxu0 0.0
    %1590 = vmatprep.subr.mxu0 0.0
    %1591 = vmatpush1.msra.mxu0 0.0
    %1592 = vmatprep.subr.mxu0 0.0
    %1593 = vmatpush1.msra.mxu0 0.0
    %1594 = vmatprep.subr.mxu0 0.0
    %1595 = vmatpush1.msra.mxu0 0.0
    %1596 = vmatprep.subr.mxu0 0.0
    %1597 = vmatpush1.msra.mxu0 0.0
    %1598 = vmatprep.subr.mxu0 0.0
    %1599 = vmatpush1.msra.mxu0 0.0
    %1600 = vmatprep.subr.mxu0 0.0
    %1601 = vmatpush1.msra.mxu0 0.0
    %1602 = vmatprep.subr.mxu0 0.0
    %1603 = vmatpush1.msra.mxu0 0.0
    %1604 = vmatprep.subr.mxu0 0.0
    %1605 = vmatpush1.msra.mxu0 0.0
    %1606 = vmatprep.subr.mxu0 0.0
    %1607 = vmatpush1.msra.mxu0 0.0
    %1608 = vmatprep.subr.mxu0 0.0
    %1609 = vmatpush1.msra.mxu0 0.0
    %1610 = vmatprep.mubr.f32.mxu0 0.0
    %1611 = vmatmul.mubr.f32.gmra.mrb[0].mxu0 %v1535
    %v1612 = vpop.f32.mrb[0].mxu0
    %v1613 = vadd.f32 %v1517, %v1612
    %v1614 = vpop.f32.mrb[0].mxu0
    %1615 = vmatprep.mubr.f32.mxu0 0.0
    %1616 = vmatmul.mubr.f32.gmra.mrb[0].mxu0 %v1538
    %v1617 = vpop.f32.mrb[0].mxu0
    %v1618 = vadd.f32 %v1522, %v1617
    %v1619 = vpop.f32.mrb[0].mxu0
    %1620 = vmatprep.mubr.f32.mxu0 0.0
    %1621 = vmatmul.mubr.f32.gmra.mrb[0].mxu0 %v1541
    %v1622 = vpop.f32.mrb[0].mxu0
    %v1623 = vadd.f32 %v1527, %v1622
    %v1624 = vpop.f32.mrb[0].mxu0
    %1625 = vmatprep.mubr.f32.mxu0 0.0
    %1626 = vmatmul.mubr.f32.gmra.mrb[0].mxu0 %v1544
    %v1627 = vpop.f32.mrb[0].mxu0
    %v1628 = vadd.f32 %v1532, %v1627
    %v1629 = vpop.f32.mrb[0].mxu0
    %1630 = vdwg.mxu0
    %1631 = vxpose.xlu0.b32.start [1/16] %v1613, 128
    %1632 = vxpose.xlu0.b32.cont [2/16] %v1618, 128
    %1633 = vxpose.xlu0.b32.cont [3/16] 0.0, 128
    %1634 = vxpose.xlu0.b32.cont [4/16] 0.0, 128
    %1635 = vxpose.xlu0.b32.cont [5/16] 0.0, 128
    %1636 = vxpose.xlu0.b32.cont [6/16] 0.0, 128
    %1637 = vxpose.xlu0.b32.cont [7/16] 0.0, 128
    %1638 = vxpose.xlu0.b32.cont [8/16] 0.0, 128
    %1639 = vxpose.xlu0.b32.cont [9/16] 0.0, 128
    %1640 = vxpose.xlu0.b32.cont [10/16] 0.0, 128
    %1641 = vxpose.xlu0.b32.cont [11/16] 0.0, 128
    %1642 = vxpose.xlu0.b32.cont [12/16] 0.0, 128
    %1643 = vxpose.xlu0.b32.cont [13/16] 0.0, 128
    %1644 = vxpose.xlu0.b32.cont [14/16] 0.0, 128
    %1645 = vxpose.xlu0.b32.cont [15/16] 0.0, 128
    %1646 = vxpose.xlu0.b32.end [16/16] 0.0, 128
    %v1647 = vpop.trf.xlu0
    %v1648 = vpop.trf.xlu0
    %v1649 = vpop.trf.xlu0
    %v1650 = vpop.trf.xlu0
    %v1651 = vpop.trf.xlu0
    %v1652 = vpop.trf.xlu0
    %v1653 = vpop.trf.xlu0
    %v1654 = vpop.trf.xlu0
    %v1655 = vpop.trf.xlu0
    %v1656 = vpop.trf.xlu0
    %v1657 = vpop.trf.xlu0
    %v1658 = vpop.trf.xlu0
    %v1659 = vpop.trf.xlu0
    %v1660 = vpop.trf.xlu0
    %v1661 = vpop.trf.xlu0
    %v1662 = vpop.trf.xlu0
    %v1664 = vsel %vm1169, %v1647, 0
    %v1667 = vsel %vm1169, %v1648, 0
    %v1670 = vsel %vm1169, %v1649, 0
    %v1673 = vsel %vm1169, %v1650, 0
    %v1676 = vsel %vm1169, %v1651, 0
    %v1679 = vsel %vm1169, %v1652, 0
    %v1682 = vsel %vm1169, %v1653, 0
    %v1685 = vsel %vm1169, %v1654, 0
    %v1688 = vsel %vm1169, %v1655, 0
    %v1691 = vsel %vm1169, %v1656, 0
    %v1694 = vsel %vm1169, %v1657, 0
    %v1697 = vsel %vm1169, %v1658, 0
    %v1700 = vsel %vm1169, %v1659, 0
    %v1703 = vsel %vm1169, %v1660, 0
    %v1706 = vsel %vm1169, %v1661, 0
    %v1709 = vsel %vm1169, %v1662, 0
    %1711 = vmatprep.subr.mxu0 0.0
    %1712 = vmatpush1.msra.mxu0 %v1623
    %1713 = vmatprep.subr.mxu0 0.0
    %1714 = vmatpush1.msra.mxu0 %v1628
    %1715 = vmatprep.subr.mxu0 0.0
    %1716 = vmatpush1.msra.mxu0 0.0
    %1717 = vmatprep.subr.mxu0 0.0
    %1718 = vmatpush1.msra.mxu0 0.0
    %1719 = vmatprep.subr.mxu0 0.0
    %1720 = vmatpush1.msra.mxu0 0.0
    %1721 = vmatprep.subr.mxu0 0.0
    %1722 = vmatpush1.msra.mxu0 0.0
    %1723 = vmatprep.subr.mxu0 0.0
    %1724 = vmatpush1.msra.mxu0 0.0
    %1725 = vmatprep.subr.mxu0 0.0
    %1726 = vmatpush1.msra.mxu0 0.0
    %1727 = vmatprep.subr.mxu0 0.0
    %1728 = vmatpush1.msra.mxu0 0.0
    %1729 = vmatprep.subr.mxu0 0.0
    %1730 = vmatpush1.msra.mxu0 0.0
    %1731 = vmatprep.subr.mxu0 0.0
    %1732 = vmatpush1.msra.mxu0 0.0
    %1733 = vmatprep.subr.mxu0 0.0
    %1734 = vmatpush1.msra.mxu0 0.0
    %1735 = vmatprep.subr.mxu0 0.0
    %1736 = vmatpush1.msra.mxu0 0.0
    %1737 = vmatprep.subr.mxu0 0.0
    %1738 = vmatpush1.msra.mxu0 0.0
    %1739 = vmatprep.subr.mxu0 0.0
    %1740 = vmatpush1.msra.mxu0 0.0
    %1741 = vmatprep.subr.mxu0 0.0
    %1742 = vmatpush1.msra.mxu0 0.0
    %1743 = vmatprep.subr.mxu0 0.0
    %1744 = vmatpush1.msra.mxu0 0.0
    %1745 = vmatprep.subr.mxu0 0.0
    %1746 = vmatpush1.msra.mxu0 0.0
    %1747 = vmatprep.subr.mxu0 0.0
    %1748 = vmatpush1.msra.mxu0 0.0
    %1749 = vmatprep.subr.mxu0 0.0
    %1750 = vmatpush1.msra.mxu0 0.0
    %1751 = vmatprep.subr.mxu0 0.0
    %1752 = vmatpush1.msra.mxu0 0.0
    %1753 = vmatprep.subr.mxu0 0.0
    %1754 = vmatpush1.msra.mxu0 0.0
    %1755 = vmatprep.subr.mxu0 0.0
    %1756 = vmatpush1.msra.mxu0 0.0
    %1757 = vmatprep.subr.mxu0 0.0
    %1758 = vmatpush1.msra.mxu0 0.0
    %1759 = vmatprep.subr.mxu0 0.0
    %1760 = vmatpush1.msra.mxu0 0.0
    %1761 = vmatprep.subr.mxu0 0.0
    %1762 = vmatpush1.msra.mxu0 0.0
    %1763 = vmatprep.subr.mxu0 0.0
    %1764 = vmatpush1.msra.mxu0 0.0
    %1765 = vmatprep.subr.mxu0 0.0
    %1766 = vmatpush1.msra.mxu0 0.0
    %1767 = vmatprep.subr.mxu0 0.0
    %1768 = vmatpush1.msra.mxu0 0.0
    %1769 = vmatprep.subr.mxu0 0.0
    %1770 = vmatpush1.msra.mxu0 0.0
    %1771 = vmatprep.subr.mxu0 0.0
    %1772 = vmatpush1.msra.mxu0 0.0
    %1773 = vmatprep.subr.mxu0 0.0
    %1774 = vmatpush1.msra.mxu0 0.0
    %1775 = vmatprep.mubr.f32.mxu0 0.0
    %1776 = vmatmul.mubr.f32.gmra.mrb[0].mxu0 %v1664
    %v1777 = vpop.f32.mrb[0].mxu0
    %v1778 = vadd.f32 0.0, %v1777
    %v1779 = vpop.f32.mrb[0].mxu0
    %1780 = vmatprep.mubr.f32.mxu0 0.0
    %1781 = vmatmul.mubr.f32.gmra.mrb[0].mxu0 %v1667
    %v1782 = vpop.f32.mrb[0].mxu0
    %v1783 = vadd.f32 0.0, %v1782
    %v1784 = vpop.f32.mrb[0].mxu0
    %1785 = vmatprep.mubr.f32.mxu0 0.0
    %1786 = vmatmul.mubr.f32.gmra.mrb[0].mxu0 %v1670
    %v1787 = vpop.f32.mrb[0].mxu0
    %v1788 = vadd.f32 0.0, %v1787
    %v1789 = vpop.f32.mrb[0].mxu0
    %1790 = vmatprep.mubr.f32.mxu0 0.0
    %1791 = vmatmul.mubr.f32.gmra.mrb[0].mxu0 %v1673
    %v1792 = vpop.f32.mrb[0].mxu0
    %v1793 = vadd.f32 0.0, %v1792
    %v1794 = vpop.f32.mrb[0].mxu0
    %1795 = vmatprep.mubr.f32.mxu0 0.0
    %1796 = vmatmul.mubr.f32.gmra.mrb[0].mxu0 %v1676
    %v1797 = vpop.f32.mrb[0].mxu0
    %v1798 = vadd.f32 0.0, %v1797
    %v1799 = vpop.f32.mrb[0].mxu0
    %1800 = vmatprep.mubr.f32.mxu0 0.0
    %1801 = vmatmul.mubr.f32.gmra.mrb[0].mxu0 %v1679
    %v1802 = vpop.f32.mrb[0].mxu0
    %v1803 = vadd.f32 0.0, %v1802
    %v1804 = vpop.f32.mrb[0].mxu0
    %1805 = vmatprep.mubr.f32.mxu0 0.0
    %1806 = vmatmul.mubr.f32.gmra.mrb[0].mxu0 %v1682
    %v1807 = vpop.f32.mrb[0].mxu0
    %v1808 = vadd.f32 0.0, %v1807
    %v1809 = vpop.f32.mrb[0].mxu0
    %1810 = vmatprep.mubr.f32.mxu0 0.0
    %1811 = vmatmul.mubr.f32.gmra.mrb[0].mxu0 %v1685
    %v1812 = vpop.f32.mrb[0].mxu0
    %v1813 = vadd.f32 0.0, %v1812
    %v1814 = vpop.f32.mrb[0].mxu0
    %1815 = vmatprep.mubr.f32.mxu0 0.0
    %1816 = vmatmul.mubr.f32.gmra.mrb[0].mxu0 %v1688
    %v1817 = vpop.f32.mrb[0].mxu0
    %v1818 = vadd.f32 0.0, %v1817
    %v1819 = vpop.f32.mrb[0].mxu0
    %1820 = vmatprep.mubr.f32.mxu0 0.0
    %1821 = vmatmul.mubr.f32.gmra.mrb[0].mxu0 %v1691
    %v1822 = vpop.f32.mrb[0].mxu0
    %v1823 = vadd.f32 0.0, %v1822
    %v1824 = vpop.f32.mrb[0].mxu0
    %1825 = vmatprep.mubr.f32.mxu0 0.0
    %1826 = vmatmul.mubr.f32.gmra.mrb[0].mxu0 %v1694
    %v1827 = vpop.f32.mrb[0].mxu0
    %v1828 = vadd.f32 0.0, %v1827
    %v1829 = vpop.f32.mrb[0].mxu0
    %1830 = vmatprep.mubr.f32.mxu0 0.0
    %1831 = vmatmul.mubr.f32.gmra.mrb[0].mxu0 %v1697
    %v1832 = vpop.f32.mrb[0].mxu0
    %v1833 = vadd.f32 0.0, %v1832
    %v1834 = vpop.f32.mrb[0].mxu0
    %1835 = vmatprep.mubr.f32.mxu0 0.0
    %1836 = vmatmul.mubr.f32.gmra.mrb[0].mxu0 %v1700
    %v1837 = vpop.f32.mrb[0].mxu0
    %v1838 = vadd.f32 0.0, %v1837
    %v1839 = vpop.f32.mrb[0].mxu0
    %1840 = vmatprep.mubr.f32.mxu0 0.0
    %1841 = vmatmul.mubr.f32.gmra.mrb[0].mxu0 %v1703
    %v1842 = vpop.f32.mrb[0].mxu0
    %v1843 = vadd.f32 0.0, %v1842
    %v1844 = vpop.f32.mrb[0].mxu0
    %1845 = vmatprep.mubr.f32.mxu0 0.0
    %1846 = vmatmul.mubr.f32.gmra.mrb[0].mxu0 %v1706
    %v1847 = vpop.f32.mrb[0].mxu0
    %v1848 = vadd.f32 0.0, %v1847
    %v1849 = vpop.f32.mrb[0].mxu0
    %1850 = vmatprep.mubr.f32.mxu0 0.0
    %1851 = vmatmul.mubr.f32.gmra.mrb[0].mxu0 %v1709
    %v1852 = vpop.f32.mrb[0].mxu0
    %v1853 = vadd.f32 0.0, %v1852
    %v1854 = vpop.f32.mrb[0].mxu0
    %1855 = vdwg.mxu0
    %v1856 = vtanh.pop %v1778
    %v1857 = vtanh.pop %v1783
    %v1858 = vtanh.pop %v1788
    %v1859 = vtanh.pop %v1793
    %v1860 = vtanh.pop %v1798
    %v1861 = vtanh.pop %v1803
    %v1862 = vtanh.pop %v1808
    %v1863 = vtanh.pop %v1813
    %v1864 = vtanh.pop %v1818
    %v1865 = vtanh.pop %v1823
    %v1866 = vtanh.pop %v1828
    %v1867 = vtanh.pop %v1833
    %v1868 = vtanh.pop %v1838
    %v1869 = vtanh.pop %v1843
    %v1870 = vtanh.pop %v1848
    %v1871 = vtanh.pop %v1853
    %v1872 = vld [vmem:[%s31] sm:$0xff]
    %v1873 = vld [vmem:[%s31 + $0x8] sm:$0xff]
    %v1874 = vld [vmem:[%s31 + $0x10] sm:$0xff]
    %v1875 = vld [vmem:[%s31 + $0x18] sm:$0xff]
    %v1876 = vld [vmem:[%s31 + $0x20] sm:$0xff]
    %v1877 = vld [vmem:[%s31 + $0x28] sm:$0xff]
    %v1878 = vld [vmem:[%s31 + $0x30] sm:$0xff]
    %v1879 = vld [vmem:[%s31 + $0x38] sm:$0xff]
    %v1880 = vld [vmem:[%s31 + $0x40] sm:$0xff]
    %v1881 = vld [vmem:[%s31 + $0x48] sm:$0xff]
    %v1882 = vld [vmem:[%s31 + $0x50] sm:$0xff]
    %v1883 = vld [vmem:[%s31 + $0x58] sm:$0xff]
    %v1884 = vld [vmem:[%s31 + $0x60] sm:$0xff]
    %v1885 = vld [vmem:[%s31 + $0x68] sm:$0xff]
    %v1886 = vld [vmem:[%s31 + $0x70] sm:$0xff]
    %v1887 = vld [vmem:[%s31 + $0x78] sm:$0xf]
    %v1888 = vstv %s1461
    %v1889 = vmul.f32 %v1856, %v1888
    %v1890 = vmul.f32 %v1857, %v1888
    %v1891 = vmul.f32 %v1858, %v1888
    %v1892 = vmul.f32 %v1859, %v1888
    %v1893 = vmul.f32 %v1860, %v1888
    %v1894 = vmul.f32 %v1861, %v1888
    %v1895 = vmul.f32 %v1862, %v1888
    %v1896 = vmul.f32 %v1863, %v1888
    %v1897 = vmul.f32 %v1864, %v1888
    %v1898 = vmul.f32 %v1865, %v1888
    %v1899 = vmul.f32 %v1866, %v1888
    %v1900 = vmul.f32 %v1867, %v1888
    %v1901 = vmul.f32 %v1868, %v1888
    %v1902 = vmul.f32 %v1869, %v1888
    %v1903 = vmul.f32 %v1870, %v1888
    %v1904 = vmul.f32 %v1871, %v1888
    %v1905 = vmul.f32 %v1889, %v148
    %v1906 = vmul.f32 %v1890, %v149
    %v1907 = vmul.f32 %v1891, %v150
    %v1908 = vmul.f32 %v1892, %v151
    %v1909 = vmul.f32 %v1893, %v152
    %v1910 = vmul.f32 %v1894, %v153
    %v1911 = vmul.f32 %v1895, %v154
    %v1912 = vmul.f32 %v1896, %v155
    %v1913 = vmul.f32 %v1897, %v156
    %v1914 = vmul.f32 %v1898, %v157
    %v1915 = vmul.f32 %v1899, %v158
    %v1916 = vmul.f32 %v1900, %v159
    %v1917 = vmul.f32 %v1901, %v160
    %v1918 = vmul.f32 %v1902, %v161
    %v1919 = vmul.f32 %v1903, %v162
    %v1920 = vmul.f32 %v1904, %v163
    %v1921 = vadd.f32 %v1872, %v1905
    %v1922 = vadd.f32 %v1873, %v1906
    %v1923 = vadd.f32 %v1874, %v1907
    %v1924 = vadd.f32 %v1875, %v1908
    %v1925 = vadd.f32 %v1876, %v1909
    %v1926 = vadd.f32 %v1877, %v1910
    %v1927 = vadd.f32 %v1878, %v1911
    %v1928 = vadd.f32 %v1879, %v1912
    %v1929 = vadd.f32 %v1880, %v1913
    %v1930 = vadd.f32 %v1881, %v1914
    %v1931 = vadd.f32 %v1882, %v1915
    %v1932 = vadd.f32 %v1883, %v1916
    %v1933 = vadd.f32 %v1884, %v1917
    %v1934 = vadd.f32 %v1885, %v1918
    %v1935 = vadd.f32 %v1886, %v1919
    %v1936 = vadd.f32 %v1887, %v1920
    %v1938 = vsel %vm621, %v1453, 0
    %v1941 = vsel %vm621, %v1454, 0
    %v1944 = vsel %vm621, %v1455, 0
    %v1947 = vsel %vm621, %v1456, 0
    %v1950 = vsel %vm625, %v1936, 0
    %1952 = vmatprep.subr.mxu0 0.0
    %1953 = vmatpush1.msra.mxu0 %v1921
    %1954 = vmatprep.subr.mxu0 0.0
    %1955 = vmatpush1.msra.mxu0 %v1922
    %1956 = vmatprep.subr.mxu0 0.0
    %1957 = vmatpush1.msra.mxu0 %v1923
    %1958 = vmatprep.subr.mxu0 0.0
    %1959 = vmatpush1.msra.mxu0 %v1924
    %1960 = vmatprep.subr.mxu0 0.0
    %1961 = vmatpush1.msra.mxu0 %v1925
    %1962 = vmatprep.subr.mxu0 0.0
    %1963 = vmatpush1.msra.mxu0 %v1926
    %1964 = vmatprep.subr.mxu0 0.0
    %1965 = vmatpush1.msra.mxu0 %v1927
    %1966 = vmatprep.subr.mxu0 0.0
    %1967 = vmatpush1.msra.mxu0 %v1928
    %1968 = vmatprep.subr.mxu0 0.0
    %1969 = vmatpush1.msra.mxu0 %v1929
    %1970 = vmatprep.subr.mxu0 0.0
    %1971 = vmatpush1.msra.mxu0 %v1930
    %1972 = vmatprep.subr.mxu0 0.0
    %1973 = vmatpush1.msra.mxu0 %v1931
    %1974 = vmatprep.subr.mxu0 0.0
    %1975 = vmatpush1.msra.mxu0 %v1932
    %1976 = vmatprep.subr.mxu0 0.0
    %1977 = vmatpush1.msra.mxu0 %v1933
    %1978 = vmatprep.subr.mxu0 0.0
    %1979 = vmatpush1.msra.mxu0 %v1934
    %1980 = vmatprep.subr.mxu0 0.0
    %1981 = vmatpush1.msra.mxu0 %v1935
    %1982 = vmatprep.subr.mxu0 0.0
    %1983 = vmatpush1.msra.mxu0 %v1950
    %1984 = vmatprep.subr.mxu0 0.0
    %1985 = vmatpush1.msra.mxu0 0.0
    %1986 = vmatprep.subr.mxu0 0.0
    %1987 = vmatpush1.msra.mxu0 0.0
    %1988 = vmatprep.subr.mxu0 0.0
    %1989 = vmatpush1.msra.mxu0 0.0
    %1990 = vmatprep.subr.mxu0 0.0
    %1991 = vmatpush1.msra.mxu0 0.0
    %1992 = vmatprep.subr.mxu0 0.0
    %1993 = vmatpush1.msra.mxu0 0.0
    %1994 = vmatprep.subr.mxu0 0.0
    %1995 = vmatpush1.msra.mxu0 0.0
    %1996 = vmatprep.subr.mxu0 0.0
    %1997 = vmatpush1.msra.mxu0 0.0
    %1998 = vmatprep.subr.mxu0 0.0
    %1999 = vmatpush1.msra.mxu0 0.0
    %2000 = vmatprep.subr.mxu0 0.0
    %2001 = vmatpush1.msra.mxu0 0.0
    %2002 = vmatprep.subr.mxu0 0.0
    %2003 = vmatpush1.msra.mxu0 0.0
    %2004 = vmatprep.subr.mxu0 0.0
    %2005 = vmatpush1.msra.mxu0 0.0
    %2006 = vmatprep.subr.mxu0 0.0
    %2007 = vmatpush1.msra.mxu0 0.0
    %2008 = vmatprep.subr.mxu0 0.0
    %2009 = vmatpush1.msra.mxu0 0.0
    %2010 = vmatprep.subr.mxu0 0.0
    %2011 = vmatpush1.msra.mxu0 0.0
    %2012 = vmatprep.subr.mxu0 0.0
    %2013 = vmatpush1.msra.mxu0 0.0
    %2014 = vmatprep.subr.mxu0 0.0
    %2015 = vmatpush1.msra.mxu0 0.0
    %2016 = vmatprep.mubr.f32.mxu0 0.0
    %2017 = vmatmul.mubr.f32.gmra.mrb[0].mxu0 %v1938
    %v2018 = vpop.f32.mrb[0].mxu0
    %v2019 = vadd.f32 0.0, %v2018
    %v2020 = vpop.f32.mrb[0].mxu0
    %2021 = vmatprep.mubr.f32.mxu0 0.0
    %2022 = vmatmul.mubr.f32.gmra.mrb[0].mxu0 %v1941
    %v2023 = vpop.f32.mrb[0].mxu0
    %v2024 = vadd.f32 0.0, %v2023
    %v2025 = vpop.f32.mrb[0].mxu0
    %2026 = vmatprep.mubr.f32.mxu0 0.0
    %2027 = vmatmul.mubr.f32.gmra.mrb[0].mxu0 %v1944
    %v2028 = vpop.f32.mrb[0].mxu0
    %v2029 = vadd.f32 0.0, %v2028
    %v2030 = vpop.f32.mrb[0].mxu0
    %2031 = vmatprep.mubr.f32.mxu0 0.0
    %2032 = vmatmul.mubr.f32.gmra.mrb[0].mxu0 %v1947
    %v2033 = vpop.f32.mrb[0].mxu0
    %v2034 = vadd.f32 0.0, %v2033
    %v2035 = vpop.f32.mrb[0].mxu0
    %2036 = vdwg.mxu0
    %v2037 = vld [vmem:[%s37] sm:$0xff]
    %v2038 = vld [vmem:[%s37 + $0x8] sm:$0xff]
    %v2039 = vld [vmem:[%s37 + $0x10] sm:$0xff]
    %v2040 = vld [vmem:[%s37 + $0x18] sm:$0xff]
    %v2041 = vld [vmem:[%s37 + $0x20] sm:$0xff]
    %v2042 = vld [vmem:[%s37 + $0x28] sm:$0xff]
    %v2043 = vld [vmem:[%s37 + $0x30] sm:$0xff]
    %v2044 = vld [vmem:[%s37 + $0x38] sm:$0xff]
    %2046 = vset.pattern.permute.xlu0 0
    %2047 = vperm.xlu0 %2046, %v1462
    %v2048 = vpop.permute.xlu0 %2047
    %2051 = vset.pattern.permute.xlu0 0
    %2052 = vperm.xlu0 %2051, %v1463
    %v2053 = vpop.permute.xlu0 %2052
    %2056 = vset.pattern.permute.xlu0 0
    %2057 = vperm.xlu0 %2056, %v1464
    %v2058 = vpop.permute.xlu0 %2057
    %2061 = vset.pattern.permute.xlu0 0
    %2062 = vperm.xlu0 %2061, %v1465
    %v2063 = vpop.permute.xlu0 %2062
    %2066 = vset.pattern.permute.xlu0 0
    %2067 = vperm.xlu0 %2066, %v1466
    %v2068 = vpop.permute.xlu0 %2067
    %2071 = vset.pattern.permute.xlu0 0
    %2072 = vperm.xlu0 %2071, %v1467
    %v2073 = vpop.permute.xlu0 %2072
    %2076 = vset.pattern.permute.xlu0 0
    %2077 = vperm.xlu0 %2076, %v1468
    %v2078 = vpop.permute.xlu0 %2077
    %2081 = vset.pattern.permute.xlu0 0
    %2082 = vperm.xlu0 %2081, %v1469
    %v2083 = vpop.permute.xlu0 %2082
    %v2086 = vsel %vm1061, %v2037, 0
    %v2089 = vsel %vm1061, %v2038, 0
    %v2092 = vsel %vm1061, %v2039, 0
    %v2095 = vsel %vm1061, %v2040, 0
    %v2098 = vsel %vm1061, %v2041, 0
    %v2101 = vsel %vm1061, %v2042, 0
    %v2104 = vsel %vm1061, %v2043, 0
    %v2107 = vsel %vm1061, %v2044, 0
    %2109 = vmatprep.subr.mxu0 0.0
    %2110 = vmatpush1.msra.mxu0 %v2019
    %2111 = vmatprep.subr.mxu0 0.0
    %2112 = vmatpush1.msra.mxu0 %v2024
    %2113 = vmatprep.subr.mxu0 0.0
    %2114 = vmatpush1.msra.mxu0 %v2029
    %2115 = vmatprep.subr.mxu0 0.0
    %2116 = vmatpush1.msra.mxu0 %v2034
    %2117 = vmatprep.subr.mxu0 0.0
    %2118 = vmatpush1.msra.mxu0 0.0
    %2119 = vmatprep.subr.mxu0 0.0
    %2120 = vmatpush1.msra.mxu0 0.0
    %2121 = vmatprep.subr.mxu0 0.0
    %2122 = vmatpush1.msra.mxu0 0.0
    %2123 = vmatprep.subr.mxu0 0.0
    %2124 = vmatpush1.msra.mxu0 0.0
    %2125 = vmatprep.subr.mxu0 0.0
    %2126 = vmatpush1.msra.mxu0 0.0
    %2127 = vmatprep.subr.mxu0 0.0
    %2128 = vmatpush1.msra.mxu0 0.0
    %2129 = vmatprep.subr.mxu0 0.0
    %2130 = vmatpush1.msra.mxu0 0.0
    %2131 = vmatprep.subr.mxu0 0.0
    %2132 = vmatpush1.msra.mxu0 0.0
    %2133 = vmatprep.subr.mxu0 0.0
    %2134 = vmatpush1.msra.mxu0 0.0
    %2135 = vmatprep.subr.mxu0 0.0
    %2136 = vmatpush1.msra.mxu0 0.0
    %2137 = vmatprep.subr.mxu0 0.0
    %2138 = vmatpush1.msra.mxu0 0.0
    %2139 = vmatprep.subr.mxu0 0.0
    %2140 = vmatpush1.msra.mxu0 0.0
    %2141 = vmatprep.subr.mxu0 0.0
    %2142 = vmatpush1.msra.mxu0 0.0
    %2143 = vmatprep.subr.mxu0 0.0
    %2144 = vmatpush1.msra.mxu0 0.0
    %2145 = vmatprep.subr.mxu0 0.0
    %2146 = vmatpush1.msra.mxu0 0.0
    %2147 = vmatprep.subr.mxu0 0.0
    %2148 = vmatpush1.msra.mxu0 0.0
    %2149 = vmatprep.subr.mxu0 0.0
    %2150 = vmatpush1.msra.mxu0 0.0
    %2151 = vmatprep.subr.mxu0 0.0
    %2152 = vmatpush1.msra.mxu0 0.0
    %2153 = vmatprep.subr.mxu0 0.0
    %2154 = vmatpush1.msra.mxu0 0.0
    %2155 = vmatprep.subr.mxu0 0.0
    %2156 = vmatpush1.msra.mxu0 0.0
    %2157 = vmatprep.subr.mxu0 0.0
    %2158 = vmatpush1.msra.mxu0 0.0
    %2159 = vmatprep.subr.mxu0 0.0
    %2160 = vmatpush1.msra.mxu0 0.0
    %2161 = vmatprep.subr.mxu0 0.0
    %2162 = vmatpush1.msra.mxu0 0.0
    %2163 = vmatprep.subr.mxu0 0.0
    %2164 = vmatpush1.msra.mxu0 0.0
    %2165 = vmatprep.subr.mxu0 0.0
    %2166 = vmatpush1.msra.mxu0 0.0
    %2167 = vmatprep.subr.mxu0 0.0
    %2168 = vmatpush1.msra.mxu0 0.0
    %2169 = vmatprep.subr.mxu0 0.0
    %2170 = vmatpush1.msra.mxu0 0.0
    %2171 = vmatprep.subr.mxu0 0.0
    %2172 = vmatpush1.msra.mxu0 0.0
    %2173 = vmatprep.mubr.f32.mxu0 0.0
    %2174 = vmatmul.mubr.f32.gmra.mrb[0].mxu0 %v2086
    %v2175 = vpop.f32.mrb[0].mxu0
    %v2176 = vadd.f32 %v2048, %v2175
    %v2177 = vpop.f32.mrb[0].mxu0
    %2178 = vmatprep.mubr.f32.mxu0 0.0
    %2179 = vmatmul.mubr.f32.gmra.mrb[0].mxu0 %v2089
    %v2180 = vpop.f32.mrb[0].mxu0
    %v2181 = vadd.f32 %v2053, %v2180
    %v2182 = vpop.f32.mrb[0].mxu0
    %2183 = vmatprep.mubr.f32.mxu0 0.0
    %2184 = vmatmul.mubr.f32.gmra.mrb[0].mxu0 %v2092
    %v2185 = vpop.f32.mrb[0].mxu0
    %v2186 = vadd.f32 %v2058, %v2185
    %v2187 = vpop.f32.mrb[0].mxu0
    %2188 = vmatprep.mubr.f32.mxu0 0.0
    %2189 = vmatmul.mubr.f32.gmra.mrb[0].mxu0 %v2095
    %v2190 = vpop.f32.mrb[0].mxu0
    %v2191 = vadd.f32 %v2063, %v2190
    %v2192 = vpop.f32.mrb[0].mxu0
    %2193 = vmatprep.mubr.f32.mxu0 0.0
    %2194 = vmatmul.mubr.f32.gmra.mrb[0].mxu0 %v2098
    %v2195 = vpop.f32.mrb[0].mxu0
    %v2196 = vadd.f32 %v2068, %v2195
    %v2197 = vpop.f32.mrb[0].mxu0
    %2198 = vmatprep.mubr.f32.mxu0 0.0
    %2199 = vmatmul.mubr.f32.gmra.mrb[0].mxu0 %v2101
    %v2200 = vpop.f32.mrb[0].mxu0
    %v2201 = vadd.f32 %v2073, %v2200
    %v2202 = vpop.f32.mrb[0].mxu0
    %2203 = vmatprep.mubr.f32.mxu0 0.0
    %2204 = vmatmul.mubr.f32.gmra.mrb[0].mxu0 %v2104
    %v2205 = vpop.f32.mrb[0].mxu0
    %v2206 = vadd.f32 %v2078, %v2205
    %v2207 = vpop.f32.mrb[0].mxu0
    %2208 = vmatprep.mubr.f32.mxu0 0.0
    %2209 = vmatmul.mubr.f32.gmra.mrb[0].mxu0 %v2107
    %v2210 = vpop.f32.mrb[0].mxu0
    %v2211 = vadd.f32 %v2083, %v2210
    %v2212 = vpop.f32.mrb[0].mxu0
    %2213 = vdwg.mxu0
    %v2214 = vld [vmem:[%s39] sm:$0xff]
    %v2215 = vld [vmem:[%s39 + $0x8] sm:$0xff]
    %v2216 = vld [vmem:[%s39 + $0x10] sm:$0xff]
    %v2217 = vld [vmem:[%s39 + $0x18] sm:$0xff]
    %v2218 = vld [vmem:[%s39 + $0x20] sm:$0xff]
    %v2219 = vld [vmem:[%s39 + $0x28] sm:$0xff]
    %v2220 = vld [vmem:[%s39 + $0x30] sm:$0xff]
    %v2221 = vld [vmem:[%s39 + $0x38] sm:$0xff]
    %2223 = vset.pattern.permute.xlu0 0
    %2224 = vperm.xlu0 %2223, %v1470
    %v2225 = vpop.permute.xlu0 %2224
    %2228 = vset.pattern.permute.xlu0 0
    %2229 = vperm.xlu0 %2228, %v1471
    %v2230 = vpop.permute.xlu0 %2229
    %2233 = vset.pattern.permute.xlu0 0
    %2234 = vperm.xlu0 %2233, %v1472
    %v2235 = vpop.permute.xlu0 %2234
    %2238 = vset.pattern.permute.xlu0 0
    %2239 = vperm.xlu0 %2238, %v1473
    %v2240 = vpop.permute.xlu0 %2239
    %2243 = vset.pattern.permute.xlu0 0
    %2244 = vperm.xlu0 %2243, %v1474
    %v2245 = vpop.permute.xlu0 %2244
    %2248 = vset.pattern.permute.xlu0 0
    %2249 = vperm.xlu0 %2248, %v1475
    %v2250 = vpop.permute.xlu0 %2249
    %2253 = vset.pattern.permute.xlu0 0
    %2254 = vperm.xlu0 %2253, %v1476
    %v2255 = vpop.permute.xlu0 %2254
    %2258 = vset.pattern.permute.xlu0 0
    %2259 = vperm.xlu0 %2258, %v1477
    %v2260 = vpop.permute.xlu0 %2259
    %v2263 = vsel %vm1061, %v2214, 0
    %v2266 = vsel %vm1061, %v2215, 0
    %v2269 = vsel %vm1061, %v2216, 0
    %v2272 = vsel %vm1061, %v2217, 0
    %v2275 = vsel %vm1061, %v2218, 0
    %v2278 = vsel %vm1061, %v2219, 0
    %v2281 = vsel %vm1061, %v2220, 0
    %v2284 = vsel %vm1061, %v2221, 0
    %2286 = vmatprep.subr.mxu0 0.0
    %2287 = vmatpush1.msra.mxu0 %v1453
    %2288 = vmatprep.subr.mxu0 0.0
    %2289 = vmatpush1.msra.mxu0 %v1454
    %2290 = vmatprep.subr.mxu0 0.0
    %2291 = vmatpush1.msra.mxu0 %v1455
    %2292 = vmatprep.subr.mxu0 0.0
    %2293 = vmatpush1.msra.mxu0 %v1456
    %2294 = vmatprep.subr.mxu0 0.0
    %2295 = vmatpush1.msra.mxu0 0.0
    %2296 = vmatprep.subr.mxu0 0.0
    %2297 = vmatpush1.msra.mxu0 0.0
    %2298 = vmatprep.subr.mxu0 0.0
    %2299 = vmatpush1.msra.mxu0 0.0
    %2300 = vmatprep.subr.mxu0 0.0
    %2301 = vmatpush1.msra.mxu0 0.0
    %2302 = vmatprep.subr.mxu0 0.0
    %2303 = vmatpush1.msra.mxu0 0.0
    %2304 = vmatprep.subr.mxu0 0.0
    %2305 = vmatpush1.msra.mxu0 0.0
    %2306 = vmatprep.subr.mxu0 0.0
    %2307 = vmatpush1.msra.mxu0 0.0
    %2308 = vmatprep.subr.mxu0 0.0
    %2309 = vmatpush1.msra.mxu0 0.0
    %2310 = vmatprep.subr.mxu0 0.0
    %2311 = vmatpush1.msra.mxu0 0.0
    %2312 = vmatprep.subr.mxu0 0.0
    %2313 = vmatpush1.msra.mxu0 0.0
    %2314 = vmatprep.subr.mxu0 0.0
    %2315 = vmatpush1.msra.mxu0 0.0
    %2316 = vmatprep.subr.mxu0 0.0
    %2317 = vmatpush1.msra.mxu0 0.0
    %2318 = vmatprep.subr.mxu0 0.0
    %2319 = vmatpush1.msra.mxu0 0.0
    %2320 = vmatprep.subr.mxu0 0.0
    %2321 = vmatpush1.msra.mxu0 0.0
    %2322 = vmatprep.subr.mxu0 0.0
    %2323 = vmatpush1.msra.mxu0 0.0
    %2324 = vmatprep.subr.mxu0 0.0
    %2325 = vmatpush1.msra.mxu0 0.0
    %2326 = vmatprep.subr.mxu0 0.0
    %2327 = vmatpush1.msra.mxu0 0.0
    %2328 = vmatprep.subr.mxu0 0.0
    %2329 = vmatpush1.msra.mxu0 0.0
    %2330 = vmatprep.subr.mxu0 0.0
    %2331 = vmatpush1.msra.mxu0 0.0
    %2332 = vmatprep.subr.mxu0 0.0
    %2333 = vmatpush1.msra.mxu0 0.0
    %2334 = vmatprep.subr.mxu0 0.0
    %2335 = vmatpush1.msra.mxu0 0.0
    %2336 = vmatprep.subr.mxu0 0.0
    %2337 = vmatpush1.msra.mxu0 0.0
    %2338 = vmatprep.subr.mxu0 0.0
    %2339 = vmatpush1.msra.mxu0 0.0
    %2340 = vmatprep.subr.mxu0 0.0
    %2341 = vmatpush1.msra.mxu0 0.0
    %2342 = vmatprep.subr.mxu0 0.0
    %2343 = vmatpush1.msra.mxu0 0.0
    %2344 = vmatprep.subr.mxu0 0.0
    %2345 = vmatpush1.msra.mxu0 0.0
    %2346 = vmatprep.subr.mxu0 0.0
    %2347 = vmatpush1.msra.mxu0 0.0
    %2348 = vmatprep.subr.mxu0 0.0
    %2349 = vmatpush1.msra.mxu0 0.0
    %2350 = vmatprep.mubr.f32.mxu0 0.0
    %2351 = vmatmul.mubr.f32.gmra.mrb[0].mxu0 %v2263
    %v2352 = vpop.f32.mrb[0].mxu0
    %v2353 = vadd.f32 %v2225, %v2352
    %v2354 = vpop.f32.mrb[0].mxu0
    %2355 = vmatprep.mubr.f32.mxu0 0.0
    %2356 = vmatmul.mubr.f32.gmra.mrb[0].mxu0 %v2266
    %v2357 = vpop.f32.mrb[0].mxu0
    %v2358 = vadd.f32 %v2230, %v2357
    %v2359 = vpop.f32.mrb[0].mxu0
    %2360 = vmatprep.mubr.f32.mxu0 0.0
    %2361 = vmatmul.mubr.f32.gmra.mrb[0].mxu0 %v2269
    %v2362 = vpop.f32.mrb[0].mxu0
    %v2363 = vadd.f32 %v2235, %v2362
    %v2364 = vpop.f32.mrb[0].mxu0
    %2365 = vmatprep.mubr.f32.mxu0 0.0
    %2366 = vmatmul.mubr.f32.gmra.mrb[0].mxu0 %v2272
    %v2367 = vpop.f32.mrb[0].mxu0
    %v2368 = vadd.f32 %v2240, %v2367
    %v2369 = vpop.f32.mrb[0].mxu0
    %2370 = vmatprep.mubr.f32.mxu0 0.0
    %2371 = vmatmul.mubr.f32.gmra.mrb[0].mxu0 %v2275
    %v2372 = vpop.f32.mrb[0].mxu0
    %v2373 = vadd.f32 %v2245, %v2372
    %v2374 = vpop.f32.mrb[0].mxu0
    %2375 = vmatprep.mubr.f32.mxu0 0.0
    %2376 = vmatmul.mubr.f32.gmra.mrb[0].mxu0 %v2278
    %v2377 = vpop.f32.mrb[0].mxu0
    %v2378 = vadd.f32 %v2250, %v2377
    %v2379 = vpop.f32.mrb[0].mxu0
    %2380 = vmatprep.mubr.f32.mxu0 0.0
    %2381 = vmatmul.mubr.f32.gmra.mrb[0].mxu0 %v2281
    %v2382 = vpop.f32.mrb[0].mxu0
    %v2383 = vadd.f32 %v2255, %v2382
    %v2384 = vpop.f32.mrb[0].mxu0
    %2385 = vmatprep.mubr.f32.mxu0 0.0
    %2386 = vmatmul.mubr.f32.gmra.mrb[0].mxu0 %v2284
    %v2387 = vpop.f32.mrb[0].mxu0
    %v2388 = vadd.f32 %v2260, %v2387
    %v2389 = vpop.f32.mrb[0].mxu0
    %2390 = vdwg.mxu0
    %v2391 = vadd.f32 %v2176, %v2353
    %v2392 = vadd.f32 %v2181, %v2358
    %v2393 = vadd.f32 %v2186, %v2363
    %v2394 = vadd.f32 %v2191, %v2368
    %v2395 = vadd.f32 %v2196, %v2373
    %v2396 = vadd.f32 %v2201, %v2378
    %v2397 = vadd.f32 %v2206, %v2383
    %v2398 = vadd.f32 %v2211, %v2388
    %v2399 = vmax.f32 %v2391, 0.0
    %v2400 = vmax.f32 %v2392, 0.0
    %v2401 = vmax.f32 %v2393, 0.0
    %v2402 = vmax.f32 %v2394, 0.0
    %v2403 = vmax.f32 %v2395, 0.0
    %v2404 = vmax.f32 %v2396, 0.0
    %v2405 = vmax.f32 %v2397, 0.0
    %v2406 = vmax.f32 %v2398, 0.0
    %v2408 = vsel %vm621, %v2399, 0
    %v2411 = vsel %vm621, %v2400, 0
    %v2414 = vsel %vm621, %v2401, 0
    %v2417 = vsel %vm621, %v2402, 0
    %v2420 = vsel %vm621, %v2403, 0
    %v2423 = vsel %vm621, %v2404, 0
    %v2426 = vsel %vm621, %v2405, 0
    %v2429 = vsel %vm621, %v2406, 0
    %2431 = vmatprep.subr.mxu0 0.0
    %2432 = vmatpush1.msra.mxu0 %v164
    %2433 = vmatprep.subr.mxu0 0.0
    %2434 = vmatpush1.msra.mxu0 %v165
    %2435 = vmatprep.subr.mxu0 0.0
    %2436 = vmatpush1.msra.mxu0 %v166
    %2437 = vmatprep.subr.mxu0 0.0
    %2438 = vmatpush1.msra.mxu0 %v167
    %2439 = vmatprep.subr.mxu0 0.0
    %2440 = vmatpush1.msra.mxu0 %v168
    %2441 = vmatprep.subr.mxu0 0.0
    %2442 = vmatpush1.msra.mxu0 %v169
    %2443 = vmatprep.subr.mxu0 0.0
    %2444 = vmatpush1.msra.mxu0 %v170
    %2445 = vmatprep.subr.mxu0 0.0
    %2446 = vmatpush1.msra.mxu0 %v171
    %2447 = vmatprep.subr.mxu0 0.0
    %2448 = vmatpush1.msra.mxu0 %v172
    %2449 = vmatprep.subr.mxu0 0.0
    %2450 = vmatpush1.msra.mxu0 %v173
    %2451 = vmatprep.subr.mxu0 0.0
    %2452 = vmatpush1.msra.mxu0 %v174
    %2453 = vmatprep.subr.mxu0 0.0
    %2454 = vmatpush1.msra.mxu0 %v175
    %2455 = vmatprep.subr.mxu0 0.0
    %2456 = vmatpush1.msra.mxu0 %v176
    %2457 = vmatprep.subr.mxu0 0.0
    %2458 = vmatpush1.msra.mxu0 %v177
    %2459 = vmatprep.subr.mxu0 0.0
    %2460 = vmatpush1.msra.mxu0 %v178
    %2461 = vmatprep.subr.mxu0 0.0
    %2462 = vmatpush1.msra.mxu0 %v962
    %2463 = vmatprep.subr.mxu0 0.0
    %2464 = vmatpush1.msra.mxu0 0.0
    %2465 = vmatprep.subr.mxu0 0.0
    %2466 = vmatpush1.msra.mxu0 0.0
    %2467 = vmatprep.subr.mxu0 0.0
    %2468 = vmatpush1.msra.mxu0 0.0
    %2469 = vmatprep.subr.mxu0 0.0
    %2470 = vmatpush1.msra.mxu0 0.0
    %2471 = vmatprep.subr.mxu0 0.0
    %2472 = vmatpush1.msra.mxu0 0.0
    %2473 = vmatprep.subr.mxu0 0.0
    %2474 = vmatpush1.msra.mxu0 0.0
    %2475 = vmatprep.subr.mxu0 0.0
    %2476 = vmatpush1.msra.mxu0 0.0
    %2477 = vmatprep.subr.mxu0 0.0
    %2478 = vmatpush1.msra.mxu0 0.0
    %2479 = vmatprep.subr.mxu0 0.0
    %2480 = vmatpush1.msra.mxu0 0.0
    %2481 = vmatprep.subr.mxu0 0.0
    %2482 = vmatpush1.msra.mxu0 0.0
    %2483 = vmatprep.subr.mxu0 0.0
    %2484 = vmatpush1.msra.mxu0 0.0
    %2485 = vmatprep.subr.mxu0 0.0
    %2486 = vmatpush1.msra.mxu0 0.0
    %2487 = vmatprep.subr.mxu0 0.0
    %2488 = vmatpush1.msra.mxu0 0.0
    %2489 = vmatprep.subr.mxu0 0.0
    %2490 = vmatpush1.msra.mxu0 0.0
    %2491 = vmatprep.subr.mxu0 0.0
    %2492 = vmatpush1.msra.mxu0 0.0
    %2493 = vmatprep.subr.mxu0 0.0
    %2494 = vmatpush1.msra.mxu0 0.0
    %2495 = vmatprep.mubr.f32.mxu0 0.0
    %2496 = vmatmul.mubr.f32.gmra.mrb[0].mxu0 %v2408
    %v2497 = vpop.f32.mrb[0].mxu0
    %v2498 = vadd.f32 0.0, %v2497
    %v2499 = vpop.f32.mrb[0].mxu0
    %2500 = vmatprep.mubr.f32.mxu0 0.0
    %2501 = vmatmul.mubr.f32.gmra.mrb[0].mxu0 %v2411
    %v2502 = vpop.f32.mrb[0].mxu0
    %v2503 = vadd.f32 0.0, %v2502
    %v2504 = vpop.f32.mrb[0].mxu0
    %2505 = vmatprep.mubr.f32.mxu0 0.0
    %2506 = vmatmul.mubr.f32.gmra.mrb[0].mxu0 %v2414
    %v2507 = vpop.f32.mrb[0].mxu0
    %v2508 = vadd.f32 0.0, %v2507
    %v2509 = vpop.f32.mrb[0].mxu0
    %2510 = vmatprep.mubr.f32.mxu0 0.0
    %2511 = vmatmul.mubr.f32.gmra.mrb[0].mxu0 %v2417
    %v2512 = vpop.f32.mrb[0].mxu0
    %v2513 = vadd.f32 0.0, %v2512
    %v2514 = vpop.f32.mrb[0].mxu0
    %2515 = vmatprep.mubr.f32.mxu0 0.0
    %2516 = vmatmul.mubr.f32.gmra.mrb[0].mxu0 %v2420
    %v2517 = vpop.f32.mrb[0].mxu0
    %v2518 = vadd.f32 0.0, %v2517
    %v2519 = vpop.f32.mrb[0].mxu0
    %2520 = vmatprep.mubr.f32.mxu0 0.0
    %2521 = vmatmul.mubr.f32.gmra.mrb[0].mxu0 %v2423
    %v2522 = vpop.f32.mrb[0].mxu0
    %v2523 = vadd.f32 0.0, %v2522
    %v2524 = vpop.f32.mrb[0].mxu0
    %2525 = vmatprep.mubr.f32.mxu0 0.0
    %2526 = vmatmul.mubr.f32.gmra.mrb[0].mxu0 %v2426
    %v2527 = vpop.f32.mrb[0].mxu0
    %v2528 = vadd.f32 0.0, %v2527
    %v2529 = vpop.f32.mrb[0].mxu0
    %2530 = vmatprep.mubr.f32.mxu0 0.0
    %2531 = vmatmul.mubr.f32.gmra.mrb[0].mxu0 %v2429
    %v2532 = vpop.f32.mrb[0].mxu0
    %v2533 = vadd.f32 0.0, %v2532
    %v2534 = vpop.f32.mrb[0].mxu0
    %2535 = vdwg.mxu0
    %v2536 = vld [vmem:[%s41] sm:$0xff]
    %v2537 = vld [vmem:[%s41 + $0x8] sm:$0xff]
    %v2538 = vld [vmem:[%s41 + $0x10] sm:$0xff]
    %v2539 = vld [vmem:[%s41 + $0x18] sm:$0xff]
    %2541 = vset.pattern.permute.xlu0 0
    %2542 = vperm.xlu0 %2541, %v1478
    %v2543 = vpop.permute.xlu0 %2542
    %2546 = vset.pattern.permute.xlu0 0
    %2547 = vperm.xlu0 %2546, %v1479
    %v2548 = vpop.permute.xlu0 %2547
    %2551 = vset.pattern.permute.xlu0 0
    %2552 = vperm.xlu0 %2551, %v1480
    %v2553 = vpop.permute.xlu0 %2552
    %2556 = vset.pattern.permute.xlu0 0
    %2557 = vperm.xlu0 %2556, %v1481
    %v2558 = vpop.permute.xlu0 %2557
    %vm2560 = vcmask 523264
    %v2562 = vsel %vm2560, %v2536, 0
    %v2565 = vsel %vm2560, %v2537, 0
    %v2568 = vsel %vm2560, %v2538, 0
    %v2571 = vsel %vm2560, %v2539, 0
    %2573 = vmatprep.subr.mxu0 0.0
    %2574 = vmatpush1.msra.mxu0 %v2498
    %2575 = vmatprep.subr.mxu0 0.0
    %2576 = vmatpush1.msra.mxu0 %v2503
    %2577 = vmatprep.subr.mxu0 0.0
    %2578 = vmatpush1.msra.mxu0 %v2508
    %2579 = vmatprep.subr.mxu0 0.0
    %2580 = vmatpush1.msra.mxu0 %v2513
    %2581 = vmatprep.subr.mxu0 0.0
    %2582 = vmatpush1.msra.mxu0 %v2518
    %2583 = vmatprep.subr.mxu0 0.0
    %2584 = vmatpush1.msra.mxu0 %v2523
    %2585 = vmatprep.subr.mxu0 0.0
    %2586 = vmatpush1.msra.mxu0 %v2528
    %2587 = vmatprep.subr.mxu0 0.0
    %2588 = vmatpush1.msra.mxu0 %v2533
    %2589 = vmatprep.subr.mxu0 0.0
    %2590 = vmatpush1.msra.mxu0 0.0
    %2591 = vmatprep.subr.mxu0 0.0
    %2592 = vmatpush1.msra.mxu0 0.0
    %2593 = vmatprep.subr.mxu0 0.0
    %2594 = vmatpush1.msra.mxu0 0.0
    %2595 = vmatprep.subr.mxu0 0.0
    %2596 = vmatpush1.msra.mxu0 0.0
    %2597 = vmatprep.subr.mxu0 0.0
    %2598 = vmatpush1.msra.mxu0 0.0
    %2599 = vmatprep.subr.mxu0 0.0
    %2600 = vmatpush1.msra.mxu0 0.0
    %2601 = vmatprep.subr.mxu0 0.0
    %2602 = vmatpush1.msra.mxu0 0.0
    %2603 = vmatprep.subr.mxu0 0.0
    %2604 = vmatpush1.msra.mxu0 0.0
    %2605 = vmatprep.subr.mxu0 0.0
    %2606 = vmatpush1.msra.mxu0 0.0
    %2607 = vmatprep.subr.mxu0 0.0
    %2608 = vmatpush1.msra.mxu0 0.0
    %2609 = vmatprep.subr.mxu0 0.0
    %2610 = vmatpush1.msra.mxu0 0.0
    %2611 = vmatprep.subr.mxu0 0.0
    %2612 = vmatpush1.msra.mxu0 0.0
    %2613 = vmatprep.subr.mxu0 0.0
    %2614 = vmatpush1.msra.mxu0 0.0
    %2615 = vmatprep.subr.mxu0 0.0
    %2616 = vmatpush1.msra.mxu0 0.0
    %2617 = vmatprep.subr.mxu0 0.0
    %2618 = vmatpush1.msra.mxu0 0.0
    %2619 = vmatprep.subr.mxu0 0.0
    %2620 = vmatpush1.msra.mxu0 0.0
    %2621 = vmatprep.subr.mxu0 0.0
    %2622 = vmatpush1.msra.mxu0 0.0
    %2623 = vmatprep.subr.mxu0 0.0
    %2624 = vmatpush1.msra.mxu0 0.0
    %2625 = vmatprep.subr.mxu0 0.0
    %2626 = vmatpush1.msra.mxu0 0.0
    %2627 = vmatprep.subr.mxu0 0.0
    %2628 = vmatpush1.msra.mxu0 0.0
    %2629 = vmatprep.subr.mxu0 0.0
    %2630 = vmatpush1.msra.mxu0 0.0
    %2631 = vmatprep.subr.mxu0 0.0
    %2632 = vmatpush1.msra.mxu0 0.0
    %2633 = vmatprep.subr.mxu0 0.0
    %2634 = vmatpush1.msra.mxu0 0.0
    %2635 = vmatprep.subr.mxu0 0.0
    %2636 = vmatpush1.msra.mxu0 0.0
    %2637 = vmatprep.mubr.f32.mxu0 0.0
    %2638 = vmatmul.mubr.f32.gmra.mrb[0].mxu0 %v2562
    %v2639 = vpop.f32.mrb[0].mxu0
    %v2640 = vadd.f32 %v2543, %v2639
    %v2641 = vpop.f32.mrb[0].mxu0
    %2642 = vmatprep.mubr.f32.mxu0 0.0
    %2643 = vmatmul.mubr.f32.gmra.mrb[0].mxu0 %v2565
    %v2644 = vpop.f32.mrb[0].mxu0
    %v2645 = vadd.f32 %v2548, %v2644
    %v2646 = vpop.f32.mrb[0].mxu0
    %2647 = vmatprep.mubr.f32.mxu0 0.0
    %2648 = vmatmul.mubr.f32.gmra.mrb[0].mxu0 %v2568
    %v2649 = vpop.f32.mrb[0].mxu0
    %v2650 = vadd.f32 %v2553, %v2649
    %v2651 = vpop.f32.mrb[0].mxu0
    %2652 = vmatprep.mubr.f32.mxu0 0.0
    %2653 = vmatmul.mubr.f32.gmra.mrb[0].mxu0 %v2571
    %v2654 = vpop.f32.mrb[0].mxu0
    %v2655 = vadd.f32 %v2558, %v2654
    %v2656 = vpop.f32.mrb[0].mxu0
    %2657 = vdwg.mxu0
    %v2658 = vmax.f32 %v2640, 0.0
    %v2659 = vmax.f32 %v2645, 0.0
    %v2660 = vmax.f32 %v2650, 0.0
    %v2661 = vmax.f32 %v2655, 0.0
    %v2662 = vld [vmem:[%s43] sm:$0xff]
    %v2663 = vld [vmem:[%s43 + $0x8] sm:$0xff]
    %v2664 = vld [vmem:[%s43 + $0x10] sm:$0xff]
    %v2665 = vld [vmem:[%s43 + $0x18] sm:$0xff]
    %v2666 = vld [vmem:[%s43 + $0x20] sm:$0xff]
    %v2667 = vld [vmem:[%s43 + $0x28] sm:$0xff]
    %v2668 = vld [vmem:[%s43 + $0x30] sm:$0xff]
    %v2669 = vld [vmem:[%s43 + $0x38] sm:$0xff]
    %2671 = vset.pattern.permute.xlu0 0
    %2672 = vperm.xlu0 %2671, %v1482
    %v2673 = vpop.permute.xlu0 %2672
    %2676 = vset.pattern.permute.xlu0 0
    %2677 = vperm.xlu0 %2676, %v1483
    %v2678 = vpop.permute.xlu0 %2677
    %2681 = vset.pattern.permute.xlu0 0
    %2682 = vperm.xlu0 %2681, %v1484
    %v2683 = vpop.permute.xlu0 %2682
    %2686 = vset.pattern.permute.xlu0 0
    %2687 = vperm.xlu0 %2686, %v1485
    %v2688 = vpop.permute.xlu0 %2687
    %2691 = vset.pattern.permute.xlu0 0
    %2692 = vperm.xlu0 %2691, %v1486
    %v2693 = vpop.permute.xlu0 %2692
    %2696 = vset.pattern.permute.xlu0 0
    %2697 = vperm.xlu0 %2696, %v1487
    %v2698 = vpop.permute.xlu0 %2697
    %2701 = vset.pattern.permute.xlu0 0
    %2702 = vperm.xlu0 %2701, %v1488
    %v2703 = vpop.permute.xlu0 %2702
    %2706 = vset.pattern.permute.xlu0 0
    %2707 = vperm.xlu0 %2706, %v1489
    %v2708 = vpop.permute.xlu0 %2707
    %v2711 = vsel %vm1061, %v2662, 0
    %v2714 = vsel %vm1061, %v2663, 0
    %v2717 = vsel %vm1061, %v2664, 0
    %v2720 = vsel %vm1061, %v2665, 0
    %v2723 = vsel %vm1061, %v2666, 0
    %v2726 = vsel %vm1061, %v2667, 0
    %v2729 = vsel %vm1061, %v2668, 0
    %v2732 = vsel %vm1061, %v2669, 0
    %2734 = vmatprep.subr.mxu0 0.0
    %2735 = vmatpush1.msra.mxu0 %v2658
    %2736 = vmatprep.subr.mxu0 0.0
    %2737 = vmatpush1.msra.mxu0 %v2659
    %2738 = vmatprep.subr.mxu0 0.0
    %2739 = vmatpush1.msra.mxu0 %v2660
    %2740 = vmatprep.subr.mxu0 0.0
    %2741 = vmatpush1.msra.mxu0 %v2661
    %2742 = vmatprep.subr.mxu0 0.0
    %2743 = vmatpush1.msra.mxu0 0.0
    %2744 = vmatprep.subr.mxu0 0.0
    %2745 = vmatpush1.msra.mxu0 0.0
    %2746 = vmatprep.subr.mxu0 0.0
    %2747 = vmatpush1.msra.mxu0 0.0
    %2748 = vmatprep.subr.mxu0 0.0
    %2749 = vmatpush1.msra.mxu0 0.0
    %2750 = vmatprep.subr.mxu0 0.0
    %2751 = vmatpush1.msra.mxu0 0.0
    %2752 = vmatprep.subr.mxu0 0.0
    %2753 = vmatpush1.msra.mxu0 0.0
    %2754 = vmatprep.subr.mxu0 0.0
    %2755 = vmatpush1.msra.mxu0 0.0
    %2756 = vmatprep.subr.mxu0 0.0
    %2757 = vmatpush1.msra.mxu0 0.0
    %2758 = vmatprep.subr.mxu0 0.0
    %2759 = vmatpush1.msra.mxu0 0.0
    %2760 = vmatprep.subr.mxu0 0.0
    %2761 = vmatpush1.msra.mxu0 0.0
    %2762 = vmatprep.subr.mxu0 0.0
    %2763 = vmatpush1.msra.mxu0 0.0
    %2764 = vmatprep.subr.mxu0 0.0
    %2765 = vmatpush1.msra.mxu0 0.0
    %2766 = vmatprep.subr.mxu0 0.0
    %2767 = vmatpush1.msra.mxu0 0.0
    %2768 = vmatprep.subr.mxu0 0.0
    %2769 = vmatpush1.msra.mxu0 0.0
    %2770 = vmatprep.subr.mxu0 0.0
    %2771 = vmatpush1.msra.mxu0 0.0
    %2772 = vmatprep.subr.mxu0 0.0
    %2773 = vmatpush1.msra.mxu0 0.0
    %2774 = vmatprep.subr.mxu0 0.0
    %2775 = vmatpush1.msra.mxu0 0.0
    %2776 = vmatprep.subr.mxu0 0.0
    %2777 = vmatpush1.msra.mxu0 0.0
    %2778 = vmatprep.subr.mxu0 0.0
    %2779 = vmatpush1.msra.mxu0 0.0
    %2780 = vmatprep.subr.mxu0 0.0
    %2781 = vmatpush1.msra.mxu0 0.0
    %2782 = vmatprep.subr.mxu0 0.0
    %2783 = vmatpush1.msra.mxu0 0.0
    %2784 = vmatprep.subr.mxu0 0.0
    %2785 = vmatpush1.msra.mxu0 0.0
    %2786 = vmatprep.subr.mxu0 0.0
    %2787 = vmatpush1.msra.mxu0 0.0
    %2788 = vmatprep.subr.mxu0 0.0
    %2789 = vmatpush1.msra.mxu0 0.0
    %2790 = vmatprep.subr.mxu0 0.0
    %2791 = vmatpush1.msra.mxu0 0.0
    %2792 = vmatprep.subr.mxu0 0.0
    %2793 = vmatpush1.msra.mxu0 0.0
    %2794 = vmatprep.subr.mxu0 0.0
    %2795 = vmatpush1.msra.mxu0 0.0
    %2796 = vmatprep.subr.mxu0 0.0
    %2797 = vmatpush1.msra.mxu0 0.0
    %2798 = vmatprep.mubr.f32.mxu0 0.0
    %2799 = vmatmul.mubr.f32.gmra.mrb[0].mxu0 %v2711
    %v2800 = vpop.f32.mrb[0].mxu0
    %v2801 = vadd.f32 %v2673, %v2800
    %v2802 = vpop.f32.mrb[0].mxu0
    %2803 = vmatprep.mubr.f32.mxu0 0.0
    %2804 = vmatmul.mubr.f32.gmra.mrb[0].mxu0 %v2714
    %v2805 = vpop.f32.mrb[0].mxu0
    %v2806 = vadd.f32 %v2678, %v2805
    %v2807 = vpop.f32.mrb[0].mxu0
    %2808 = vmatprep.mubr.f32.mxu0 0.0
    %2809 = vmatmul.mubr.f32.gmra.mrb[0].mxu0 %v2717
    %v2810 = vpop.f32.mrb[0].mxu0
    %v2811 = vadd.f32 %v2683, %v2810
    %v2812 = vpop.f32.mrb[0].mxu0
    %2813 = vmatprep.mubr.f32.mxu0 0.0
    %2814 = vmatmul.mubr.f32.gmra.mrb[0].mxu0 %v2720
    %v2815 = vpop.f32.mrb[0].mxu0
    %v2816 = vadd.f32 %v2688, %v2815
    %v2817 = vpop.f32.mrb[0].mxu0
    %2818 = vmatprep.mubr.f32.mxu0 0.0
    %2819 = vmatmul.mubr.f32.gmra.mrb[0].mxu0 %v2723
    %v2820 = vpop.f32.mrb[0].mxu0
    %v2821 = vadd.f32 %v2693, %v2820
    %v2822 = vpop.f32.mrb[0].mxu0
    %2823 = vmatprep.mubr.f32.mxu0 0.0
    %2824 = vmatmul.mubr.f32.gmra.mrb[0].mxu0 %v2726
    %v2825 = vpop.f32.mrb[0].mxu0
    %v2826 = vadd.f32 %v2698, %v2825
    %v2827 = vpop.f32.mrb[0].mxu0
    %2828 = vmatprep.mubr.f32.mxu0 0.0
    %2829 = vmatmul.mubr.f32.gmra.mrb[0].mxu0 %v2729
    %v2830 = vpop.f32.mrb[0].mxu0
    %v2831 = vadd.f32 %v2703, %v2830
    %v2832 = vpop.f32.mrb[0].mxu0
    %2833 = vmatprep.mubr.f32.mxu0 0.0
    %2834 = vmatmul.mubr.f32.gmra.mrb[0].mxu0 %v2732
    %v2835 = vpop.f32.mrb[0].mxu0
    %v2836 = vadd.f32 %v2708, %v2835
    %v2837 = vpop.f32.mrb[0].mxu0
    %2838 = vdwg.mxu0
    %v2839 = vxor.u32 %v2801, 2147483648
    %v2840 = vxor.u32 %v2806, 2147483648
    %v2841 = vxor.u32 %v2811, 2147483648
    %v2842 = vxor.u32 %v2816, 2147483648
    %v2843 = vxor.u32 %v2821, 2147483648
    %v2844 = vxor.u32 %v2826, 2147483648
    %v2845 = vxor.u32 %v2831, 2147483648
    %v2846 = vxor.u32 %v2836, 2147483648
    %v2847 = vmul.f32 %v2839, 1.442695
    %v2848 = vpow.pop %v2847
    %v2849 = vmul.f32 %v2840, 1.442695
    %v2850 = vpow.pop %v2849
    %v2851 = vmul.f32 %v2841, 1.442695
    %v2852 = vpow.pop %v2851
    %v2853 = vmul.f32 %v2842, 1.442695
    %v2854 = vpow.pop %v2853
    %v2855 = vmul.f32 %v2843, 1.442695
    %v2856 = vpow.pop %v2855
    %v2857 = vmul.f32 %v2844, 1.442695
    %v2858 = vpow.pop %v2857
    %v2859 = vmul.f32 %v2845, 1.442695
    %v2860 = vpow.pop %v2859
    %v2861 = vmul.f32 %v2846, 1.442695
    %v2862 = vpow.pop %v2861
    %v2863 = vadd.f32 %v2848, 1.0
    %v2864 = vadd.f32 %v2850, 1.0
    %v2865 = vadd.f32 %v2852, 1.0
    %v2866 = vadd.f32 %v2854, 1.0
    %v2867 = vadd.f32 %v2856, 1.0
    %v2868 = vadd.f32 %v2858, 1.0
    %v2869 = vadd.f32 %v2860, 1.0
    %v2870 = vadd.f32 %v2862, 1.0
    %v2871 = vrcp.pop %v2863
    %v2872 = vmul.f32 1.0, %v2871
    %v2873 = vrcp.pop %v2864
    %v2874 = vmul.f32 1.0, %v2873
    %v2875 = vrcp.pop %v2865
    %v2876 = vmul.f32 1.0, %v2875
    %v2877 = vrcp.pop %v2866
    %v2878 = vmul.f32 1.0, %v2877
    %v2879 = vrcp.pop %v2867
    %v2880 = vmul.f32 1.0, %v2879
    %v2881 = vrcp.pop %v2868
    %v2882 = vmul.f32 1.0, %v2881
    %v2883 = vrcp.pop %v2869
    %v2884 = vmul.f32 1.0, %v2883
    %v2885 = vrcp.pop %v2870
    %v2886 = vmul.f32 1.0, %v2885
    %v2888 = vsel %vm1291, %v2872, 0
    %v2891 = vsel %vm1291, %v2874, 0
    %v2894 = vsel %vm1291, %v2876, 0
    %v2897 = vsel %vm1291, %v2878, 0
    %v2900 = vsel %vm1291, %v2880, 0
    %v2903 = vsel %vm1291, %v2882, 0
    %v2906 = vsel %vm1291, %v2884, 0
    %v2909 = vsel %vm1291, %v2886, 0
    %2911 = vmatprep.subr.mxu0 0.0
    %2912 = vmatpush1.msra.mxu0 %v1306
    %2913 = vmatprep.subr.mxu0 0.0
    %2914 = vmatpush1.msra.mxu0 0.0
    %2915 = vmatprep.subr.mxu0 0.0
    %2916 = vmatpush1.msra.mxu0 0.0
    %2917 = vmatprep.subr.mxu0 0.0
    %2918 = vmatpush1.msra.mxu0 0.0
    %2919 = vmatprep.subr.mxu0 0.0
    %2920 = vmatpush1.msra.mxu0 0.0
    %2921 = vmatprep.subr.mxu0 0.0
    %2922 = vmatpush1.msra.mxu0 0.0
    %2923 = vmatprep.subr.mxu0 0.0
    %2924 = vmatpush1.msra.mxu0 0.0
    %2925 = vmatprep.subr.mxu0 0.0
    %2926 = vmatpush1.msra.mxu0 0.0
    %2927 = vmatprep.subr.mxu0 0.0
    %2928 = vmatpush1.msra.mxu0 0.0
    %2929 = vmatprep.subr.mxu0 0.0
    %2930 = vmatpush1.msra.mxu0 0.0
    %2931 = vmatprep.subr.mxu0 0.0
    %2932 = vmatpush1.msra.mxu0 0.0
    %2933 = vmatprep.subr.mxu0 0.0
    %2934 = vmatpush1.msra.mxu0 0.0
    %2935 = vmatprep.subr.mxu0 0.0
    %2936 = vmatpush1.msra.mxu0 0.0
    %2937 = vmatprep.subr.mxu0 0.0
    %2938 = vmatpush1.msra.mxu0 0.0
    %2939 = vmatprep.subr.mxu0 0.0
    %2940 = vmatpush1.msra.mxu0 0.0
    %2941 = vmatprep.subr.mxu0 0.0
    %2942 = vmatpush1.msra.mxu0 0.0
    %2943 = vmatprep.subr.mxu0 0.0
    %2944 = vmatpush1.msra.mxu0 0.0
    %2945 = vmatprep.subr.mxu0 0.0
    %2946 = vmatpush1.msra.mxu0 0.0
    %2947 = vmatprep.subr.mxu0 0.0
    %2948 = vmatpush1.msra.mxu0 0.0
    %2949 = vmatprep.subr.mxu0 0.0
    %2950 = vmatpush1.msra.mxu0 0.0
    %2951 = vmatprep.subr.mxu0 0.0
    %2952 = vmatpush1.msra.mxu0 0.0
    %2953 = vmatprep.subr.mxu0 0.0
    %2954 = vmatpush1.msra.mxu0 0.0
    %2955 = vmatprep.subr.mxu0 0.0
    %2956 = vmatpush1.msra.mxu0 0.0
    %2957 = vmatprep.subr.mxu0 0.0
    %2958 = vmatpush1.msra.mxu0 0.0
    %2959 = vmatprep.subr.mxu0 0.0
    %2960 = vmatpush1.msra.mxu0 0.0
    %2961 = vmatprep.subr.mxu0 0.0
    %2962 = vmatpush1.msra.mxu0 0.0
    %2963 = vmatprep.subr.mxu0 0.0
    %2964 = vmatpush1.msra.mxu0 0.0
    %2965 = vmatprep.subr.mxu0 0.0
    %2966 = vmatpush1.msra.mxu0 0.0
    %2967 = vmatprep.subr.mxu0 0.0
    %2968 = vmatpush1.msra.mxu0 0.0
    %2969 = vmatprep.subr.mxu0 0.0
    %2970 = vmatpush1.msra.mxu0 0.0
    %2971 = vmatprep.subr.mxu0 0.0
    %2972 = vmatpush1.msra.mxu0 0.0
    %2973 = vmatprep.subr.mxu0 0.0
    %2974 = vmatpush1.msra.mxu0 0.0
    %2975 = vmatprep.mubr.f32.mxu0 0.0
    %2976 = vmatmul.mubr.f32.gmra.mrb[0].mxu0 %v2888
    %v2977 = vpop.f32.mrb[0].mxu0
    %v2978 = vadd.f32 0.0, %v2977
    %v2979 = vpop.f32.mrb[0].mxu0
    %2980 = vmatprep.mubr.f32.mxu0 0.0
    %2981 = vmatmul.mubr.f32.gmra.mrb[0].mxu0 %v2891
    %v2982 = vpop.f32.mrb[0].mxu0
    %v2983 = vadd.f32 0.0, %v2982
    %v2984 = vpop.f32.mrb[0].mxu0
    %2985 = vmatprep.mubr.f32.mxu0 0.0
    %2986 = vmatmul.mubr.f32.gmra.mrb[0].mxu0 %v2894
    %v2987 = vpop.f32.mrb[0].mxu0
    %v2988 = vadd.f32 0.0, %v2987
    %v2989 = vpop.f32.mrb[0].mxu0
    %2990 = vmatprep.mubr.f32.mxu0 0.0
    %2991 = vmatmul.mubr.f32.gmra.mrb[0].mxu0 %v2897
    %v2992 = vpop.f32.mrb[0].mxu0
    %v2993 = vadd.f32 0.0, %v2992
    %v2994 = vpop.f32.mrb[0].mxu0
    %2995 = vmatprep.mubr.f32.mxu0 0.0
    %2996 = vmatmul.mubr.f32.gmra.mrb[0].mxu0 %v2900
    %v2997 = vpop.f32.mrb[0].mxu0
    %v2998 = vadd.f32 0.0, %v2997
    %v2999 = vpop.f32.mrb[0].mxu0
    %3000 = vmatprep.mubr.f32.mxu0 0.0
    %3001 = vmatmul.mubr.f32.gmra.mrb[0].mxu0 %v2903
    %v3002 = vpop.f32.mrb[0].mxu0
    %v3003 = vadd.f32 0.0, %v3002
    %v3004 = vpop.f32.mrb[0].mxu0
    %3005 = vmatprep.mubr.f32.mxu0 0.0
    %3006 = vmatmul.mubr.f32.gmra.mrb[0].mxu0 %v2906
    %v3007 = vpop.f32.mrb[0].mxu0
    %v3008 = vadd.f32 0.0, %v3007
    %v3009 = vpop.f32.mrb[0].mxu0
    %3010 = vmatprep.mubr.f32.mxu0 0.0
    %3011 = vmatmul.mubr.f32.gmra.mrb[0].mxu0 %v2909
    %v3012 = vpop.f32.mrb[0].mxu0
    %v3013 = vadd.f32 0.0, %v3012
    %v3014 = vpop.f32.mrb[0].mxu0
    %3015 = vdwg.mxu0
    %v3016 = vmul.f32 %v2399, %v2978
    %v3017 = vmul.f32 %v2400, %v2983
    %v3018 = vmul.f32 %v2401, %v2988
    %v3019 = vmul.f32 %v2402, %v2993
    %v3020 = vmul.f32 %v2403, %v2998
    %v3021 = vmul.f32 %v2404, %v3003
    %v3022 = vmul.f32 %v2405, %v3008
    %v3023 = vmul.f32 %v2406, %v3013
    %v3024 = vadd.f32 %v3016, %v2399
    %v3025 = vadd.f32 %v3017, %v2400
    %v3026 = vadd.f32 %v3018, %v2401
    %v3027 = vadd.f32 %v3019, %v2402
    %v3028 = vadd.f32 %v3020, %v2403
    %v3029 = vadd.f32 %v3021, %v2404
    %v3030 = vadd.f32 %v3022, %v2405
    %v3031 = vadd.f32 %v3023, %v2406
    %3033 = vset.pattern.permute.xlu0 0
    %3034 = vperm.xlu0 %3033, %v1490
    %v3035 = vpop.permute.xlu0 %3034
    %3038 = vset.pattern.permute.xlu0 0
    %3039 = vperm.xlu0 %3038, %v1491
    %v3040 = vpop.permute.xlu0 %3039
    %3043 = vset.pattern.permute.xlu0 0
    %3044 = vperm.xlu0 %3043, %v1492
    %v3045 = vpop.permute.xlu0 %3044
    %3048 = vset.pattern.permute.xlu0 0
    %3049 = vperm.xlu0 %3048, %v1493
    %v3050 = vpop.permute.xlu0 %3049
    %3053 = vset.pattern.permute.xlu0 0
    %3054 = vperm.xlu0 %3053, %v1494
    %v3055 = vpop.permute.xlu0 %3054
    %3058 = vset.pattern.permute.xlu0 0
    %3059 = vperm.xlu0 %3058, %v1495
    %v3060 = vpop.permute.xlu0 %3059
    %3063 = vset.pattern.permute.xlu0 0
    %3064 = vperm.xlu0 %3063, %v1496
    %v3065 = vpop.permute.xlu0 %3064
    %3068 = vset.pattern.permute.xlu0 0
    %3069 = vperm.xlu0 %3068, %v1497
    %v3070 = vpop.permute.xlu0 %3069
    %v3072 = vmul.f32 %v3024, %v3035
    %v3073 = vmul.f32 %v3025, %v3040
    %v3074 = vmul.f32 %v3026, %v3045
    %v3075 = vmul.f32 %v3027, %v3050
    %v3076 = vmul.f32 %v3028, %v3055
    %v3077 = vmul.f32 %v3029, %v3060
    %v3078 = vmul.f32 %v3030, %v3065
    %v3079 = vmul.f32 %v3031, %v3070
    %3081 = vset.pattern.permute.xlu0 0
    %3082 = vperm.xlu0 %3081, %v1498
    %v3083 = vpop.permute.xlu0 %3082
    %3086 = vset.pattern.permute.xlu0 0
    %3087 = vperm.xlu0 %3086, %v1499
    %v3088 = vpop.permute.xlu0 %3087
    %3091 = vset.pattern.permute.xlu0 0
    %3092 = vperm.xlu0 %3091, %v1500
    %v3093 = vpop.permute.xlu0 %3092
    %3096 = vset.pattern.permute.xlu0 0
    %3097 = vperm.xlu0 %3096, %v1501
    %v3098 = vpop.permute.xlu0 %3097
    %3101 = vset.pattern.permute.xlu0 0
    %3102 = vperm.xlu0 %3101, %v1502
    %v3103 = vpop.permute.xlu0 %3102
    %3106 = vset.pattern.permute.xlu0 0
    %3107 = vperm.xlu0 %3106, %v1503
    %v3108 = vpop.permute.xlu0 %3107
    %3111 = vset.pattern.permute.xlu0 0
    %3112 = vperm.xlu0 %3111, %v1504
    %v3113 = vpop.permute.xlu0 %3112
    %3116 = vset.pattern.permute.xlu0 0
    %3117 = vperm.xlu0 %3116, %v1505
    %v3118 = vpop.permute.xlu0 %3117
    %v3120 = vadd.f32 %v3072, %v3083
    %v3121 = vadd.f32 %v3073, %v3088
    %v3122 = vadd.f32 %v3074, %v3093
    %v3123 = vadd.f32 %v3075, %v3098
    %v3124 = vadd.f32 %v3076, %v3103
    %v3125 = vadd.f32 %v3077, %v3108
    %v3126 = vadd.f32 %v3078, %v3113
    %v3127 = vadd.f32 %v3079, %v3118
    %v3128 = vadd.f32 %v3120, %v2353
    %v3129 = vadd.f32 %v3121, %v2358
    %v3130 = vadd.f32 %v3122, %v2363
    %v3131 = vadd.f32 %v3123, %v2368
    %v3132 = vadd.f32 %v3124, %v2373
    %v3133 = vadd.f32 %v3125, %v2378
    %v3134 = vadd.f32 %v3126, %v2383
    %v3135 = vadd.f32 %v3127, %v2388
    %v3136 = vmax.f32 %v3128, 0.0
    %v3137 = vmax.f32 %v3129, 0.0
    %v3138 = vmax.f32 %v3130, 0.0
    %v3139 = vmax.f32 %v3131, 0.0
    %v3140 = vmax.f32 %v3132, 0.0
    %v3141 = vmax.f32 %v3133, 0.0
    %v3142 = vmax.f32 %v3134, 0.0
    %v3143 = vmax.f32 %v3135, 0.0
    %3144 = vst.msk [vmem:[%s65] sm:$0xff] %vm621, %v3136
    %3145 = vst.msk [vmem:[%s65 + $0x8] sm:$0xff] %vm621, %v3137
    %3146 = vst.msk [vmem:[%s65 + $0x10] sm:$0xff] %vm621, %v3138
    %3147 = vst.msk [vmem:[%s65 + $0x18] sm:$0xff] %vm621, %v3139
    %3148 = vst.msk [vmem:[%s65 + $0x20] sm:$0xff] %vm621, %v3140
    %3149 = vst.msk [vmem:[%s65 + $0x28] sm:$0xff] %vm621, %v3141
    %3150 = vst.msk [vmem:[%s65 + $0x30] sm:$0xff] %vm621, %v3142
    %3151 = vst.msk [vmem:[%s65 + $0x38] sm:$0xff] %vm621, %v3143
    %s3152 = sld [smem:[#allocation2 + $0x2]]
    %v3153 = vld [vmem:[%s61] sm:$0xff]
    %v3154 = vld [vmem:[%s61 + $0x8] sm:$0xff]
    %v3155 = vld [vmem:[%s61 + $0x10] sm:$0xff]
    %v3156 = vld [vmem:[%s61 + $0x18] sm:$0xff]
    %v3157 = vld [vmem:[%s61 + $0x20] sm:$0xff]
    %v3158 = vld [vmem:[%s61 + $0x28] sm:$0xff]
    %v3159 = vld [vmem:[%s61 + $0x30] sm:$0xff]
    %v3160 = vld [vmem:[%s61 + $0x38] sm:$0xff]
    %v3161 = vld [vmem:[%s61 + $0x40] sm:$0xff]
    %v3162 = vld [vmem:[%s61 + $0x48] sm:$0xff]
    %v3163 = vld [vmem:[%s61 + $0x50] sm:$0xff]
    %v3164 = vld [vmem:[%s61 + $0x58] sm:$0xff]
    %v3165 = vld [vmem:[%s61 + $0x60] sm:$0xff]
    %v3166 = vld [vmem:[%s61 + $0x68] sm:$0xff]
    %v3167 = vld [vmem:[%s61 + $0x70] sm:$0xff]
    %v3168 = vld [vmem:[%s61 + $0x78] sm:$0xff]
    %v3169 = vld [vmem:[%s61 + $0x80] sm:$0xff]
    %v3170 = vld [vmem:[%s61 + $0x88] sm:$0xff]
    %v3171 = vld [vmem:[%s61 + $0x90] sm:$0xff]
    %v3172 = vld [vmem:[%s61 + $0x98] sm:$0xff]
    %v3173 = vld [vmem:[%s61 + $0xa0] sm:$0xff]
    %v3174 = vld [vmem:[%s61 + $0xa8] sm:$0xff]
    %v3175 = vld [vmem:[%s61 + $0xb0] sm:$0xff]
    %v3176 = vld [vmem:[%s61 + $0xb8] sm:$0xff]
    %v3177 = vld [vmem:[%s61 + $0xc0] sm:$0xff]
    %v3178 = vld [vmem:[%s61 + $0xc8] sm:$0xff]
    %v3179 = vld [vmem:[%s61 + $0xd0] sm:$0xff]
    %v3180 = vld [vmem:[%s61 + $0xd8] sm:$0xff]
    %v3181 = vld [vmem:[%s61 + $0xe0] sm:$0xff]
    %v3182 = vld [vmem:[%s61 + $0xe8] sm:$0xff]
    %v3183 = vld [vmem:[%s61 + $0xf0] sm:$0xff]
    %v3184 = vld [vmem:[%s61 + $0xf8] sm:$0xff]
    %v3185 = vld [vmem:[%s61 + $0x100] sm:$0xff]
    %v3186 = vld [vmem:[%s61 + $0x108] sm:$0xff]
    %v3187 = vld [vmem:[%s61 + $0x110] sm:$0xff]
    %v3188 = vld [vmem:[%s61 + $0x118] sm:$0xff]
    %v3189 = vld [vmem:[%s61 + $0x120] sm:$0xff]
    %v3190 = vld [vmem:[%s61 + $0x128] sm:$0xff]
    %v3191 = vld [vmem:[%s61 + $0x130] sm:$0xff]
    %v3192 = vld [vmem:[%s61 + $0x138] sm:$0xff]
    %v3193 = vld [vmem:[%s61 + $0x140] sm:$0xff]
    %v3194 = vld [vmem:[%s61 + $0x148] sm:$0xff]
    %v3195 = vld [vmem:[%s61 + $0x150] sm:$0xff]
    %v3196 = vld [vmem:[%s61 + $0x158] sm:$0xff]
    %v3197 = vld [vmem:[%s61 + $0x160] sm:$0xff]
    %v3198 = vld [vmem:[%s61 + $0x168] sm:$0xff]
    %v3199 = vld [vmem:[%s61 + $0x170] sm:$0xff]
    %v3200 = vld [vmem:[%s61 + $0x178] sm:$0xff]
    %v3201 = vld [vmem:[%s61 + $0x180] sm:$0xff]
    %v3202 = vld [vmem:[%s61 + $0x188] sm:$0xff]
    %v3203 = vld [vmem:[%s61 + $0x190] sm:$0xff]
    %v3204 = vld [vmem:[%s61 + $0x198] sm:$0xff]
    %v3205 = vld [vmem:[%s61 + $0x1a0] sm:$0xff]
    %v3206 = vld [vmem:[%s61 + $0x1a8] sm:$0xff]
    %v3207 = vld [vmem:[%s61 + $0x1b0] sm:$0xff]
    %v3208 = vld [vmem:[%s61 + $0x1b8] sm:$0xff]
    %v3209 = vld [vmem:[%s61 + $0x1c0] sm:$0xff]
    %v3210 = vld [vmem:[%s61 + $0x1c8] sm:$0xff]
    %v3211 = vld [vmem:[%s61 + $0x1d0] sm:$0xff]
    %v3212 = vld [vmem:[%s61 + $0x1d8] sm:$0xff]
    %v3213 = vld [vmem:[%s61 + $0x1e0] sm:$0xff]
    %v3214 = vld [vmem:[%s61 + $0x1e8] sm:$0xff]
    %v3215 = vld [vmem:[%s61 + $0x1f0] sm:$0xff]
    %v3216 = vld [vmem:[%s61 + $0x1f8] sm:$0xff]
    %v3217 = vld [vmem:[%s61 + $0x200] sm:$0xff]
    %v3218 = vld [vmem:[%s61 + $0x208] sm:$0xff]
    %v3219 = vld [vmem:[%s61 + $0x210] sm:$0xff]
    %v3220 = vld [vmem:[%s61 + $0x218] sm:$0xff]
    %v3221 = vld [vmem:[%s61 + $0x220] sm:$0xff]
    %v3222 = vld [vmem:[%s61 + $0x228] sm:$0xff]
    %v3223 = vld [vmem:[%s61 + $0x230] sm:$0xff]
    %v3224 = vld [vmem:[%s61 + $0x238] sm:$0xff]
    %v3225 = vld [vmem:[%s61 + $0x240] sm:$0xff]
    %v3226 = vld [vmem:[%s61 + $0x248] sm:$0xff]
    %v3227 = vld [vmem:[%s61 + $0x250] sm:$0xff]
    %v3228 = vld [vmem:[%s61 + $0x258] sm:$0xff]
    %v3229 = vld [vmem:[%s61 + $0x260] sm:$0xff]
    %v3230 = vld [vmem:[%s61 + $0x268] sm:$0xff]
    %v3231 = vld [vmem:[%s61 + $0x270] sm:$0xff]
    %v3232 = vld [vmem:[%s61 + $0x278] sm:$0xff]
    %v3233 = vld [vmem:[%s61 + $0x280] sm:$0xff]
    %v3234 = vld [vmem:[%s61 + $0x288] sm:$0xff]
    %v3235 = vld [vmem:[%s61 + $0x290] sm:$0xff]
    %v3236 = vld [vmem:[%s61 + $0x298] sm:$0xff]
    %v3237 = vld [vmem:[%s61 + $0x2a0] sm:$0xff]
    %v3238 = vld [vmem:[%s61 + $0x2a8] sm:$0xff]
    %v3239 = vld [vmem:[%s61 + $0x2b0] sm:$0xff]
    %v3240 = vld [vmem:[%s61 + $0x2b8] sm:$0xff]
    %v3241 = vld [vmem:[%s49] sm:$0xff]
    %v3242 = vld [vmem:[%s49 + $0x8] sm:$0xff]
    %v3243 = vld [vmem:[%s49 + $0x10] sm:$0xff]
    %v3244 = vld [vmem:[%s49 + $0x18] sm:$0xff]
    %v3245 = vld [vmem:[%s49 + $0x20] sm:$0xff]
    %v3246 = vld [vmem:[%s49 + $0x28] sm:$0xff]
    %v3247 = vld [vmem:[%s49 + $0x30] sm:$0xff]
    %v3248 = vld [vmem:[%s49 + $0x38] sm:$0xff]
    %v3249 = vld [vmem:[%s51] sm:$0xff]
    %v3250 = vld [vmem:[%s51 + $0x8] sm:$0xff]
    %v3251 = vld [vmem:[%s51 + $0x10] sm:$0xff]
    %v3252 = vld [vmem:[%s51 + $0x18] sm:$0xff]
    %v3253 = vld [vmem:[%s51 + $0x20] sm:$0xff]
    %v3254 = vld [vmem:[%s51 + $0x28] sm:$0xff]
    %v3255 = vld [vmem:[%s51 + $0x30] sm:$0xff]
    %v3256 = vld [vmem:[%s51 + $0x38] sm:$0xff]
    %3258 = vset.pattern.permute.xlu0 0
    %3259 = vperm.xlu0 %3258, %v3249
    %v3260 = vpop.permute.xlu0 %3259
    %3263 = vset.pattern.permute.xlu0 0
    %3264 = vperm.xlu0 %3263, %v3250
    %v3265 = vpop.permute.xlu0 %3264
    %3268 = vset.pattern.permute.xlu0 0
    %3269 = vperm.xlu0 %3268, %v3251
    %v3270 = vpop.permute.xlu0 %3269
    %3273 = vset.pattern.permute.xlu0 0
    %3274 = vperm.xlu0 %3273, %v3252
    %v3275 = vpop.permute.xlu0 %3274
    %3278 = vset.pattern.permute.xlu0 0
    %3279 = vperm.xlu0 %3278, %v3253
    %v3280 = vpop.permute.xlu0 %3279
    %3283 = vset.pattern.permute.xlu0 0
    %3284 = vperm.xlu0 %3283, %v3254
    %v3285 = vpop.permute.xlu0 %3284
    %3288 = vset.pattern.permute.xlu0 0
    %3289 = vperm.xlu0 %3288, %v3255
    %v3290 = vpop.permute.xlu0 %3289
    %3293 = vset.pattern.permute.xlu0 0
    %3294 = vperm.xlu0 %3293, %v3256
    %v3295 = vpop.permute.xlu0 %3294
    %v3298 = vsel %vm2560, %v3241, 0
    %v3301 = vsel %vm2560, %v3242, 0
    %v3304 = vsel %vm2560, %v3243, 0
    %v3307 = vsel %vm2560, %v3244, 0
    %v3310 = vsel %vm2560, %v3245, 0
    %v3313 = vsel %vm2560, %v3246, 0
    %v3316 = vsel %vm2560, %v3247, 0
    %v3319 = vsel %vm2560, %v3248, 0
    %3321 = vmatprep.subr.mxu0 0.0
    %3322 = vmatpush1.msra.mxu0 %v3136
    %3323 = vmatprep.subr.mxu0 0.0
    %3324 = vmatpush1.msra.mxu0 %v3137
    %3325 = vmatprep.subr.mxu0 0.0
    %3326 = vmatpush1.msra.mxu0 %v3138
    %3327 = vmatprep.subr.mxu0 0.0
    %3328 = vmatpush1.msra.mxu0 %v3139
    %3329 = vmatprep.subr.mxu0 0.0
    %3330 = vmatpush1.msra.mxu0 %v3140
    %3331 = vmatprep.subr.mxu0 0.0
    %3332 = vmatpush1.msra.mxu0 %v3141
    %3333 = vmatprep.subr.mxu0 0.0
    %3334 = vmatpush1.msra.mxu0 %v3142
    %3335 = vmatprep.subr.mxu0 0.0
    %3336 = vmatpush1.msra.mxu0 %v3143
    %3337 = vmatprep.subr.mxu0 0.0
    %3338 = vmatpush1.msra.mxu0 0.0
    %3339 = vmatprep.subr.mxu0 0.0
    %3340 = vmatpush1.msra.mxu0 0.0
    %3341 = vmatprep.subr.mxu0 0.0
    %3342 = vmatpush1.msra.mxu0 0.0
    %3343 = vmatprep.subr.mxu0 0.0
    %3344 = vmatpush1.msra.mxu0 0.0
    %3345 = vmatprep.subr.mxu0 0.0
    %3346 = vmatpush1.msra.mxu0 0.0
    %3347 = vmatprep.subr.mxu0 0.0
    %3348 = vmatpush1.msra.mxu0 0.0
    %3349 = vmatprep.subr.mxu0 0.0
    %3350 = vmatpush1.msra.mxu0 0.0
    %3351 = vmatprep.subr.mxu0 0.0
    %3352 = vmatpush1.msra.mxu0 0.0
    %3353 = vmatprep.subr.mxu0 0.0
    %3354 = vmatpush1.msra.mxu0 0.0
    %3355 = vmatprep.subr.mxu0 0.0
    %3356 = vmatpush1.msra.mxu0 0.0
    %3357 = vmatprep.subr.mxu0 0.0
    %3358 = vmatpush1.msra.mxu0 0.0
    %3359 = vmatprep.subr.mxu0 0.0
    %3360 = vmatpush1.msra.mxu0 0.0
    %3361 = vmatprep.subr.mxu0 0.0
    %3362 = vmatpush1.msra.mxu0 0.0
    %3363 = vmatprep.subr.mxu0 0.0
    %3364 = vmatpush1.msra.mxu0 0.0
    %3365 = vmatprep.subr.mxu0 0.0
    %3366 = vmatpush1.msra.mxu0 0.0
    %3367 = vmatprep.subr.mxu0 0.0
    %3368 = vmatpush1.msra.mxu0 0.0
    %3369 = vmatprep.subr.mxu0 0.0
    %3370 = vmatpush1.msra.mxu0 0.0
    %3371 = vmatprep.subr.mxu0 0.0
    %3372 = vmatpush1.msra.mxu0 0.0
    %3373 = vmatprep.subr.mxu0 0.0
    %3374 = vmatpush1.msra.mxu0 0.0
    %3375 = vmatprep.subr.mxu0 0.0
    %3376 = vmatpush1.msra.mxu0 0.0
    %3377 = vmatprep.subr.mxu0 0.0
    %3378 = vmatpush1.msra.mxu0 0.0
    %3379 = vmatprep.subr.mxu0 0.0
    %3380 = vmatpush1.msra.mxu0 0.0
    %3381 = vmatprep.subr.mxu0 0.0
    %3382 = vmatpush1.msra.mxu0 0.0
    %3383 = vmatprep.subr.mxu0 0.0
    %3384 = vmatpush1.msra.mxu0 0.0
    %3385 = vmatprep.mubr.f32.mxu0 0.0
    %3386 = vmatmul.mubr.f32.gmra.mrb[0].mxu0 %v3298
    %v3387 = vpop.f32.mrb[0].mxu0
    %v3388 = vadd.f32 %v3260, %v3387
    %v3389 = vpop.f32.mrb[0].mxu0
    %3390 = vmatprep.mubr.f32.mxu0 0.0
    %3391 = vmatmul.mubr.f32.gmra.mrb[0].mxu0 %v3301
    %v3392 = vpop.f32.mrb[0].mxu0
    %v3393 = vadd.f32 %v3265, %v3392
    %v3394 = vpop.f32.mrb[0].mxu0
    %3395 = vmatprep.mubr.f32.mxu0 0.0
    %3396 = vmatmul.mubr.f32.gmra.mrb[0].mxu0 %v3304
    %v3397 = vpop.f32.mrb[0].mxu0
    %v3398 = vadd.f32 %v3270, %v3397
    %v3399 = vpop.f32.mrb[0].mxu0
    %3400 = vmatprep.mubr.f32.mxu0 0.0
    %3401 = vmatmul.mubr.f32.gmra.mrb[0].mxu0 %v3307
    %v3402 = vpop.f32.mrb[0].mxu0
    %v3403 = vadd.f32 %v3275, %v3402
    %v3404 = vpop.f32.mrb[0].mxu0
    %3405 = vmatprep.mubr.f32.mxu0 0.0
    %3406 = vmatmul.mubr.f32.gmra.mrb[0].mxu0 %v3310
    %v3407 = vpop.f32.mrb[0].mxu0
    %v3408 = vadd.f32 %v3280, %v3407
    %v3409 = vpop.f32.mrb[0].mxu0
    %3410 = vmatprep.mubr.f32.mxu0 0.0
    %3411 = vmatmul.mubr.f32.gmra.mrb[0].mxu0 %v3313
    %v3412 = vpop.f32.mrb[0].mxu0
    %v3413 = vadd.f32 %v3285, %v3412
    %v3414 = vpop.f32.mrb[0].mxu0
    %3415 = vmatprep.mubr.f32.mxu0 0.0
    %3416 = vmatmul.mubr.f32.gmra.mrb[0].mxu0 %v3316
    %v3417 = vpop.f32.mrb[0].mxu0
    %v3418 = vadd.f32 %v3290, %v3417
    %v3419 = vpop.f32.mrb[0].mxu0
    %3420 = vmatprep.mubr.f32.mxu0 0.0
    %3421 = vmatmul.mubr.f32.gmra.mrb[0].mxu0 %v3319
    %v3422 = vpop.f32.mrb[0].mxu0
    %v3423 = vadd.f32 %v3295, %v3422
    %v3424 = vpop.f32.mrb[0].mxu0
    %3425 = vdwg.mxu0
    %3426 = vxpose.xlu0.b32.start [1/16] %v3388, 128
    %3427 = vxpose.xlu0.b32.cont [2/16] %v3393, 128
    %3428 = vxpose.xlu0.b32.cont [3/16] %v3398, 128
    %3429 = vxpose.xlu0.b32.cont [4/16] %v3403, 128
    %3430 = vxpose.xlu0.b32.cont [5/16] 0.0, 128
    %3431 = vxpose.xlu0.b32.cont [6/16] 0.0, 128
    %3432 = vxpose.xlu0.b32.cont [7/16] 0.0, 128
    %3433 = vxpose.xlu0.b32.cont [8/16] 0.0, 128
    %3434 = vxpose.xlu0.b32.cont [9/16] 0.0, 128
    %3435 = vxpose.xlu0.b32.cont [10/16] 0.0, 128
    %3436 = vxpose.xlu0.b32.cont [11/16] 0.0, 128
    %3437 = vxpose.xlu0.b32.cont [12/16] 0.0, 128
    %3438 = vxpose.xlu0.b32.cont [13/16] 0.0, 128
    %3439 = vxpose.xlu0.b32.cont [14/16] 0.0, 128
    %3440 = vxpose.xlu0.b32.cont [15/16] 0.0, 128
    %3441 = vxpose.xlu0.b32.end [16/16] 0.0, 128
    %v3442 = vpop.trf.xlu0
    %v3443 = vpop.trf.xlu0
    %v3444 = vpop.trf.xlu0
    %v3445 = vpop.trf.xlu0
    %v3446 = vpop.trf.xlu0
    %v3447 = vpop.trf.xlu0
    %v3448 = vpop.trf.xlu0
    %v3449 = vpop.trf.xlu0
    %v3450 = vpop.trf.xlu0
    %v3451 = vpop.trf.xlu0
    %v3452 = vpop.trf.xlu0
    %v3453 = vpop.trf.xlu0
    %v3454 = vpop.trf.xlu0
    %v3455 = vpop.trf.xlu0
    %v3456 = vpop.trf.xlu0
    %v3457 = vpop.trf.xlu0
    %v3459 = vsel %vm1061, %v3442, 0
    %v3462 = vsel %vm1061, %v3443, 0
    %v3465 = vsel %vm1061, %v3444, 0
    %v3468 = vsel %vm1061, %v3445, 0
    %v3471 = vsel %vm1061, %v3446, 0
    %v3474 = vsel %vm1061, %v3447, 0
    %v3477 = vsel %vm1061, %v3448, 0
    %v3480 = vsel %vm1061, %v3449, 0
    %v3483 = vsel %vm1061, %v3450, 0
    %v3486 = vsel %vm1061, %v3451, 0
    %v3489 = vsel %vm1061, %v3452, 0
    %v3492 = vsel %vm1061, %v3453, 0
    %v3495 = vsel %vm1061, %v3454, 0
    %v3498 = vsel %vm1061, %v3455, 0
    %v3501 = vsel %vm1061, %v3456, 0
    %v3504 = vsel %vm1061, %v3457, 0
    %3506 = vmatprep.subr.mxu0 0.0
    %3507 = vmatpush1.msra.mxu0 %v3408
    %3508 = vmatprep.subr.mxu0 0.0
    %3509 = vmatpush1.msra.mxu0 %v3413
    %3510 = vmatprep.subr.mxu0 0.0
    %3511 = vmatpush1.msra.mxu0 %v3418
    %3512 = vmatprep.subr.mxu0 0.0
    %3513 = vmatpush1.msra.mxu0 %v3423
    %3514 = vmatprep.subr.mxu0 0.0
    %3515 = vmatpush1.msra.mxu0 0.0
    %3516 = vmatprep.subr.mxu0 0.0
    %3517 = vmatpush1.msra.mxu0 0.0
    %3518 = vmatprep.subr.mxu0 0.0
    %3519 = vmatpush1.msra.mxu0 0.0
    %3520 = vmatprep.subr.mxu0 0.0
    %3521 = vmatpush1.msra.mxu0 0.0
    %3522 = vmatprep.subr.mxu0 0.0
    %3523 = vmatpush1.msra.mxu0 0.0
    %3524 = vmatprep.subr.mxu0 0.0
    %3525 = vmatpush1.msra.mxu0 0.0
    %3526 = vmatprep.subr.mxu0 0.0
    %3527 = vmatpush1.msra.mxu0 0.0
    %3528 = vmatprep.subr.mxu0 0.0
    %3529 = vmatpush1.msra.mxu0 0.0
    %3530 = vmatprep.subr.mxu0 0.0
    %3531 = vmatpush1.msra.mxu0 0.0
    %3532 = vmatprep.subr.mxu0 0.0
    %3533 = vmatpush1.msra.mxu0 0.0
    %3534 = vmatprep.subr.mxu0 0.0
    %3535 = vmatpush1.msra.mxu0 0.0
    %3536 = vmatprep.subr.mxu0 0.0
    %3537 = vmatpush1.msra.mxu0 0.0
    %3538 = vmatprep.subr.mxu0 0.0
    %3539 = vmatpush1.msra.mxu0 0.0
    %3540 = vmatprep.subr.mxu0 0.0
    %3541 = vmatpush1.msra.mxu0 0.0
    %3542 = vmatprep.subr.mxu0 0.0
    %3543 = vmatpush1.msra.mxu0 0.0
    %3544 = vmatprep.subr.mxu0 0.0
    %3545 = vmatpush1.msra.mxu0 0.0
    %3546 = vmatprep.subr.mxu0 0.0
    %3547 = vmatpush1.msra.mxu0 0.0
    %3548 = vmatprep.subr.mxu0 0.0
    %3549 = vmatpush1.msra.mxu0 0.0
    %3550 = vmatprep.subr.mxu0 0.0
    %3551 = vmatpush1.msra.mxu0 0.0
    %3552 = vmatprep.subr.mxu0 0.0
    %3553 = vmatpush1.msra.mxu0 0.0
    %3554 = vmatprep.subr.mxu0 0.0
    %3555 = vmatpush1.msra.mxu0 0.0
    %3556 = vmatprep.subr.mxu0 0.0
    %3557 = vmatpush1.msra.mxu0 0.0
    %3558 = vmatprep.subr.mxu0 0.0
    %3559 = vmatpush1.msra.mxu0 0.0
    %3560 = vmatprep.subr.mxu0 0.0
    %3561 = vmatpush1.msra.mxu0 0.0
    %3562 = vmatprep.subr.mxu0 0.0
    %3563 = vmatpush1.msra.mxu0 0.0
    %3564 = vmatprep.subr.mxu0 0.0
    %3565 = vmatpush1.msra.mxu0 0.0
    %3566 = vmatprep.subr.mxu0 0.0
    %3567 = vmatpush1.msra.mxu0 0.0
    %3568 = vmatprep.subr.mxu0 0.0
    %3569 = vmatpush1.msra.mxu0 0.0
    %3570 = vmatprep.mubr.f32.mxu0 0.0
    %3571 = vmatmul.mubr.f32.gmra.mrb[0].mxu0 %v3459
    %v3572 = vpop.f32.mrb[0].mxu0
    %v3573 = vadd.f32 0.0, %v3572
    %v3574 = vpop.f32.mrb[0].mxu0
    %3575 = vmatprep.mubr.f32.mxu0 0.0
    %3576 = vmatmul.mubr.f32.gmra.mrb[0].mxu0 %v3462
    %v3577 = vpop.f32.mrb[0].mxu0
    %v3578 = vadd.f32 0.0, %v3577
    %v3579 = vpop.f32.mrb[0].mxu0
    %3580 = vmatprep.mubr.f32.mxu0 0.0
    %3581 = vmatmul.mubr.f32.gmra.mrb[0].mxu0 %v3465
    %v3582 = vpop.f32.mrb[0].mxu0
    %v3583 = vadd.f32 0.0, %v3582
    %v3584 = vpop.f32.mrb[0].mxu0
    %3585 = vmatprep.mubr.f32.mxu0 0.0
    %3586 = vmatmul.mubr.f32.gmra.mrb[0].mxu0 %v3468
    %v3587 = vpop.f32.mrb[0].mxu0
    %v3588 = vadd.f32 0.0, %v3587
    %v3589 = vpop.f32.mrb[0].mxu0
    %3590 = vmatprep.mubr.f32.mxu0 0.0
    %3591 = vmatmul.mubr.f32.gmra.mrb[0].mxu0 %v3471
    %v3592 = vpop.f32.mrb[0].mxu0
    %v3593 = vadd.f32 0.0, %v3592
    %v3594 = vpop.f32.mrb[0].mxu0
    %3595 = vmatprep.mubr.f32.mxu0 0.0
    %3596 = vmatmul.mubr.f32.gmra.mrb[0].mxu0 %v3474
    %v3597 = vpop.f32.mrb[0].mxu0
    %v3598 = vadd.f32 0.0, %v3597
    %v3599 = vpop.f32.mrb[0].mxu0
    %3600 = vmatprep.mubr.f32.mxu0 0.0
    %3601 = vmatmul.mubr.f32.gmra.mrb[0].mxu0 %v3477
    %v3602 = vpop.f32.mrb[0].mxu0
    %v3603 = vadd.f32 0.0, %v3602
    %v3604 = vpop.f32.mrb[0].mxu0
    %3605 = vmatprep.mubr.f32.mxu0 0.0
    %3606 = vmatmul.mubr.f32.gmra.mrb[0].mxu0 %v3480
    %v3607 = vpop.f32.mrb[0].mxu0
    %v3608 = vadd.f32 0.0, %v3607
    %v3609 = vpop.f32.mrb[0].mxu0
    %3610 = vmatprep.mubr.f32.mxu0 0.0
    %3611 = vmatmul.mubr.f32.gmra.mrb[0].mxu0 %v3483
    %v3612 = vpop.f32.mrb[0].mxu0
    %v3613 = vadd.f32 0.0, %v3612
    %v3614 = vpop.f32.mrb[0].mxu0
    %3615 = vmatprep.mubr.f32.mxu0 0.0
    %3616 = vmatmul.mubr.f32.gmra.mrb[0].mxu0 %v3486
    %v3617 = vpop.f32.mrb[0].mxu0
    %v3618 = vadd.f32 0.0, %v3617
    %v3619 = vpop.f32.mrb[0].mxu0
    %3620 = vmatprep.mubr.f32.mxu0 0.0
    %3621 = vmatmul.mubr.f32.gmra.mrb[0].mxu0 %v3489
    %v3622 = vpop.f32.mrb[0].mxu0
    %v3623 = vadd.f32 0.0, %v3622
    %v3624 = vpop.f32.mrb[0].mxu0
    %3625 = vmatprep.mubr.f32.mxu0 0.0
    %3626 = vmatmul.mubr.f32.gmra.mrb[0].mxu0 %v3492
    %v3627 = vpop.f32.mrb[0].mxu0
    %v3628 = vadd.f32 0.0, %v3627
    %v3629 = vpop.f32.mrb[0].mxu0
    %3630 = vmatprep.mubr.f32.mxu0 0.0
    %3631 = vmatmul.mubr.f32.gmra.mrb[0].mxu0 %v3495
    %v3632 = vpop.f32.mrb[0].mxu0
    %v3633 = vadd.f32 0.0, %v3632
    %v3634 = vpop.f32.mrb[0].mxu0
    %3635 = vmatprep.mubr.f32.mxu0 0.0
    %3636 = vmatmul.mubr.f32.gmra.mrb[0].mxu0 %v3498
    %v3637 = vpop.f32.mrb[0].mxu0
    %v3638 = vadd.f32 0.0, %v3637
    %v3639 = vpop.f32.mrb[0].mxu0
    %3640 = vmatprep.mubr.f32.mxu0 0.0
    %3641 = vmatmul.mubr.f32.gmra.mrb[0].mxu0 %v3501
    %v3642 = vpop.f32.mrb[0].mxu0
    %v3643 = vadd.f32 0.0, %v3642
    %v3644 = vpop.f32.mrb[0].mxu0
    %3645 = vmatprep.mubr.f32.mxu0 0.0
    %3646 = vmatmul.mubr.f32.gmra.mrb[0].mxu0 %v3504
    %v3647 = vpop.f32.mrb[0].mxu0
    %v3648 = vadd.f32 0.0, %v3647
    %v3649 = vpop.f32.mrb[0].mxu0
    %3650 = vdwg.mxu0
    %v3651 = vtanh.pop %v3573
    %v3652 = vtanh.pop %v3578
    %v3653 = vtanh.pop %v3583
    %v3654 = vtanh.pop %v3588
    %v3655 = vtanh.pop %v3593
    %v3656 = vtanh.pop %v3598
    %v3657 = vtanh.pop %v3603
    %v3658 = vtanh.pop %v3608
    %v3659 = vtanh.pop %v3613
    %v3660 = vtanh.pop %v3618
    %v3661 = vtanh.pop %v3623
    %v3662 = vtanh.pop %v3628
    %v3663 = vtanh.pop %v3633
    %v3664 = vtanh.pop %v3638
    %v3665 = vtanh.pop %v3643
    %v3666 = vtanh.pop %v3648
    %v3667 = vld [vmem:[%s47] sm:$0xff]
    %v3668 = vld [vmem:[%s47 + $0x8] sm:$0xff]
    %v3669 = vld [vmem:[%s47 + $0x10] sm:$0xff]
    %v3670 = vld [vmem:[%s47 + $0x18] sm:$0xff]
    %v3671 = vld [vmem:[%s47 + $0x20] sm:$0xff]
    %v3672 = vld [vmem:[%s47 + $0x28] sm:$0xff]
    %v3673 = vld [vmem:[%s47 + $0x30] sm:$0xff]
    %v3674 = vld [vmem:[%s47 + $0x38] sm:$0xff]
    %v3675 = vld [vmem:[%s47 + $0x40] sm:$0xff]
    %v3676 = vld [vmem:[%s47 + $0x48] sm:$0xff]
    %v3677 = vld [vmem:[%s47 + $0x50] sm:$0xff]
    %v3678 = vld [vmem:[%s47 + $0x58] sm:$0xff]
    %v3679 = vld [vmem:[%s47 + $0x60] sm:$0xff]
    %v3680 = vld [vmem:[%s47 + $0x68] sm:$0xff]
    %v3681 = vld [vmem:[%s47 + $0x70] sm:$0xff]
    %v3682 = vld [vmem:[%s47 + $0x78] sm:$0xf]
    %v3683 = vstv %s3152
    %v3684 = vmul.f32 %v3651, %v3683
    %v3685 = vmul.f32 %v3652, %v3683
    %v3686 = vmul.f32 %v3653, %v3683
    %v3687 = vmul.f32 %v3654, %v3683
    %v3688 = vmul.f32 %v3655, %v3683
    %v3689 = vmul.f32 %v3656, %v3683
    %v3690 = vmul.f32 %v3657, %v3683
    %v3691 = vmul.f32 %v3658, %v3683
    %v3692 = vmul.f32 %v3659, %v3683
    %v3693 = vmul.f32 %v3660, %v3683
    %v3694 = vmul.f32 %v3661, %v3683
    %v3695 = vmul.f32 %v3662, %v3683
    %v3696 = vmul.f32 %v3663, %v3683
    %v3697 = vmul.f32 %v3664, %v3683
    %v3698 = vmul.f32 %v3665, %v3683
    %v3699 = vmul.f32 %v3666, %v3683
    %v3700 = vmul.f32 %v3684, %v148
    %v3701 = vmul.f32 %v3685, %v149
    %v3702 = vmul.f32 %v3686, %v150
    %v3703 = vmul.f32 %v3687, %v151
    %v3704 = vmul.f32 %v3688, %v152
    %v3705 = vmul.f32 %v3689, %v153
    %v3706 = vmul.f32 %v3690, %v154
    %v3707 = vmul.f32 %v3691, %v155
    %v3708 = vmul.f32 %v3692, %v156
    %v3709 = vmul.f32 %v3693, %v157
    %v3710 = vmul.f32 %v3694, %v158
    %v3711 = vmul.f32 %v3695, %v159
    %v3712 = vmul.f32 %v3696, %v160
    %v3713 = vmul.f32 %v3697, %v161
    %v3714 = vmul.f32 %v3698, %v162
    %v3715 = vmul.f32 %v3699, %v163
    %v3716 = vadd.f32 %v3667, %v3700
    %v3717 = vadd.f32 %v3668, %v3701
    %v3718 = vadd.f32 %v3669, %v3702
    %v3719 = vadd.f32 %v3670, %v3703
    %v3720 = vadd.f32 %v3671, %v3704
    %v3721 = vadd.f32 %v3672, %v3705
    %v3722 = vadd.f32 %v3673, %v3706
    %v3723 = vadd.f32 %v3674, %v3707
    %v3724 = vadd.f32 %v3675, %v3708
    %v3725 = vadd.f32 %v3676, %v3709
    %v3726 = vadd.f32 %v3677, %v3710
    %v3727 = vadd.f32 %v3678, %v3711
    %v3728 = vadd.f32 %v3679, %v3712
    %v3729 = vadd.f32 %v3680, %v3713
    %v3730 = vadd.f32 %v3681, %v3714
    %v3731 = vadd.f32 %v3682, %v3715
    %v3733 = vsel %vm621, %v3136, 0
    %v3736 = vsel %vm621, %v3137, 0
    %v3739 = vsel %vm621, %v3138, 0
    %v3742 = vsel %vm621, %v3139, 0
    %v3745 = vsel %vm621, %v3140, 0
    %v3748 = vsel %vm621, %v3141, 0
    %v3751 = vsel %vm621, %v3142, 0
    %v3754 = vsel %vm621, %v3143, 0
    %v3757 = vsel %vm625, %v3731, 0
    %3759 = vmatprep.subr.mxu0 0.0
    %3760 = vmatpush1.msra.mxu0 %v3716
    %3761 = vmatprep.subr.mxu0 0.0
    %3762 = vmatpush1.msra.mxu0 %v3717
    %3763 = vmatprep.subr.mxu0 0.0
    %3764 = vmatpush1.msra.mxu0 %v3718
    %3765 = vmatprep.subr.mxu0 0.0
    %3766 = vmatpush1.msra.mxu0 %v3719
    %3767 = vmatprep.subr.mxu0 0.0
    %3768 = vmatpush1.msra.mxu0 %v3720
    %3769 = vmatprep.subr.mxu0 0.0
    %3770 = vmatpush1.msra.mxu0 %v3721
    %3771 = vmatprep.subr.mxu0 0.0
    %3772 = vmatpush1.msra.mxu0 %v3722
    %3773 = vmatprep.subr.mxu0 0.0
    %3774 = vmatpush1.msra.mxu0 %v3723
    %3775 = vmatprep.subr.mxu0 0.0
    %3776 = vmatpush1.msra.mxu0 %v3724
    %3777 = vmatprep.subr.mxu0 0.0
    %3778 = vmatpush1.msra.mxu0 %v3725
    %3779 = vmatprep.subr.mxu0 0.0
    %3780 = vmatpush1.msra.mxu0 %v3726
    %3781 = vmatprep.subr.mxu0 0.0
    %3782 = vmatpush1.msra.mxu0 %v3727
    %3783 = vmatprep.subr.mxu0 0.0
    %3784 = vmatpush1.msra.mxu0 %v3728
    %3785 = vmatprep.subr.mxu0 0.0
    %3786 = vmatpush1.msra.mxu0 %v3729
    %3787 = vmatprep.subr.mxu0 0.0
    %3788 = vmatpush1.msra.mxu0 %v3730
    %3789 = vmatprep.subr.mxu0 0.0
    %3790 = vmatpush1.msra.mxu0 %v3757
    %3791 = vmatprep.subr.mxu0 0.0
    %3792 = vmatpush1.msra.mxu0 0.0
    %3793 = vmatprep.subr.mxu0 0.0
    %3794 = vmatpush1.msra.mxu0 0.0
    %3795 = vmatprep.subr.mxu0 0.0
    %3796 = vmatpush1.msra.mxu0 0.0
    %3797 = vmatprep.subr.mxu0 0.0
    %3798 = vmatpush1.msra.mxu0 0.0
    %3799 = vmatprep.subr.mxu0 0.0
    %3800 = vmatpush1.msra.mxu0 0.0
    %3801 = vmatprep.subr.mxu0 0.0
    %3802 = vmatpush1.msra.mxu0 0.0
    %3803 = vmatprep.subr.mxu0 0.0
    %3804 = vmatpush1.msra.mxu0 0.0
    %3805 = vmatprep.subr.mxu0 0.0
    %3806 = vmatpush1.msra.mxu0 0.0
    %3807 = vmatprep.subr.mxu0 0.0
    %3808 = vmatpush1.msra.mxu0 0.0
    %3809 = vmatprep.subr.mxu0 0.0
    %3810 = vmatpush1.msra.mxu0 0.0
    %3811 = vmatprep.subr.mxu0 0.0
    %3812 = vmatpush1.msra.mxu0 0.0
    %3813 = vmatprep.subr.mxu0 0.0
    %3814 = vmatpush1.msra.mxu0 0.0
    %3815 = vmatprep.subr.mxu0 0.0
    %3816 = vmatpush1.msra.mxu0 0.0
    %3817 = vmatprep.subr.mxu0 0.0
    %3818 = vmatpush1.msra.mxu0 0.0
    %3819 = vmatprep.subr.mxu0 0.0
    %3820 = vmatpush1.msra.mxu0 0.0
    %3821 = vmatprep.subr.mxu0 0.0
    %3822 = vmatpush1.msra.mxu0 0.0
    %3823 = vmatprep.mubr.f32.mxu0 0.0
    %3824 = vmatmul.mubr.f32.gmra.mrb[0].mxu0 %v3733
    %v3825 = vpop.f32.mrb[0].mxu0
    %v3826 = vadd.f32 0.0, %v3825
    %v3827 = vpop.f32.mrb[0].mxu0
    %3828 = vmatprep.mubr.f32.mxu0 0.0
    %3829 = vmatmul.mubr.f32.gmra.mrb[0].mxu0 %v3736
    %v3830 = vpop.f32.mrb[0].mxu0
    %v3831 = vadd.f32 0.0, %v3830
    %v3832 = vpop.f32.mrb[0].mxu0
    %3833 = vmatprep.mubr.f32.mxu0 0.0
    %3834 = vmatmul.mubr.f32.gmra.mrb[0].mxu0 %v3739
    %v3835 = vpop.f32.mrb[0].mxu0
    %v3836 = vadd.f32 0.0, %v3835
    %v3837 = vpop.f32.mrb[0].mxu0
    %3838 = vmatprep.mubr.f32.mxu0 0.0
    %3839 = vmatmul.mubr.f32.gmra.mrb[0].mxu0 %v3742
    %v3840 = vpop.f32.mrb[0].mxu0
    %v3841 = vadd.f32 0.0, %v3840
    %v3842 = vpop.f32.mrb[0].mxu0
    %3843 = vmatprep.mubr.f32.mxu0 0.0
    %3844 = vmatmul.mubr.f32.gmra.mrb[0].mxu0 %v3745
    %v3845 = vpop.f32.mrb[0].mxu0
    %v3846 = vadd.f32 0.0, %v3845
    %v3847 = vpop.f32.mrb[0].mxu0
    %3848 = vmatprep.mubr.f32.mxu0 0.0
    %3849 = vmatmul.mubr.f32.gmra.mrb[0].mxu0 %v3748
    %v3850 = vpop.f32.mrb[0].mxu0
    %v3851 = vadd.f32 0.0, %v3850
    %v3852 = vpop.f32.mrb[0].mxu0
    %3853 = vmatprep.mubr.f32.mxu0 0.0
    %3854 = vmatmul.mubr.f32.gmra.mrb[0].mxu0 %v3751
    %v3855 = vpop.f32.mrb[0].mxu0
    %v3856 = vadd.f32 0.0, %v3855
    %v3857 = vpop.f32.mrb[0].mxu0
    %3858 = vmatprep.mubr.f32.mxu0 0.0
    %3859 = vmatmul.mubr.f32.gmra.mrb[0].mxu0 %v3754
    %v3860 = vpop.f32.mrb[0].mxu0
    %v3861 = vadd.f32 0.0, %v3860
    %v3862 = vpop.f32.mrb[0].mxu0
    %3863 = vdwg.mxu0
    %v3864 = vld [vmem:[%s53] sm:$0xff]
    %v3865 = vld [vmem:[%s53 + $0x8] sm:$0xff]
    %v3866 = vld [vmem:[%s53 + $0x10] sm:$0xff]
    %v3867 = vld [vmem:[%s53 + $0x18] sm:$0xff]
    %v3868 = vld [vmem:[%s53 + $0x20] sm:$0xff]
    %v3869 = vld [vmem:[%s53 + $0x28] sm:$0xff]
    %v3870 = vld [vmem:[%s53 + $0x30] sm:$0xff]
    %v3871 = vld [vmem:[%s53 + $0x38] sm:$0xff]
    %v3872 = vld [vmem:[%s53 + $0x40] sm:$0xff]
    %v3873 = vld [vmem:[%s53 + $0x48] sm:$0xff]
    %v3874 = vld [vmem:[%s53 + $0x50] sm:$0xff]
    %v3875 = vld [vmem:[%s53 + $0x58] sm:$0xff]
    %v3876 = vld [vmem:[%s53 + $0x60] sm:$0xff]
    %v3877 = vld [vmem:[%s53 + $0x68] sm:$0xff]
    %v3878 = vld [vmem:[%s53 + $0x70] sm:$0xff]
    %v3879 = vld [vmem:[%s53 + $0x78] sm:$0xff]
    %3881 = vset.pattern.permute.xlu0 0
    %3882 = vperm.xlu0 %3881, %v3153
    %v3883 = vpop.permute.xlu0 %3882
    %3886 = vset.pattern.permute.xlu0 0
    %3887 = vperm.xlu0 %3886, %v3154
    %v3888 = vpop.permute.xlu0 %3887
    %3891 = vset.pattern.permute.xlu0 0
    %3892 = vperm.xlu0 %3891, %v3155
    %v3893 = vpop.permute.xlu0 %3892
    %3896 = vset.pattern.permute.xlu0 0
    %3897 = vperm.xlu0 %3896, %v3156
    %v3898 = vpop.permute.xlu0 %3897
    %3901 = vset.pattern.permute.xlu0 0
    %3902 = vperm.xlu0 %3901, %v3157
    %v3903 = vpop.permute.xlu0 %3902
    %3906 = vset.pattern.permute.xlu0 0
    %3907 = vperm.xlu0 %3906, %v3158
    %v3908 = vpop.permute.xlu0 %3907
    %3911 = vset.pattern.permute.xlu0 0
    %3912 = vperm.xlu0 %3911, %v3159
    %v3913 = vpop.permute.xlu0 %3912
    %3916 = vset.pattern.permute.xlu0 0
    %3917 = vperm.xlu0 %3916, %v3160
    %v3918 = vpop.permute.xlu0 %3917
    %3921 = vset.pattern.permute.xlu0 0
    %3922 = vperm.xlu0 %3921, %v3161
    %v3923 = vpop.permute.xlu0 %3922
    %3926 = vset.pattern.permute.xlu0 0
    %3927 = vperm.xlu0 %3926, %v3162
    %v3928 = vpop.permute.xlu0 %3927
    %3931 = vset.pattern.permute.xlu0 0
    %3932 = vperm.xlu0 %3931, %v3163
    %v3933 = vpop.permute.xlu0 %3932
    %3936 = vset.pattern.permute.xlu0 0
    %3937 = vperm.xlu0 %3936, %v3164
    %v3938 = vpop.permute.xlu0 %3937
    %3941 = vset.pattern.permute.xlu0 0
    %3942 = vperm.xlu0 %3941, %v3165
    %v3943 = vpop.permute.xlu0 %3942
    %3946 = vset.pattern.permute.xlu0 0
    %3947 = vperm.xlu0 %3946, %v3166
    %v3948 = vpop.permute.xlu0 %3947
    %3951 = vset.pattern.permute.xlu0 0
    %3952 = vperm.xlu0 %3951, %v3167
    %v3953 = vpop.permute.xlu0 %3952
    %3956 = vset.pattern.permute.xlu0 0
    %3957 = vperm.xlu0 %3956, %v3168
    %v3958 = vpop.permute.xlu0 %3957
    %v3961 = vsel %vm2560, %v3864, 0
    %v3964 = vsel %vm2560, %v3865, 0
    %v3967 = vsel %vm2560, %v3866, 0
    %v3970 = vsel %vm2560, %v3867, 0
    %v3973 = vsel %vm2560, %v3868, 0
    %v3976 = vsel %vm2560, %v3869, 0
    %v3979 = vsel %vm2560, %v3870, 0
    %v3982 = vsel %vm2560, %v3871, 0
    %v3985 = vsel %vm2560, %v3872, 0
    %v3988 = vsel %vm2560, %v3873, 0
    %v3991 = vsel %vm2560, %v3874, 0
    %v3994 = vsel %vm2560, %v3875, 0
    %v3997 = vsel %vm2560, %v3876, 0
    %v4000 = vsel %vm2560, %v3877, 0
    %v4003 = vsel %vm2560, %v3878, 0
    %v4006 = vsel %vm2560, %v3879, 0
    %4008 = vmatprep.subr.mxu0 0.0
    %4009 = vmatpush1.msra.mxu0 %v3826
    %4010 = vmatprep.subr.mxu0 0.0
    %4011 = vmatpush1.msra.mxu0 %v3831
    %4012 = vmatprep.subr.mxu0 0.0
    %4013 = vmatpush1.msra.mxu0 %v3836
    %4014 = vmatprep.subr.mxu0 0.0
    %4015 = vmatpush1.msra.mxu0 %v3841
    %4016 = vmatprep.subr.mxu0 0.0
    %4017 = vmatpush1.msra.mxu0 %v3846
    %4018 = vmatprep.subr.mxu0 0.0
    %4019 = vmatpush1.msra.mxu0 %v3851
    %4020 = vmatprep.subr.mxu0 0.0
    %4021 = vmatpush1.msra.mxu0 %v3856
    %4022 = vmatprep.subr.mxu0 0.0
    %4023 = vmatpush1.msra.mxu0 %v3861
    %4024 = vmatprep.subr.mxu0 0.0
    %4025 = vmatpush1.msra.mxu0 0.0
    %4026 = vmatprep.subr.mxu0 0.0
    %4027 = vmatpush1.msra.mxu0 0.0
    %4028 = vmatprep.subr.mxu0 0.0
    %4029 = vmatpush1.msra.mxu0 0.0
    %4030 = vmatprep.subr.mxu0 0.0
    %4031 = vmatpush1.msra.mxu0 0.0
    %4032 = vmatprep.subr.mxu0 0.0
    %4033 = vmatpush1.msra.mxu0 0.0
    %4034 = vmatprep.subr.mxu0 0.0
    %4035 = vmatpush1.msra.mxu0 0.0
    %4036 = vmatprep.subr.mxu0 0.0
    %4037 = vmatpush1.msra.mxu0 0.0
    %4038 = vmatprep.subr.mxu0 0.0
    %4039 = vmatpush1.msra.mxu0 0.0
    %4040 = vmatprep.subr.mxu0 0.0
    %4041 = vmatpush1.msra.mxu0 0.0
    %4042 = vmatprep.subr.mxu0 0.0
    %4043 = vmatpush1.msra.mxu0 0.0
    %4044 = vmatprep.subr.mxu0 0.0
    %4045 = vmatpush1.msra.mxu0 0.0
    %4046 = vmatprep.subr.mxu0 0.0
    %4047 = vmatpush1.msra.mxu0 0.0
    %4048 = vmatprep.subr.mxu0 0.0
    %4049 = vmatpush1.msra.mxu0 0.0
    %4050 = vmatprep.subr.mxu0 0.0
    %4051 = vmatpush1.msra.mxu0 0.0
    %4052 = vmatprep.subr.mxu0 0.0
    %4053 = vmatpush1.msra.mxu0 0.0
    %4054 = vmatprep.subr.mxu0 0.0
    %4055 = vmatpush1.msra.mxu0 0.0
    %4056 = vmatprep.subr.mxu0 0.0
    %4057 = vmatpush1.msra.mxu0 0.0
    %4058 = vmatprep.subr.mxu0 0.0
    %4059 = vmatpush1.msra.mxu0 0.0
    %4060 = vmatprep.subr.mxu0 0.0
    %4061 = vmatpush1.msra.mxu0 0.0
    %4062 = vmatprep.subr.mxu0 0.0
    %4063 = vmatpush1.msra.mxu0 0.0
    %4064 = vmatprep.subr.mxu0 0.0
    %4065 = vmatpush1.msra.mxu0 0.0
    %4066 = vmatprep.subr.mxu0 0.0
    %4067 = vmatpush1.msra.mxu0 0.0
    %4068 = vmatprep.subr.mxu0 0.0
    %4069 = vmatpush1.msra.mxu0 0.0
    %4070 = vmatprep.subr.mxu0 0.0
    %4071 = vmatpush1.msra.mxu0 0.0
    %4072 = vmatprep.mubr.f32.mxu0 0.0
    %4073 = vmatmul.mubr.f32.gmra.mrb[0].mxu0 %v3961
    %v4074 = vpop.f32.mrb[0].mxu0
    %v4075 = vadd.f32 %v3883, %v4074
    %v4076 = vpop.f32.mrb[0].mxu0
    %4077 = vmatprep.mubr.f32.mxu0 0.0
    %4078 = vmatmul.mubr.f32.gmra.mrb[0].mxu0 %v3964
    %v4079 = vpop.f32.mrb[0].mxu0
    %v4080 = vadd.f32 %v3888, %v4079
    %v4081 = vpop.f32.mrb[0].mxu0
    %4082 = vmatprep.mubr.f32.mxu0 0.0
    %4083 = vmatmul.mubr.f32.gmra.mrb[0].mxu0 %v3967
    %v4084 = vpop.f32.mrb[0].mxu0
    %v4085 = vadd.f32 %v3893, %v4084
    %v4086 = vpop.f32.mrb[0].mxu0
    %4087 = vmatprep.mubr.f32.mxu0 0.0
    %4088 = vmatmul.mubr.f32.gmra.mrb[0].mxu0 %v3970
    %v4089 = vpop.f32.mrb[0].mxu0
    %v4090 = vadd.f32 %v3898, %v4089
    %v4091 = vpop.f32.mrb[0].mxu0
    %4092 = vmatprep.mubr.f32.mxu0 0.0
    %4093 = vmatmul.mubr.f32.gmra.mrb[0].mxu0 %v3973
    %v4094 = vpop.f32.mrb[0].mxu0
    %v4095 = vadd.f32 %v3903, %v4094
    %v4096 = vpop.f32.mrb[0].mxu0
    %4097 = vmatprep.mubr.f32.mxu0 0.0
    %4098 = vmatmul.mubr.f32.gmra.mrb[0].mxu0 %v3976
    %v4099 = vpop.f32.mrb[0].mxu0
    %v4100 = vadd.f32 %v3908, %v4099
    %v4101 = vpop.f32.mrb[0].mxu0
    %4102 = vmatprep.mubr.f32.mxu0 0.0
    %4103 = vmatmul.mubr.f32.gmra.mrb[0].mxu0 %v3979
    %v4104 = vpop.f32.mrb[0].mxu0
    %v4105 = vadd.f32 %v3913, %v4104
    %v4106 = vpop.f32.mrb[0].mxu0
    %4107 = vmatprep.mubr.f32.mxu0 0.0
    %4108 = vmatmul.mubr.f32.gmra.mrb[0].mxu0 %v3982
    %v4109 = vpop.f32.mrb[0].mxu0
    %v4110 = vadd.f32 %v3918, %v4109
    %v4111 = vpop.f32.mrb[0].mxu0
    %4112 = vmatprep.mubr.f32.mxu0 0.0
    %4113 = vmatmul.mubr.f32.gmra.mrb[0].mxu0 %v3985
    %v4114 = vpop.f32.mrb[0].mxu0
    %v4115 = vadd.f32 %v3923, %v4114
    %v4116 = vpop.f32.mrb[0].mxu0
    %4117 = vmatprep.mubr.f32.mxu0 0.0
    %4118 = vmatmul.mubr.f32.gmra.mrb[0].mxu0 %v3988
    %v4119 = vpop.f32.mrb[0].mxu0
    %v4120 = vadd.f32 %v3928, %v4119
    %v4121 = vpop.f32.mrb[0].mxu0
    %4122 = vmatprep.mubr.f32.mxu0 0.0
    %4123 = vmatmul.mubr.f32.gmra.mrb[0].mxu0 %v3991
    %v4124 = vpop.f32.mrb[0].mxu0
    %v4125 = vadd.f32 %v3933, %v4124
    %v4126 = vpop.f32.mrb[0].mxu0
    %4127 = vmatprep.mubr.f32.mxu0 0.0
    %4128 = vmatmul.mubr.f32.gmra.mrb[0].mxu0 %v3994
    %v4129 = vpop.f32.mrb[0].mxu0
    %v4130 = vadd.f32 %v3938, %v4129
    %v4131 = vpop.f32.mrb[0].mxu0
    %4132 = vmatprep.mubr.f32.mxu0 0.0
    %4133 = vmatmul.mubr.f32.gmra.mrb[0].mxu0 %v3997
    %v4134 = vpop.f32.mrb[0].mxu0
    %v4135 = vadd.f32 %v3943, %v4134
    %v4136 = vpop.f32.mrb[0].mxu0
    %4137 = vmatprep.mubr.f32.mxu0 0.0
    %4138 = vmatmul.mubr.f32.gmra.mrb[0].mxu0 %v4000
    %v4139 = vpop.f32.mrb[0].mxu0
    %v4140 = vadd.f32 %v3948, %v4139
    %v4141 = vpop.f32.mrb[0].mxu0
    %4142 = vmatprep.mubr.f32.mxu0 0.0
    %4143 = vmatmul.mubr.f32.gmra.mrb[0].mxu0 %v4003
    %v4144 = vpop.f32.mrb[0].mxu0
    %v4145 = vadd.f32 %v3953, %v4144
    %v4146 = vpop.f32.mrb[0].mxu0
    %4147 = vmatprep.mubr.f32.mxu0 0.0
    %4148 = vmatmul.mubr.f32.gmra.mrb[0].mxu0 %v4006
    %v4149 = vpop.f32.mrb[0].mxu0
    %v4150 = vadd.f32 %v3958, %v4149
    %v4151 = vpop.f32.mrb[0].mxu0
    %4152 = vdwg.mxu0
    %v4153 = vld [vmem:[%s55] sm:$0xff]
    %v4154 = vld [vmem:[%s55 + $0x8] sm:$0xff]
    %v4155 = vld [vmem:[%s55 + $0x10] sm:$0xff]
    %v4156 = vld [vmem:[%s55 + $0x18] sm:$0xff]
    %v4157 = vld [vmem:[%s55 + $0x20] sm:$0xff]
    %v4158 = vld [vmem:[%s55 + $0x28] sm:$0xff]
    %v4159 = vld [vmem:[%s55 + $0x30] sm:$0xff]
    %v4160 = vld [vmem:[%s55 + $0x38] sm:$0xff]
    %v4161 = vld [vmem:[%s55 + $0x40] sm:$0xff]
    %v4162 = vld [vmem:[%s55 + $0x48] sm:$0xff]
    %v4163 = vld [vmem:[%s55 + $0x50] sm:$0xff]
    %v4164 = vld [vmem:[%s55 + $0x58] sm:$0xff]
    %v4165 = vld [vmem:[%s55 + $0x60] sm:$0xff]
    %v4166 = vld [vmem:[%s55 + $0x68] sm:$0xff]
    %v4167 = vld [vmem:[%s55 + $0x70] sm:$0xff]
    %v4168 = vld [vmem:[%s55 + $0x78] sm:$0xff]
    %4170 = vset.pattern.permute.xlu0 0
    %4171 = vperm.xlu0 %4170, %v3169
    %v4172 = vpop.permute.xlu0 %4171
    %4175 = vset.pattern.permute.xlu0 0
    %4176 = vperm.xlu0 %4175, %v3170
    %v4177 = vpop.permute.xlu0 %4176
    %4180 = vset.pattern.permute.xlu0 0
    %4181 = vperm.xlu0 %4180, %v3171
    %v4182 = vpop.permute.xlu0 %4181
    %4185 = vset.pattern.permute.xlu0 0
    %4186 = vperm.xlu0 %4185, %v3172
    %v4187 = vpop.permute.xlu0 %4186
    %4190 = vset.pattern.permute.xlu0 0
    %4191 = vperm.xlu0 %4190, %v3173
    %v4192 = vpop.permute.xlu0 %4191
    %4195 = vset.pattern.permute.xlu0 0
    %4196 = vperm.xlu0 %4195, %v3174
    %v4197 = vpop.permute.xlu0 %4196
    %4200 = vset.pattern.permute.xlu0 0
    %4201 = vperm.xlu0 %4200, %v3175
    %v4202 = vpop.permute.xlu0 %4201
    %4205 = vset.pattern.permute.xlu0 0
    %4206 = vperm.xlu0 %4205, %v3176
    %v4207 = vpop.permute.xlu0 %4206
    %4210 = vset.pattern.permute.xlu0 0
    %4211 = vperm.xlu0 %4210, %v3177
    %v4212 = vpop.permute.xlu0 %4211
    %4215 = vset.pattern.permute.xlu0 0
    %4216 = vperm.xlu0 %4215, %v3178
    %v4217 = vpop.permute.xlu0 %4216
    %4220 = vset.pattern.permute.xlu0 0
    %4221 = vperm.xlu0 %4220, %v3179
    %v4222 = vpop.permute.xlu0 %4221
    %4225 = vset.pattern.permute.xlu0 0
    %4226 = vperm.xlu0 %4225, %v3180
    %v4227 = vpop.permute.xlu0 %4226
    %4230 = vset.pattern.permute.xlu0 0
    %4231 = vperm.xlu0 %4230, %v3181
    %v4232 = vpop.permute.xlu0 %4231
    %4235 = vset.pattern.permute.xlu0 0
    %4236 = vperm.xlu0 %4235, %v3182
    %v4237 = vpop.permute.xlu0 %4236
    %4240 = vset.pattern.permute.xlu0 0
    %4241 = vperm.xlu0 %4240, %v3183
    %v4242 = vpop.permute.xlu0 %4241
    %4245 = vset.pattern.permute.xlu0 0
    %4246 = vperm.xlu0 %4245, %v3184
    %v4247 = vpop.permute.xlu0 %4246
    %v4250 = vsel %vm2560, %v4153, 0
    %v4253 = vsel %vm2560, %v4154, 0
    %v4256 = vsel %vm2560, %v4155, 0
    %v4259 = vsel %vm2560, %v4156, 0
    %v4262 = vsel %vm2560, %v4157, 0
    %v4265 = vsel %vm2560, %v4158, 0
    %v4268 = vsel %vm2560, %v4159, 0
    %v4271 = vsel %vm2560, %v4160, 0
    %v4274 = vsel %vm2560, %v4161, 0
    %v4277 = vsel %vm2560, %v4162, 0
    %v4280 = vsel %vm2560, %v4163, 0
    %v4283 = vsel %vm2560, %v4164, 0
    %v4286 = vsel %vm2560, %v4165, 0
    %v4289 = vsel %vm2560, %v4166, 0
    %v4292 = vsel %vm2560, %v4167, 0
    %v4295 = vsel %vm2560, %v4168, 0
    %4297 = vmatprep.subr.mxu0 0.0
    %4298 = vmatpush1.msra.mxu0 %v3136
    %4299 = vmatprep.subr.mxu0 0.0
    %4300 = vmatpush1.msra.mxu0 %v3137
    %4301 = vmatprep.subr.mxu0 0.0
    %4302 = vmatpush1.msra.mxu0 %v3138
    %4303 = vmatprep.subr.mxu0 0.0
    %4304 = vmatpush1.msra.mxu0 %v3139
    %4305 = vmatprep.subr.mxu0 0.0
    %4306 = vmatpush1.msra.mxu0 %v3140
    %4307 = vmatprep.subr.mxu0 0.0
    %4308 = vmatpush1.msra.mxu0 %v3141
    %4309 = vmatprep.subr.mxu0 0.0
    %4310 = vmatpush1.msra.mxu0 %v3142
    %4311 = vmatprep.subr.mxu0 0.0
    %4312 = vmatpush1.msra.mxu0 %v3143
    %4313 = vmatprep.subr.mxu0 0.0
    %4314 = vmatpush1.msra.mxu0 0.0
    %4315 = vmatprep.subr.mxu0 0.0
    %4316 = vmatpush1.msra.mxu0 0.0
    %4317 = vmatprep.subr.mxu0 0.0
    %4318 = vmatpush1.msra.mxu0 0.0
    %4319 = vmatprep.subr.mxu0 0.0
    %4320 = vmatpush1.msra.mxu0 0.0
    %4321 = vmatprep.subr.mxu0 0.0
    %4322 = vmatpush1.msra.mxu0 0.0
    %4323 = vmatprep.subr.mxu0 0.0
    %4324 = vmatpush1.msra.mxu0 0.0
    %4325 = vmatprep.subr.mxu0 0.0
    %4326 = vmatpush1.msra.mxu0 0.0
    %4327 = vmatprep.subr.mxu0 0.0
    %4328 = vmatpush1.msra.mxu0 0.0
    %4329 = vmatprep.subr.mxu0 0.0
    %4330 = vmatpush1.msra.mxu0 0.0
    %4331 = vmatprep.subr.mxu0 0.0
    %4332 = vmatpush1.msra.mxu0 0.0
    %4333 = vmatprep.subr.mxu0 0.0
    %4334 = vmatpush1.msra.mxu0 0.0
    %4335 = vmatprep.subr.mxu0 0.0
    %4336 = vmatpush1.msra.mxu0 0.0
    %4337 = vmatprep.subr.mxu0 0.0
    %4338 = vmatpush1.msra.mxu0 0.0
    %4339 = vmatprep.subr.mxu0 0.0
    %4340 = vmatpush1.msra.mxu0 0.0
    %4341 = vmatprep.subr.mxu0 0.0
    %4342 = vmatpush1.msra.mxu0 0.0
    %4343 = vmatprep.subr.mxu0 0.0
    %4344 = vmatpush1.msra.mxu0 0.0
    %4345 = vmatprep.subr.mxu0 0.0
    %4346 = vmatpush1.msra.mxu0 0.0
    %4347 = vmatprep.subr.mxu0 0.0
    %4348 = vmatpush1.msra.mxu0 0.0
    %4349 = vmatprep.subr.mxu0 0.0
    %4350 = vmatpush1.msra.mxu0 0.0
    %4351 = vmatprep.subr.mxu0 0.0
    %4352 = vmatpush1.msra.mxu0 0.0
    %4353 = vmatprep.subr.mxu0 0.0
    %4354 = vmatpush1.msra.mxu0 0.0
    %4355 = vmatprep.subr.mxu0 0.0
    %4356 = vmatpush1.msra.mxu0 0.0
    %4357 = vmatprep.subr.mxu0 0.0
    %4358 = vmatpush1.msra.mxu0 0.0
    %4359 = vmatprep.subr.mxu0 0.0
    %4360 = vmatpush1.msra.mxu0 0.0
    %4361 = vmatprep.mubr.f32.mxu0 0.0
    %4362 = vmatmul.mubr.f32.gmra.mrb[0].mxu0 %v4250
    %v4363 = vpop.f32.mrb[0].mxu0
    %v4364 = vadd.f32 %v4172, %v4363
    %v4365 = vpop.f32.mrb[0].mxu0
    %4366 = vmatprep.mubr.f32.mxu0 0.0
    %4367 = vmatmul.mubr.f32.gmra.mrb[0].mxu0 %v4253
    %v4368 = vpop.f32.mrb[0].mxu0
    %v4369 = vadd.f32 %v4177, %v4368
    %v4370 = vpop.f32.mrb[0].mxu0
    %4371 = vmatprep.mubr.f32.mxu0 0.0
    %4372 = vmatmul.mubr.f32.gmra.mrb[0].mxu0 %v4256
    %v4373 = vpop.f32.mrb[0].mxu0
    %v4374 = vadd.f32 %v4182, %v4373
    %v4375 = vpop.f32.mrb[0].mxu0
    %4376 = vmatprep.mubr.f32.mxu0 0.0
    %4377 = vmatmul.mubr.f32.gmra.mrb[0].mxu0 %v4259
    %v4378 = vpop.f32.mrb[0].mxu0
    %v4379 = vadd.f32 %v4187, %v4378
    %v4380 = vpop.f32.mrb[0].mxu0
    %4381 = vmatprep.mubr.f32.mxu0 0.0
    %4382 = vmatmul.mubr.f32.gmra.mrb[0].mxu0 %v4262
    %v4383 = vpop.f32.mrb[0].mxu0
    %v4384 = vadd.f32 %v4192, %v4383
    %v4385 = vpop.f32.mrb[0].mxu0
    %4386 = vmatprep.mubr.f32.mxu0 0.0
    %4387 = vmatmul.mubr.f32.gmra.mrb[0].mxu0 %v4265
    %v4388 = vpop.f32.mrb[0].mxu0
    %v4389 = vadd.f32 %v4197, %v4388
    %v4390 = vpop.f32.mrb[0].mxu0
    %4391 = vmatprep.mubr.f32.mxu0 0.0
    %4392 = vmatmul.mubr.f32.gmra.mrb[0].mxu0 %v4268
    %v4393 = vpop.f32.mrb[0].mxu0
    %v4394 = vadd.f32 %v4202, %v4393
    %v4395 = vpop.f32.mrb[0].mxu0
    %4396 = vmatprep.mubr.f32.mxu0 0.0
    %4397 = vmatmul.mubr.f32.gmra.mrb[0].mxu0 %v4271
    %v4398 = vpop.f32.mrb[0].mxu0
    %v4399 = vadd.f32 %v4207, %v4398
    %v4400 = vpop.f32.mrb[0].mxu0
    %4401 = vmatprep.mubr.f32.mxu0 0.0
    %4402 = vmatmul.mubr.f32.gmra.mrb[0].mxu0 %v4274
    %v4403 = vpop.f32.mrb[0].mxu0
    %v4404 = vadd.f32 %v4212, %v4403
    %v4405 = vpop.f32.mrb[0].mxu0
    %4406 = vmatprep.mubr.f32.mxu0 0.0
    %4407 = vmatmul.mubr.f32.gmra.mrb[0].mxu0 %v4277
    %v4408 = vpop.f32.mrb[0].mxu0
    %v4409 = vadd.f32 %v4217, %v4408
    %v4410 = vpop.f32.mrb[0].mxu0
    %4411 = vmatprep.mubr.f32.mxu0 0.0
    %4412 = vmatmul.mubr.f32.gmra.mrb[0].mxu0 %v4280
    %v4413 = vpop.f32.mrb[0].mxu0
    %v4414 = vadd.f32 %v4222, %v4413
    %v4415 = vpop.f32.mrb[0].mxu0
    %4416 = vmatprep.mubr.f32.mxu0 0.0
    %4417 = vmatmul.mubr.f32.gmra.mrb[0].mxu0 %v4283
    %v4418 = vpop.f32.mrb[0].mxu0
    %v4419 = vadd.f32 %v4227, %v4418
    %v4420 = vpop.f32.mrb[0].mxu0
    %4421 = vmatprep.mubr.f32.mxu0 0.0
    %4422 = vmatmul.mubr.f32.gmra.mrb[0].mxu0 %v4286
    %v4423 = vpop.f32.mrb[0].mxu0
    %v4424 = vadd.f32 %v4232, %v4423
    %v4425 = vpop.f32.mrb[0].mxu0
    %4426 = vmatprep.mubr.f32.mxu0 0.0
    %4427 = vmatmul.mubr.f32.gmra.mrb[0].mxu0 %v4289
    %v4428 = vpop.f32.mrb[0].mxu0
    %v4429 = vadd.f32 %v4237, %v4428
    %v4430 = vpop.f32.mrb[0].mxu0
    %4431 = vmatprep.mubr.f32.mxu0 0.0
    %4432 = vmatmul.mubr.f32.gmra.mrb[0].mxu0 %v4292
    %v4433 = vpop.f32.mrb[0].mxu0
    %v4434 = vadd.f32 %v4242, %v4433
    %v4435 = vpop.f32.mrb[0].mxu0
    %4436 = vmatprep.mubr.f32.mxu0 0.0
    %4437 = vmatmul.mubr.f32.gmra.mrb[0].mxu0 %v4295
    %v4438 = vpop.f32.mrb[0].mxu0
    %v4439 = vadd.f32 %v4247, %v4438
    %v4440 = vpop.f32.mrb[0].mxu0
    %4441 = vdwg.mxu0
    %v4442 = vadd.f32 %v4075, %v4364
    %v4443 = vadd.f32 %v4080, %v4369
    %v4444 = vadd.f32 %v4085, %v4374
    %v4445 = vadd.f32 %v4090, %v4379
    %v4446 = vadd.f32 %v4095, %v4384
    %v4447 = vadd.f32 %v4100, %v4389
    %v4448 = vadd.f32 %v4105, %v4394
    %v4449 = vadd.f32 %v4110, %v4399
    %v4450 = vadd.f32 %v4115, %v4404
    %v4451 = vadd.f32 %v4120, %v4409
    %v4452 = vadd.f32 %v4125, %v4414
    %v4453 = vadd.f32 %v4130, %v4419
    %v4454 = vadd.f32 %v4135, %v4424
    %v4455 = vadd.f32 %v4140, %v4429
    %v4456 = vadd.f32 %v4145, %v4434
    %v4457 = vadd.f32 %v4150, %v4439
    %v4458 = vmax.f32 %v4442, 0.0
    %v4459 = vmax.f32 %v4443, 0.0
    %v4460 = vmax.f32 %v4444, 0.0
    %v4461 = vmax.f32 %v4445, 0.0
    %v4462 = vmax.f32 %v4446, 0.0
    %v4463 = vmax.f32 %v4447, 0.0
    %v4464 = vmax.f32 %v4448, 0.0
    %v4465 = vmax.f32 %v4449, 0.0
    %v4466 = vmax.f32 %v4450, 0.0
    %v4467 = vmax.f32 %v4451, 0.0
    %v4468 = vmax.f32 %v4452, 0.0
    %v4469 = vmax.f32 %v4453, 0.0
    %v4470 = vmax.f32 %v4454, 0.0
    %v4471 = vmax.f32 %v4455, 0.0
    %v4472 = vmax.f32 %v4456, 0.0
    %v4473 = vmax.f32 %v4457, 0.0
    %v4475 = vsel %vm621, %v4458, 0
    %v4478 = vsel %vm621, %v4459, 0
    %v4481 = vsel %vm621, %v4460, 0
    %v4484 = vsel %vm621, %v4461, 0
    %v4487 = vsel %vm621, %v4462, 0
    %v4490 = vsel %vm621, %v4463, 0
    %v4493 = vsel %vm621, %v4464, 0
    %v4496 = vsel %vm621, %v4465, 0
    %v4499 = vsel %vm621, %v4466, 0
    %v4502 = vsel %vm621, %v4467, 0
    %v4505 = vsel %vm621, %v4468, 0
    %v4508 = vsel %vm621, %v4469, 0
    %v4511 = vsel %vm621, %v4470, 0
    %v4514 = vsel %vm621, %v4471, 0
    %v4517 = vsel %vm621, %v4472, 0
    %v4520 = vsel %vm621, %v4473, 0
    %4522 = vmatprep.subr.mxu0 0.0
    %4523 = vmatpush1.msra.mxu0 %v164
    %4524 = vmatprep.subr.mxu0 0.0
    %4525 = vmatpush1.msra.mxu0 %v165
    %4526 = vmatprep.subr.mxu0 0.0
    %4527 = vmatpush1.msra.mxu0 %v166
    %4528 = vmatprep.subr.mxu0 0.0
    %4529 = vmatpush1.msra.mxu0 %v167
    %4530 = vmatprep.subr.mxu0 0.0
    %4531 = vmatpush1.msra.mxu0 %v168
    %4532 = vmatprep.subr.mxu0 0.0
    %4533 = vmatpush1.msra.mxu0 %v169
    %4534 = vmatprep.subr.mxu0 0.0
    %4535 = vmatpush1.msra.mxu0 %v170
    %4536 = vmatprep.subr.mxu0 0.0
    %4537 = vmatpush1.msra.mxu0 %v171
    %4538 = vmatprep.subr.mxu0 0.0
    %4539 = vmatpush1.msra.mxu0 %v172
    %4540 = vmatprep.subr.mxu0 0.0
    %4541 = vmatpush1.msra.mxu0 %v173
    %4542 = vmatprep.subr.mxu0 0.0
    %4543 = vmatpush1.msra.mxu0 %v174
    %4544 = vmatprep.subr.mxu0 0.0
    %4545 = vmatpush1.msra.mxu0 %v175
    %4546 = vmatprep.subr.mxu0 0.0
    %4547 = vmatpush1.msra.mxu0 %v176
    %4548 = vmatprep.subr.mxu0 0.0
    %4549 = vmatpush1.msra.mxu0 %v177
    %4550 = vmatprep.subr.mxu0 0.0
    %4551 = vmatpush1.msra.mxu0 %v178
    %4552 = vmatprep.subr.mxu0 0.0
    %4553 = vmatpush1.msra.mxu0 %v962
    %4554 = vmatprep.subr.mxu0 0.0
    %4555 = vmatpush1.msra.mxu0 0.0
    %4556 = vmatprep.subr.mxu0 0.0
    %4557 = vmatpush1.msra.mxu0 0.0
    %4558 = vmatprep.subr.mxu0 0.0
    %4559 = vmatpush1.msra.mxu0 0.0
    %4560 = vmatprep.subr.mxu0 0.0
    %4561 = vmatpush1.msra.mxu0 0.0
    %4562 = vmatprep.subr.mxu0 0.0
    %4563 = vmatpush1.msra.mxu0 0.0
    %4564 = vmatprep.subr.mxu0 0.0
    %4565 = vmatpush1.msra.mxu0 0.0
    %4566 = vmatprep.subr.mxu0 0.0
    %4567 = vmatpush1.msra.mxu0 0.0
    %4568 = vmatprep.subr.mxu0 0.0
    %4569 = vmatpush1.msra.mxu0 0.0
    %4570 = vmatprep.subr.mxu0 0.0
    %4571 = vmatpush1.msra.mxu0 0.0
    %4572 = vmatprep.subr.mxu0 0.0
    %4573 = vmatpush1.msra.mxu0 0.0
    %4574 = vmatprep.subr.mxu0 0.0
    %4575 = vmatpush1.msra.mxu0 0.0
    %4576 = vmatprep.subr.mxu0 0.0
    %4577 = vmatpush1.msra.mxu0 0.0
    %4578 = vmatprep.subr.mxu0 0.0
    %4579 = vmatpush1.msra.mxu0 0.0
    %4580 = vmatprep.subr.mxu0 0.0
    %4581 = vmatpush1.msra.mxu0 0.0
    %4582 = vmatprep.subr.mxu0 0.0
    %4583 = vmatpush1.msra.mxu0 0.0
    %4584 = vmatprep.subr.mxu0 0.0
    %4585 = vmatpush1.msra.mxu0 0.0
    %4586 = vmatprep.mubr.f32.mxu0 0.0
    %4587 = vmatmul.mubr.f32.gmra.mrb[0].mxu0 %v4475
    %v4588 = vpop.f32.mrb[0].mxu0
    %v4589 = vadd.f32 0.0, %v4588
    %v4590 = vpop.f32.mrb[0].mxu0
    %4591 = vmatprep.mubr.f32.mxu0 0.0
    %4592 = vmatmul.mubr.f32.gmra.mrb[0].mxu0 %v4478
    %v4593 = vpop.f32.mrb[0].mxu0
    %v4594 = vadd.f32 0.0, %v4593
    %v4595 = vpop.f32.mrb[0].mxu0
    %4596 = vmatprep.mubr.f32.mxu0 0.0
    %4597 = vmatmul.mubr.f32.gmra.mrb[0].mxu0 %v4481
    %v4598 = vpop.f32.mrb[0].mxu0
    %v4599 = vadd.f32 0.0, %v4598
    %v4600 = vpop.f32.mrb[0].mxu0
    %4601 = vmatprep.mubr.f32.mxu0 0.0
    %4602 = vmatmul.mubr.f32.gmra.mrb[0].mxu0 %v4484
    %v4603 = vpop.f32.mrb[0].mxu0
    %v4604 = vadd.f32 0.0, %v4603
    %v4605 = vpop.f32.mrb[0].mxu0
    %4606 = vmatprep.mubr.f32.mxu0 0.0
    %4607 = vmatmul.mubr.f32.gmra.mrb[0].mxu0 %v4487
    %v4608 = vpop.f32.mrb[0].mxu0
    %v4609 = vadd.f32 0.0, %v4608
    %v4610 = vpop.f32.mrb[0].mxu0
    %4611 = vmatprep.mubr.f32.mxu0 0.0
    %4612 = vmatmul.mubr.f32.gmra.mrb[0].mxu0 %v4490
    %v4613 = vpop.f32.mrb[0].mxu0
    %v4614 = vadd.f32 0.0, %v4613
    %v4615 = vpop.f32.mrb[0].mxu0
    %4616 = vmatprep.mubr.f32.mxu0 0.0
    %4617 = vmatmul.mubr.f32.gmra.mrb[0].mxu0 %v4493
    %v4618 = vpop.f32.mrb[0].mxu0
    %v4619 = vadd.f32 0.0, %v4618
    %v4620 = vpop.f32.mrb[0].mxu0
    %4621 = vmatprep.mubr.f32.mxu0 0.0
    %4622 = vmatmul.mubr.f32.gmra.mrb[0].mxu0 %v4496
    %v4623 = vpop.f32.mrb[0].mxu0
    %v4624 = vadd.f32 0.0, %v4623
    %v4625 = vpop.f32.mrb[0].mxu0
    %4626 = vmatprep.mubr.f32.mxu0 0.0
    %4627 = vmatmul.mubr.f32.gmra.mrb[0].mxu0 %v4499
    %v4628 = vpop.f32.mrb[0].mxu0
    %v4629 = vadd.f32 0.0, %v4628
    %v4630 = vpop.f32.mrb[0].mxu0
    %4631 = vmatprep.mubr.f32.mxu0 0.0
    %4632 = vmatmul.mubr.f32.gmra.mrb[0].mxu0 %v4502
    %v4633 = vpop.f32.mrb[0].mxu0
    %v4634 = vadd.f32 0.0, %v4633
    %v4635 = vpop.f32.mrb[0].mxu0
    %4636 = vmatprep.mubr.f32.mxu0 0.0
    %4637 = vmatmul.mubr.f32.gmra.mrb[0].mxu0 %v4505
    %v4638 = vpop.f32.mrb[0].mxu0
    %v4639 = vadd.f32 0.0, %v4638
    %v4640 = vpop.f32.mrb[0].mxu0
    %4641 = vmatprep.mubr.f32.mxu0 0.0
    %4642 = vmatmul.mubr.f32.gmra.mrb[0].mxu0 %v4508
    %v4643 = vpop.f32.mrb[0].mxu0
    %v4644 = vadd.f32 0.0, %v4643
    %v4645 = vpop.f32.mrb[0].mxu0
    %4646 = vmatprep.mubr.f32.mxu0 0.0
    %4647 = vmatmul.mubr.f32.gmra.mrb[0].mxu0 %v4511
    %v4648 = vpop.f32.mrb[0].mxu0
    %v4649 = vadd.f32 0.0, %v4648
    %v4650 = vpop.f32.mrb[0].mxu0
    %4651 = vmatprep.mubr.f32.mxu0 0.0
    %4652 = vmatmul.mubr.f32.gmra.mrb[0].mxu0 %v4514
    %v4653 = vpop.f32.mrb[0].mxu0
    %v4654 = vadd.f32 0.0, %v4653
    %v4655 = vpop.f32.mrb[0].mxu0
    %4656 = vmatprep.mubr.f32.mxu0 0.0
    %4657 = vmatmul.mubr.f32.gmra.mrb[0].mxu0 %v4517
    %v4658 = vpop.f32.mrb[0].mxu0
    %v4659 = vadd.f32 0.0, %v4658
    %v4660 = vpop.f32.mrb[0].mxu0
    %4661 = vmatprep.mubr.f32.mxu0 0.0
    %4662 = vmatmul.mubr.f32.gmra.mrb[0].mxu0 %v4520
    %v4663 = vpop.f32.mrb[0].mxu0
    %v4664 = vadd.f32 0.0, %v4663
    %v4665 = vpop.f32.mrb[0].mxu0
    %4666 = vdwg.mxu0
    %v4667 = vld [vmem:[%s57] sm:$0xff]
    %v4668 = vld [vmem:[%s57 + $0x8] sm:$0xff]
    %v4669 = vld [vmem:[%s57 + $0x10] sm:$0xff]
    %v4670 = vld [vmem:[%s57 + $0x18] sm:$0xff]
    %v4671 = vld [vmem:[%s57 + $0x20] sm:$0xff]
    %v4672 = vld [vmem:[%s57 + $0x28] sm:$0xff]
    %v4673 = vld [vmem:[%s57 + $0x30] sm:$0xff]
    %v4674 = vld [vmem:[%s57 + $0x38] sm:$0xff]
    %4676 = vset.pattern.permute.xlu0 0
    %4677 = vperm.xlu0 %4676, %v3185
    %v4678 = vpop.permute.xlu0 %4677
    %4681 = vset.pattern.permute.xlu0 0
    %4682 = vperm.xlu0 %4681, %v3186
    %v4683 = vpop.permute.xlu0 %4682
    %4686 = vset.pattern.permute.xlu0 0
    %4687 = vperm.xlu0 %4686, %v3187
    %v4688 = vpop.permute.xlu0 %4687
    %4691 = vset.pattern.permute.xlu0 0
    %4692 = vperm.xlu0 %4691, %v3188
    %v4693 = vpop.permute.xlu0 %4692
    %4696 = vset.pattern.permute.xlu0 0
    %4697 = vperm.xlu0 %4696, %v3189
    %v4698 = vpop.permute.xlu0 %4697
    %4701 = vset.pattern.permute.xlu0 0
    %4702 = vperm.xlu0 %4701, %v3190
    %v4703 = vpop.permute.xlu0 %4702
    %4706 = vset.pattern.permute.xlu0 0
    %4707 = vperm.xlu0 %4706, %v3191
    %v4708 = vpop.permute.xlu0 %4707
    %4711 = vset.pattern.permute.xlu0 0
    %4712 = vperm.xlu0 %4711, %v3192
    %v4713 = vpop.permute.xlu0 %4712
    %4715 = vmatprep.subr.mxu0 0.0
    %4716 = vmatpush1.msra.mxu0 %v4589
    %4717 = vmatprep.subr.mxu0 0.0
    %4718 = vmatpush1.msra.mxu0 %v4594
    %4719 = vmatprep.subr.mxu0 0.0
    %4720 = vmatpush1.msra.mxu0 %v4599
    %4721 = vmatprep.subr.mxu0 0.0
    %4722 = vmatpush1.msra.mxu0 %v4604
    %4723 = vmatprep.subr.mxu0 0.0
    %4724 = vmatpush1.msra.mxu0 %v4609
    %4725 = vmatprep.subr.mxu0 0.0
    %4726 = vmatpush1.msra.mxu0 %v4614
    %4727 = vmatprep.subr.mxu0 0.0
    %4728 = vmatpush1.msra.mxu0 %v4619
    %4729 = vmatprep.subr.mxu0 0.0
    %4730 = vmatpush1.msra.mxu0 %v4624
    %4731 = vmatprep.subr.mxu0 0.0
    %4732 = vmatpush1.msra.mxu0 %v4629
    %4733 = vmatprep.subr.mxu0 0.0
    %4734 = vmatpush1.msra.mxu0 %v4634
    %4735 = vmatprep.subr.mxu0 0.0
    %4736 = vmatpush1.msra.mxu0 %v4639
    %4737 = vmatprep.subr.mxu0 0.0
    %4738 = vmatpush1.msra.mxu0 %v4644
    %4739 = vmatprep.subr.mxu0 0.0
    %4740 = vmatpush1.msra.mxu0 %v4649
    %4741 = vmatprep.subr.mxu0 0.0
    %4742 = vmatpush1.msra.mxu0 %v4654
    %4743 = vmatprep.subr.mxu0 0.0
    %4744 = vmatpush1.msra.mxu0 %v4659
    %4745 = vmatprep.subr.mxu0 0.0
    %4746 = vmatpush1.msra.mxu0 %v4664
    %4747 = vmatprep.subr.mxu0 0.0
    %4748 = vmatpush1.msra.mxu0 0.0
    %4749 = vmatprep.subr.mxu0 0.0
    %4750 = vmatpush1.msra.mxu0 0.0
    %4751 = vmatprep.subr.mxu0 0.0
    %4752 = vmatpush1.msra.mxu0 0.0
    %4753 = vmatprep.subr.mxu0 0.0
    %4754 = vmatpush1.msra.mxu0 0.0
    %4755 = vmatprep.subr.mxu0 0.0
    %4756 = vmatpush1.msra.mxu0 0.0
    %4757 = vmatprep.subr.mxu0 0.0
    %4758 = vmatpush1.msra.mxu0 0.0
    %4759 = vmatprep.subr.mxu0 0.0
    %4760 = vmatpush1.msra.mxu0 0.0
    %4761 = vmatprep.subr.mxu0 0.0
    %4762 = vmatpush1.msra.mxu0 0.0
    %4763 = vmatprep.subr.mxu0 0.0
    %4764 = vmatpush1.msra.mxu0 0.0
    %4765 = vmatprep.subr.mxu0 0.0
    %4766 = vmatpush1.msra.mxu0 0.0
    %4767 = vmatprep.subr.mxu0 0.0
    %4768 = vmatpush1.msra.mxu0 0.0
    %4769 = vmatprep.subr.mxu0 0.0
    %4770 = vmatpush1.msra.mxu0 0.0
    %4771 = vmatprep.subr.mxu0 0.0
    %4772 = vmatpush1.msra.mxu0 0.0
    %4773 = vmatprep.subr.mxu0 0.0
    %4774 = vmatpush1.msra.mxu0 0.0
    %4775 = vmatprep.subr.mxu0 0.0
    %4776 = vmatpush1.msra.mxu0 0.0
    %4777 = vmatprep.subr.mxu0 0.0
    %4778 = vmatpush1.msra.mxu0 0.0
    %4779 = vmatprep.mubr.f32.mxu0 0.0
    %4780 = vmatmul.mubr.f32.gmra.mrb[0].mxu0 %v4667
    %v4781 = vpop.f32.mrb[0].mxu0
    %v4782 = vadd.f32 %v4678, %v4781
    %v4783 = vpop.f32.mrb[0].mxu0
    %4784 = vmatprep.mubr.f32.mxu0 0.0
    %4785 = vmatmul.mubr.f32.gmra.mrb[0].mxu0 %v4668
    %v4786 = vpop.f32.mrb[0].mxu0
    %v4787 = vadd.f32 %v4683, %v4786
    %v4788 = vpop.f32.mrb[0].mxu0
    %4789 = vmatprep.mubr.f32.mxu0 0.0
    %4790 = vmatmul.mubr.f32.gmra.mrb[0].mxu0 %v4669
    %v4791 = vpop.f32.mrb[0].mxu0
    %v4792 = vadd.f32 %v4688, %v4791
    %v4793 = vpop.f32.mrb[0].mxu0
    %4794 = vmatprep.mubr.f32.mxu0 0.0
    %4795 = vmatmul.mubr.f32.gmra.mrb[0].mxu0 %v4670
    %v4796 = vpop.f32.mrb[0].mxu0
    %v4797 = vadd.f32 %v4693, %v4796
    %v4798 = vpop.f32.mrb[0].mxu0
    %4799 = vmatprep.mubr.f32.mxu0 0.0
    %4800 = vmatmul.mubr.f32.gmra.mrb[0].mxu0 %v4671
    %v4801 = vpop.f32.mrb[0].mxu0
    %v4802 = vadd.f32 %v4698, %v4801
    %v4803 = vpop.f32.mrb[0].mxu0
    %4804 = vmatprep.mubr.f32.mxu0 0.0
    %4805 = vmatmul.mubr.f32.gmra.mrb[0].mxu0 %v4672
    %v4806 = vpop.f32.mrb[0].mxu0
    %v4807 = vadd.f32 %v4703, %v4806
    %v4808 = vpop.f32.mrb[0].mxu0
    %4809 = vmatprep.mubr.f32.mxu0 0.0
    %4810 = vmatmul.mubr.f32.gmra.mrb[0].mxu0 %v4673
    %v4811 = vpop.f32.mrb[0].mxu0
    %v4812 = vadd.f32 %v4708, %v4811
    %v4813 = vpop.f32.mrb[0].mxu0
    %4814 = vmatprep.mubr.f32.mxu0 0.0
    %4815 = vmatmul.mubr.f32.gmra.mrb[0].mxu0 %v4674
    %v4816 = vpop.f32.mrb[0].mxu0
    %v4817 = vadd.f32 %v4713, %v4816
    %v4818 = vpop.f32.mrb[0].mxu0
    %4819 = vdwg.mxu0
    %v4820 = vmax.f32 %v4782, 0.0
    %v4821 = vmax.f32 %v4787, 0.0
    %v4822 = vmax.f32 %v4792, 0.0
    %v4823 = vmax.f32 %v4797, 0.0
    %v4824 = vmax.f32 %v4802, 0.0
    %v4825 = vmax.f32 %v4807, 0.0
    %v4826 = vmax.f32 %v4812, 0.0
    %v4827 = vmax.f32 %v4817, 0.0
    %v4828 = vld [vmem:[%s59] sm:$0xff]
    %v4829 = vld [vmem:[%s59 + $0x8] sm:$0xff]
    %v4830 = vld [vmem:[%s59 + $0x10] sm:$0xff]
    %v4831 = vld [vmem:[%s59 + $0x18] sm:$0xff]
    %v4832 = vld [vmem:[%s59 + $0x20] sm:$0xff]
    %v4833 = vld [vmem:[%s59 + $0x28] sm:$0xff]
    %v4834 = vld [vmem:[%s59 + $0x30] sm:$0xff]
    %v4835 = vld [vmem:[%s59 + $0x38] sm:$0xff]
    %v4836 = vld [vmem:[%s59 + $0x40] sm:$0xff]
    %v4837 = vld [vmem:[%s59 + $0x48] sm:$0xff]
    %v4838 = vld [vmem:[%s59 + $0x50] sm:$0xff]
    %v4839 = vld [vmem:[%s59 + $0x58] sm:$0xff]
    %v4840 = vld [vmem:[%s59 + $0x60] sm:$0xff]
    %v4841 = vld [vmem:[%s59 + $0x68] sm:$0xff]
    %v4842 = vld [vmem:[%s59 + $0x70] sm:$0xff]
    %v4843 = vld [vmem:[%s59 + $0x78] sm:$0xff]
    %4845 = vset.pattern.permute.xlu0 0
    %4846 = vperm.xlu0 %4845, %v3193
    %v4847 = vpop.permute.xlu0 %4846
    %4850 = vset.pattern.permute.xlu0 0
    %4851 = vperm.xlu0 %4850, %v3194
    %v4852 = vpop.permute.xlu0 %4851
    %4855 = vset.pattern.permute.xlu0 0
    %4856 = vperm.xlu0 %4855, %v3195
    %v4857 = vpop.permute.xlu0 %4856
    %4860 = vset.pattern.permute.xlu0 0
    %4861 = vperm.xlu0 %4860, %v3196
    %v4862 = vpop.permute.xlu0 %4861
    %4865 = vset.pattern.permute.xlu0 0
    %4866 = vperm.xlu0 %4865, %v3197
    %v4867 = vpop.permute.xlu0 %4866
    %4870 = vset.pattern.permute.xlu0 0
    %4871 = vperm.xlu0 %4870, %v3198
    %v4872 = vpop.permute.xlu0 %4871
    %4875 = vset.pattern.permute.xlu0 0
    %4876 = vperm.xlu0 %4875, %v3199
    %v4877 = vpop.permute.xlu0 %4876
    %4880 = vset.pattern.permute.xlu0 0
    %4881 = vperm.xlu0 %4880, %v3200
    %v4882 = vpop.permute.xlu0 %4881
    %4885 = vset.pattern.permute.xlu0 0
    %4886 = vperm.xlu0 %4885, %v3201
    %v4887 = vpop.permute.xlu0 %4886
    %4890 = vset.pattern.permute.xlu0 0
    %4891 = vperm.xlu0 %4890, %v3202
    %v4892 = vpop.permute.xlu0 %4891
    %4895 = vset.pattern.permute.xlu0 0
    %4896 = vperm.xlu0 %4895, %v3203
    %v4897 = vpop.permute.xlu0 %4896
    %4900 = vset.pattern.permute.xlu0 0
    %4901 = vperm.xlu0 %4900, %v3204
    %v4902 = vpop.permute.xlu0 %4901
    %4905 = vset.pattern.permute.xlu0 0
    %4906 = vperm.xlu0 %4905, %v3205
    %v4907 = vpop.permute.xlu0 %4906
    %4910 = vset.pattern.permute.xlu0 0
    %4911 = vperm.xlu0 %4910, %v3206
    %v4912 = vpop.permute.xlu0 %4911
    %4915 = vset.pattern.permute.xlu0 0
    %4916 = vperm.xlu0 %4915, %v3207
    %v4917 = vpop.permute.xlu0 %4916
    %4920 = vset.pattern.permute.xlu0 0
    %4921 = vperm.xlu0 %4920, %v3208
    %v4922 = vpop.permute.xlu0 %4921
    %v4925 = vsel %vm2560, %v4828, 0
    %v4928 = vsel %vm2560, %v4829, 0
    %v4931 = vsel %vm2560, %v4830, 0
    %v4934 = vsel %vm2560, %v4831, 0
    %v4937 = vsel %vm2560, %v4832, 0
    %v4940 = vsel %vm2560, %v4833, 0
    %v4943 = vsel %vm2560, %v4834, 0
    %v4946 = vsel %vm2560, %v4835, 0
    %v4949 = vsel %vm2560, %v4836, 0
    %v4952 = vsel %vm2560, %v4837, 0
    %v4955 = vsel %vm2560, %v4838, 0
    %v4958 = vsel %vm2560, %v4839, 0
    %v4961 = vsel %vm2560, %v4840, 0
    %v4964 = vsel %vm2560, %v4841, 0
    %v4967 = vsel %vm2560, %v4842, 0
    %v4970 = vsel %vm2560, %v4843, 0
    %4972 = vmatprep.subr.mxu0 0.0
    %4973 = vmatpush1.msra.mxu0 %v4820
    %4974 = vmatprep.subr.mxu0 0.0
    %4975 = vmatpush1.msra.mxu0 %v4821
    %4976 = vmatprep.subr.mxu0 0.0
    %4977 = vmatpush1.msra.mxu0 %v4822
    %4978 = vmatprep.subr.mxu0 0.0
    %4979 = vmatpush1.msra.mxu0 %v4823
    %4980 = vmatprep.subr.mxu0 0.0
    %4981 = vmatpush1.msra.mxu0 %v4824
    %4982 = vmatprep.subr.mxu0 0.0
    %4983 = vmatpush1.msra.mxu0 %v4825
    %4984 = vmatprep.subr.mxu0 0.0
    %4985 = vmatpush1.msra.mxu0 %v4826
    %4986 = vmatprep.subr.mxu0 0.0
    %4987 = vmatpush1.msra.mxu0 %v4827
    %4988 = vmatprep.subr.mxu0 0.0
    %4989 = vmatpush1.msra.mxu0 0.0
    %4990 = vmatprep.subr.mxu0 0.0
    %4991 = vmatpush1.msra.mxu0 0.0
    %4992 = vmatprep.subr.mxu0 0.0
    %4993 = vmatpush1.msra.mxu0 0.0
    %4994 = vmatprep.subr.mxu0 0.0
    %4995 = vmatpush1.msra.mxu0 0.0
    %4996 = vmatprep.subr.mxu0 0.0
    %4997 = vmatpush1.msra.mxu0 0.0
    %4998 = vmatprep.subr.mxu0 0.0
    %4999 = vmatpush1.msra.mxu0 0.0
    %5000 = vmatprep.subr.mxu0 0.0
    %5001 = vmatpush1.msra.mxu0 0.0
    %5002 = vmatprep.subr.mxu0 0.0
    %5003 = vmatpush1.msra.mxu0 0.0
    %5004 = vmatprep.subr.mxu0 0.0
    %5005 = vmatpush1.msra.mxu0 0.0
    %5006 = vmatprep.subr.mxu0 0.0
    %5007 = vmatpush1.msra.mxu0 0.0
    %5008 = vmatprep.subr.mxu0 0.0
    %5009 = vmatpush1.msra.mxu0 0.0
    %5010 = vmatprep.subr.mxu0 0.0
    %5011 = vmatpush1.msra.mxu0 0.0
    %5012 = vmatprep.subr.mxu0 0.0
    %5013 = vmatpush1.msra.mxu0 0.0
    %5014 = vmatprep.subr.mxu0 0.0
    %5015 = vmatpush1.msra.mxu0 0.0
    %5016 = vmatprep.subr.mxu0 0.0
    %5017 = vmatpush1.msra.mxu0 0.0
    %5018 = vmatprep.subr.mxu0 0.0
    %5019 = vmatpush1.msra.mxu0 0.0
    %5020 = vmatprep.subr.mxu0 0.0
    %5021 = vmatpush1.msra.mxu0 0.0
    %5022 = vmatprep.subr.mxu0 0.0
    %5023 = vmatpush1.msra.mxu0 0.0
    %5024 = vmatprep.subr.mxu0 0.0
    %5025 = vmatpush1.msra.mxu0 0.0
    %5026 = vmatprep.subr.mxu0 0.0
    %5027 = vmatpush1.msra.mxu0 0.0
    %5028 = vmatprep.subr.mxu0 0.0
    %5029 = vmatpush1.msra.mxu0 0.0
    %5030 = vmatprep.subr.mxu0 0.0
    %5031 = vmatpush1.msra.mxu0 0.0
    %5032 = vmatprep.subr.mxu0 0.0
    %5033 = vmatpush1.msra.mxu0 0.0
    %5034 = vmatprep.subr.mxu0 0.0
    %5035 = vmatpush1.msra.mxu0 0.0
    %5036 = vmatprep.mubr.f32.mxu0 0.0
    %5037 = vmatmul.mubr.f32.gmra.mrb[0].mxu0 %v4925
    %v5038 = vpop.f32.mrb[0].mxu0
    %v5039 = vadd.f32 %v4847, %v5038
    %v5040 = vpop.f32.mrb[0].mxu0
    %5041 = vmatprep.mubr.f32.mxu0 0.0
    %5042 = vmatmul.mubr.f32.gmra.mrb[0].mxu0 %v4928
    %v5043 = vpop.f32.mrb[0].mxu0
    %v5044 = vadd.f32 %v4852, %v5043
    %v5045 = vpop.f32.mrb[0].mxu0
    %5046 = vmatprep.mubr.f32.mxu0 0.0
    %5047 = vmatmul.mubr.f32.gmra.mrb[0].mxu0 %v4931
    %v5048 = vpop.f32.mrb[0].mxu0
    %v5049 = vadd.f32 %v4857, %v5048
    %v5050 = vpop.f32.mrb[0].mxu0
    %5051 = vmatprep.mubr.f32.mxu0 0.0
    %5052 = vmatmul.mubr.f32.gmra.mrb[0].mxu0 %v4934
    %v5053 = vpop.f32.mrb[0].mxu0
    %v5054 = vadd.f32 %v4862, %v5053
    %v5055 = vpop.f32.mrb[0].mxu0
    %5056 = vmatprep.mubr.f32.mxu0 0.0
    %5057 = vmatmul.mubr.f32.gmra.mrb[0].mxu0 %v4937
    %v5058 = vpop.f32.mrb[0].mxu0
    %v5059 = vadd.f32 %v4867, %v5058
    %v5060 = vpop.f32.mrb[0].mxu0
    %5061 = vmatprep.mubr.f32.mxu0 0.0
    %5062 = vmatmul.mubr.f32.gmra.mrb[0].mxu0 %v4940
    %v5063 = vpop.f32.mrb[0].mxu0
    %v5064 = vadd.f32 %v4872, %v5063
    %v5065 = vpop.f32.mrb[0].mxu0
    %5066 = vmatprep.mubr.f32.mxu0 0.0
    %5067 = vmatmul.mubr.f32.gmra.mrb[0].mxu0 %v4943
    %v5068 = vpop.f32.mrb[0].mxu0
    %v5069 = vadd.f32 %v4877, %v5068
    %v5070 = vpop.f32.mrb[0].mxu0
    %5071 = vmatprep.mubr.f32.mxu0 0.0
    %5072 = vmatmul.mubr.f32.gmra.mrb[0].mxu0 %v4946
    %v5073 = vpop.f32.mrb[0].mxu0
    %v5074 = vadd.f32 %v4882, %v5073
    %v5075 = vpop.f32.mrb[0].mxu0
    %5076 = vmatprep.mubr.f32.mxu0 0.0
    %5077 = vmatmul.mubr.f32.gmra.mrb[0].mxu0 %v4949
    %v5078 = vpop.f32.mrb[0].mxu0
    %v5079 = vadd.f32 %v4887, %v5078
    %v5080 = vpop.f32.mrb[0].mxu0
    %5081 = vmatprep.mubr.f32.mxu0 0.0
    %5082 = vmatmul.mubr.f32.gmra.mrb[0].mxu0 %v4952
    %v5083 = vpop.f32.mrb[0].mxu0
    %v5084 = vadd.f32 %v4892, %v5083
    %v5085 = vpop.f32.mrb[0].mxu0
    %5086 = vmatprep.mubr.f32.mxu0 0.0
    %5087 = vmatmul.mubr.f32.gmra.mrb[0].mxu0 %v4955
    %v5088 = vpop.f32.mrb[0].mxu0
    %v5089 = vadd.f32 %v4897, %v5088
    %v5090 = vpop.f32.mrb[0].mxu0
    %5091 = vmatprep.mubr.f32.mxu0 0.0
    %5092 = vmatmul.mubr.f32.gmra.mrb[0].mxu0 %v4958
    %v5093 = vpop.f32.mrb[0].mxu0
    %v5094 = vadd.f32 %v4902, %v5093
    %v5095 = vpop.f32.mrb[0].mxu0
    %5096 = vmatprep.mubr.f32.mxu0 0.0
    %5097 = vmatmul.mubr.f32.gmra.mrb[0].mxu0 %v4961
    %v5098 = vpop.f32.mrb[0].mxu0
    %v5099 = vadd.f32 %v4907, %v5098
    %v5100 = vpop.f32.mrb[0].mxu0
    %5101 = vmatprep.mubr.f32.mxu0 0.0
    %5102 = vmatmul.mubr.f32.gmra.mrb[0].mxu0 %v4964
    %v5103 = vpop.f32.mrb[0].mxu0
    %v5104 = vadd.f32 %v4912, %v5103
    %v5105 = vpop.f32.mrb[0].mxu0
    %5106 = vmatprep.mubr.f32.mxu0 0.0
    %5107 = vmatmul.mubr.f32.gmra.mrb[0].mxu0 %v4967
    %v5108 = vpop.f32.mrb[0].mxu0
    %v5109 = vadd.f32 %v4917, %v5108
    %v5110 = vpop.f32.mrb[0].mxu0
    %5111 = vmatprep.mubr.f32.mxu0 0.0
    %5112 = vmatmul.mubr.f32.gmra.mrb[0].mxu0 %v4970
    %v5113 = vpop.f32.mrb[0].mxu0
    %v5114 = vadd.f32 %v4922, %v5113
    %v5115 = vpop.f32.mrb[0].mxu0
    %5116 = vdwg.mxu0
    %v5117 = vxor.u32 %v5039, 2147483648
    %v5118 = vxor.u32 %v5044, 2147483648
    %v5119 = vxor.u32 %v5049, 2147483648
    %v5120 = vxor.u32 %v5054, 2147483648
    %v5121 = vxor.u32 %v5059, 2147483648
    %v5122 = vxor.u32 %v5064, 2147483648
    %v5123 = vxor.u32 %v5069, 2147483648
    %v5124 = vxor.u32 %v5074, 2147483648
    %v5125 = vxor.u32 %v5079, 2147483648
    %v5126 = vxor.u32 %v5084, 2147483648
    %v5127 = vxor.u32 %v5089, 2147483648
    %v5128 = vxor.u32 %v5094, 2147483648
    %v5129 = vxor.u32 %v5099, 2147483648
    %v5130 = vxor.u32 %v5104, 2147483648
    %v5131 = vxor.u32 %v5109, 2147483648
    %v5132 = vxor.u32 %v5114, 2147483648
    %v5133 = vmul.f32 %v5117, 1.442695
    %v5134 = vpow.pop %v5133
    %v5135 = vmul.f32 %v5118, 1.442695
    %v5136 = vpow.pop %v5135
    %v5137 = vmul.f32 %v5119, 1.442695
    %v5138 = vpow.pop %v5137
    %v5139 = vmul.f32 %v5120, 1.442695
    %v5140 = vpow.pop %v5139
    %v5141 = vmul.f32 %v5121, 1.442695
    %v5142 = vpow.pop %v5141
    %v5143 = vmul.f32 %v5122, 1.442695
    %v5144 = vpow.pop %v5143
    %v5145 = vmul.f32 %v5123, 1.442695
    %v5146 = vpow.pop %v5145
    %v5147 = vmul.f32 %v5124, 1.442695
    %v5148 = vpow.pop %v5147
    %v5149 = vmul.f32 %v5125, 1.442695
    %v5150 = vpow.pop %v5149
    %v5151 = vmul.f32 %v5126, 1.442695
    %v5152 = vpow.pop %v5151
    %v5153 = vmul.f32 %v5127, 1.442695
    %v5154 = vpow.pop %v5153
    %v5155 = vmul.f32 %v5128, 1.442695
    %v5156 = vpow.pop %v5155
    %v5157 = vmul.f32 %v5129, 1.442695
    %v5158 = vpow.pop %v5157
    %v5159 = vmul.f32 %v5130, 1.442695
    %v5160 = vpow.pop %v5159
    %v5161 = vmul.f32 %v5131, 1.442695
    %v5162 = vpow.pop %v5161
    %v5163 = vmul.f32 %v5132, 1.442695
    %v5164 = vpow.pop %v5163
    %v5165 = vadd.f32 %v5134, 1.0
    %v5166 = vadd.f32 %v5136, 1.0
    %v5167 = vadd.f32 %v5138, 1.0
    %v5168 = vadd.f32 %v5140, 1.0
    %v5169 = vadd.f32 %v5142, 1.0
    %v5170 = vadd.f32 %v5144, 1.0
    %v5171 = vadd.f32 %v5146, 1.0
    %v5172 = vadd.f32 %v5148, 1.0
    %v5173 = vadd.f32 %v5150, 1.0
    %v5174 = vadd.f32 %v5152, 1.0
    %v5175 = vadd.f32 %v5154, 1.0
    %v5176 = vadd.f32 %v5156, 1.0
    %v5177 = vadd.f32 %v5158, 1.0
    %v5178 = vadd.f32 %v5160, 1.0
    %v5179 = vadd.f32 %v5162, 1.0
    %v5180 = vadd.f32 %v5164, 1.0
    %v5181 = vrcp.pop %v5165
    %v5182 = vmul.f32 1.0, %v5181
    %v5183 = vrcp.pop %v5166
    %v5184 = vmul.f32 1.0, %v5183
    %v5185 = vrcp.pop %v5167
    %v5186 = vmul.f32 1.0, %v5185
    %v5187 = vrcp.pop %v5168
    %v5188 = vmul.f32 1.0, %v5187
    %v5189 = vrcp.pop %v5169
    %v5190 = vmul.f32 1.0, %v5189
    %v5191 = vrcp.pop %v5170
    %v5192 = vmul.f32 1.0, %v5191
    %v5193 = vrcp.pop %v5171
    %v5194 = vmul.f32 1.0, %v5193
    %v5195 = vrcp.pop %v5172
    %v5196 = vmul.f32 1.0, %v5195
    %v5197 = vrcp.pop %v5173
    %v5198 = vmul.f32 1.0, %v5197
    %v5199 = vrcp.pop %v5174
    %v5200 = vmul.f32 1.0, %v5199
    %v5201 = vrcp.pop %v5175
    %v5202 = vmul.f32 1.0, %v5201
    %v5203 = vrcp.pop %v5176
    %v5204 = vmul.f32 1.0, %v5203
    %v5205 = vrcp.pop %v5177
    %v5206 = vmul.f32 1.0, %v5205
    %v5207 = vrcp.pop %v5178
    %v5208 = vmul.f32 1.0, %v5207
    %v5209 = vrcp.pop %v5179
    %v5210 = vmul.f32 1.0, %v5209
    %v5211 = vrcp.pop %v5180
    %v5212 = vmul.f32 1.0, %v5211
    %v5214 = vsel %vm1291, %v5182, 0
    %v5217 = vsel %vm1291, %v5184, 0
    %v5220 = vsel %vm1291, %v5186, 0
    %v5223 = vsel %vm1291, %v5188, 0
    %v5226 = vsel %vm1291, %v5190, 0
    %v5229 = vsel %vm1291, %v5192, 0
    %v5232 = vsel %vm1291, %v5194, 0
    %v5235 = vsel %vm1291, %v5196, 0
    %v5238 = vsel %vm1291, %v5198, 0
    %v5241 = vsel %vm1291, %v5200, 0
    %v5244 = vsel %vm1291, %v5202, 0
    %v5247 = vsel %vm1291, %v5204, 0
    %v5250 = vsel %vm1291, %v5206, 0
    %v5253 = vsel %vm1291, %v5208, 0
    %v5256 = vsel %vm1291, %v5210, 0
    %v5259 = vsel %vm1291, %v5212, 0
    %5261 = vmatprep.subr.mxu0 0.0
    %5262 = vmatpush1.msra.mxu0 %v1306
    %5263 = vmatprep.subr.mxu0 0.0
    %5264 = vmatpush1.msra.mxu0 0.0
    %5265 = vmatprep.subr.mxu0 0.0
    %5266 = vmatpush1.msra.mxu0 0.0
    %5267 = vmatprep.subr.mxu0 0.0
    %5268 = vmatpush1.msra.mxu0 0.0
    %5269 = vmatprep.subr.mxu0 0.0
    %5270 = vmatpush1.msra.mxu0 0.0
    %5271 = vmatprep.subr.mxu0 0.0
    %5272 = vmatpush1.msra.mxu0 0.0
    %5273 = vmatprep.subr.mxu0 0.0
    %5274 = vmatpush1.msra.mxu0 0.0
    %5275 = vmatprep.subr.mxu0 0.0
    %5276 = vmatpush1.msra.mxu0 0.0
    %5277 = vmatprep.subr.mxu0 0.0
    %5278 = vmatpush1.msra.mxu0 0.0
    %5279 = vmatprep.subr.mxu0 0.0
    %5280 = vmatpush1.msra.mxu0 0.0
    %5281 = vmatprep.subr.mxu0 0.0
    %5282 = vmatpush1.msra.mxu0 0.0
    %5283 = vmatprep.subr.mxu0 0.0
    %5284 = vmatpush1.msra.mxu0 0.0
    %5285 = vmatprep.subr.mxu0 0.0
    %5286 = vmatpush1.msra.mxu0 0.0
    %5287 = vmatprep.subr.mxu0 0.0
    %5288 = vmatpush1.msra.mxu0 0.0
    %5289 = vmatprep.subr.mxu0 0.0
    %5290 = vmatpush1.msra.mxu0 0.0
    %5291 = vmatprep.subr.mxu0 0.0
    %5292 = vmatpush1.msra.mxu0 0.0
    %5293 = vmatprep.subr.mxu0 0.0
    %5294 = vmatpush1.msra.mxu0 0.0
    %5295 = vmatprep.subr.mxu0 0.0
    %5296 = vmatpush1.msra.mxu0 0.0
    %5297 = vmatprep.subr.mxu0 0.0
    %5298 = vmatpush1.msra.mxu0 0.0
    %5299 = vmatprep.subr.mxu0 0.0
    %5300 = vmatpush1.msra.mxu0 0.0
    %5301 = vmatprep.subr.mxu0 0.0
    %5302 = vmatpush1.msra.mxu0 0.0
    %5303 = vmatprep.subr.mxu0 0.0
    %5304 = vmatpush1.msra.mxu0 0.0
    %5305 = vmatprep.subr.mxu0 0.0
    %5306 = vmatpush1.msra.mxu0 0.0
    %5307 = vmatprep.subr.mxu0 0.0
    %5308 = vmatpush1.msra.mxu0 0.0
    %5309 = vmatprep.subr.mxu0 0.0
    %5310 = vmatpush1.msra.mxu0 0.0
    %5311 = vmatprep.subr.mxu0 0.0
    %5312 = vmatpush1.msra.mxu0 0.0
    %5313 = vmatprep.subr.mxu0 0.0
    %5314 = vmatpush1.msra.mxu0 0.0
    %5315 = vmatprep.subr.mxu0 0.0
    %5316 = vmatpush1.msra.mxu0 0.0
    %5317 = vmatprep.subr.mxu0 0.0
    %5318 = vmatpush1.msra.mxu0 0.0
    %5319 = vmatprep.subr.mxu0 0.0
    %5320 = vmatpush1.msra.mxu0 0.0
    %5321 = vmatprep.subr.mxu0 0.0
    %5322 = vmatpush1.msra.mxu0 0.0
    %5323 = vmatprep.subr.mxu0 0.0
    %5324 = vmatpush1.msra.mxu0 0.0
    %5325 = vmatprep.mubr.f32.mxu0 0.0
    %5326 = vmatmul.mubr.f32.gmra.mrb[0].mxu0 %v5214
    %v5327 = vpop.f32.mrb[0].mxu0
    %v5328 = vadd.f32 0.0, %v5327
    %v5329 = vpop.f32.mrb[0].mxu0
    %5330 = vmatprep.mubr.f32.mxu0 0.0
    %5331 = vmatmul.mubr.f32.gmra.mrb[0].mxu0 %v5217
    %v5332 = vpop.f32.mrb[0].mxu0
    %v5333 = vadd.f32 0.0, %v5332
    %v5334 = vpop.f32.mrb[0].mxu0
    %5335 = vmatprep.mubr.f32.mxu0 0.0
    %5336 = vmatmul.mubr.f32.gmra.mrb[0].mxu0 %v5220
    %v5337 = vpop.f32.mrb[0].mxu0
    %v5338 = vadd.f32 0.0, %v5337
    %v5339 = vpop.f32.mrb[0].mxu0
    %5340 = vmatprep.mubr.f32.mxu0 0.0
    %5341 = vmatmul.mubr.f32.gmra.mrb[0].mxu0 %v5223
    %v5342 = vpop.f32.mrb[0].mxu0
    %v5343 = vadd.f32 0.0, %v5342
    %v5344 = vpop.f32.mrb[0].mxu0
    %5345 = vmatprep.mubr.f32.mxu0 0.0
    %5346 = vmatmul.mubr.f32.gmra.mrb[0].mxu0 %v5226
    %v5347 = vpop.f32.mrb[0].mxu0
    %v5348 = vadd.f32 0.0, %v5347
    %v5349 = vpop.f32.mrb[0].mxu0
    %5350 = vmatprep.mubr.f32.mxu0 0.0
    %5351 = vmatmul.mubr.f32.gmra.mrb[0].mxu0 %v5229
    %v5352 = vpop.f32.mrb[0].mxu0
    %v5353 = vadd.f32 0.0, %v5352
    %v5354 = vpop.f32.mrb[0].mxu0
    %5355 = vmatprep.mubr.f32.mxu0 0.0
    %5356 = vmatmul.mubr.f32.gmra.mrb[0].mxu0 %v5232
    %v5357 = vpop.f32.mrb[0].mxu0
    %v5358 = vadd.f32 0.0, %v5357
    %v5359 = vpop.f32.mrb[0].mxu0
    %5360 = vmatprep.mubr.f32.mxu0 0.0
    %5361 = vmatmul.mubr.f32.gmra.mrb[0].mxu0 %v5235
    %v5362 = vpop.f32.mrb[0].mxu0
    %v5363 = vadd.f32 0.0, %v5362
    %v5364 = vpop.f32.mrb[0].mxu0
    %5365 = vmatprep.mubr.f32.mxu0 0.0
    %5366 = vmatmul.mubr.f32.gmra.mrb[0].mxu0 %v5238
    %v5367 = vpop.f32.mrb[0].mxu0
    %v5368 = vadd.f32 0.0, %v5367
    %v5369 = vpop.f32.mrb[0].mxu0
    %5370 = vmatprep.mubr.f32.mxu0 0.0
    %5371 = vmatmul.mubr.f32.gmra.mrb[0].mxu0 %v5241
    %v5372 = vpop.f32.mrb[0].mxu0
    %v5373 = vadd.f32 0.0, %v5372
    %v5374 = vpop.f32.mrb[0].mxu0
    %5375 = vmatprep.mubr.f32.mxu0 0.0
    %5376 = vmatmul.mubr.f32.gmra.mrb[0].mxu0 %v5244
    %v5377 = vpop.f32.mrb[0].mxu0
    %v5378 = vadd.f32 0.0, %v5377
    %v5379 = vpop.f32.mrb[0].mxu0
    %5380 = vmatprep.mubr.f32.mxu0 0.0
    %5381 = vmatmul.mubr.f32.gmra.mrb[0].mxu0 %v5247
    %v5382 = vpop.f32.mrb[0].mxu0
    %v5383 = vadd.f32 0.0, %v5382
    %v5384 = vpop.f32.mrb[0].mxu0
    %5385 = vmatprep.mubr.f32.mxu0 0.0
    %5386 = vmatmul.mubr.f32.gmra.mrb[0].mxu0 %v5250
    %v5387 = vpop.f32.mrb[0].mxu0
    %v5388 = vadd.f32 0.0, %v5387
    %v5389 = vpop.f32.mrb[0].mxu0
    %5390 = vmatprep.mubr.f32.mxu0 0.0
    %5391 = vmatmul.mubr.f32.gmra.mrb[0].mxu0 %v5253
    %v5392 = vpop.f32.mrb[0].mxu0
    %v5393 = vadd.f32 0.0, %v5392
    %v5394 = vpop.f32.mrb[0].mxu0
    %5395 = vmatprep.mubr.f32.mxu0 0.0
    %5396 = vmatmul.mubr.f32.gmra.mrb[0].mxu0 %v5256
    %v5397 = vpop.f32.mrb[0].mxu0
    %v5398 = vadd.f32 0.0, %v5397
    %v5399 = vpop.f32.mrb[0].mxu0
    %5400 = vmatprep.mubr.f32.mxu0 0.0
    %5401 = vmatmul.mubr.f32.gmra.mrb[0].mxu0 %v5259
    %v5402 = vpop.f32.mrb[0].mxu0
    %v5403 = vadd.f32 0.0, %v5402
    %v5404 = vpop.f32.mrb[0].mxu0
    %5405 = vdwg.mxu0
    %v5406 = vmul.f32 %v4458, %v5328
    %v5407 = vmul.f32 %v4459, %v5333
    %v5408 = vmul.f32 %v4460, %v5338
    %v5409 = vmul.f32 %v4461, %v5343
    %v5410 = vmul.f32 %v4462, %v5348
    %v5411 = vmul.f32 %v4463, %v5353
    %v5412 = vmul.f32 %v4464, %v5358
    %v5413 = vmul.f32 %v4465, %v5363
    %v5414 = vmul.f32 %v4466, %v5368
    %v5415 = vmul.f32 %v4467, %v5373
    %v5416 = vmul.f32 %v4468, %v5378
    %v5417 = vmul.f32 %v4469, %v5383
    %v5418 = vmul.f32 %v4470, %v5388
    %v5419 = vmul.f32 %v4471, %v5393
    %v5420 = vmul.f32 %v4472, %v5398
    %v5421 = vmul.f32 %v4473, %v5403
    %v5422 = vadd.f32 %v5406, %v4458
    %v5423 = vadd.f32 %v5407, %v4459
    %v5424 = vadd.f32 %v5408, %v4460
    %v5425 = vadd.f32 %v5409, %v4461
    %v5426 = vadd.f32 %v5410, %v4462
    %v5427 = vadd.f32 %v5411, %v4463
    %v5428 = vadd.f32 %v5412, %v4464
    %v5429 = vadd.f32 %v5413, %v4465
    %v5430 = vadd.f32 %v5414, %v4466
    %v5431 = vadd.f32 %v5415, %v4467
    %v5432 = vadd.f32 %v5416, %v4468
    %v5433 = vadd.f32 %v5417, %v4469
    %v5434 = vadd.f32 %v5418, %v4470
    %v5435 = vadd.f32 %v5419, %v4471
    %v5436 = vadd.f32 %v5420, %v4472
    %v5437 = vadd.f32 %v5421, %v4473
    %5439 = vset.pattern.permute.xlu0 0
    %5440 = vperm.xlu0 %5439, %v3209
    %v5441 = vpop.permute.xlu0 %5440
    %5444 = vset.pattern.permute.xlu0 0
    %5445 = vperm.xlu0 %5444, %v3210
    %v5446 = vpop.permute.xlu0 %5445
    %5449 = vset.pattern.permute.xlu0 0
    %5450 = vperm.xlu0 %5449, %v3211
    %v5451 = vpop.permute.xlu0 %5450
    %5454 = vset.pattern.permute.xlu0 0
    %5455 = vperm.xlu0 %5454, %v3212
    %v5456 = vpop.permute.xlu0 %5455
    %5459 = vset.pattern.permute.xlu0 0
    %5460 = vperm.xlu0 %5459, %v3213
    %v5461 = vpop.permute.xlu0 %5460
    %5464 = vset.pattern.permute.xlu0 0
    %5465 = vperm.xlu0 %5464, %v3214
    %v5466 = vpop.permute.xlu0 %5465
    %5469 = vset.pattern.permute.xlu0 0
    %5470 = vperm.xlu0 %5469, %v3215
    %v5471 = vpop.permute.xlu0 %5470
    %5474 = vset.pattern.permute.xlu0 0
    %5475 = vperm.xlu0 %5474, %v3216
    %v5476 = vpop.permute.xlu0 %5475
    %5479 = vset.pattern.permute.xlu0 0
    %5480 = vperm.xlu0 %5479, %v3217
    %v5481 = vpop.permute.xlu0 %5480
    %5484 = vset.pattern.permute.xlu0 0
    %5485 = vperm.xlu0 %5484, %v3218
    %v5486 = vpop.permute.xlu0 %5485
    %5489 = vset.pattern.permute.xlu0 0
    %5490 = vperm.xlu0 %5489, %v3219
    %v5491 = vpop.permute.xlu0 %5490
    %5494 = vset.pattern.permute.xlu0 0
    %5495 = vperm.xlu0 %5494, %v3220
    %v5496 = vpop.permute.xlu0 %5495
    %5499 = vset.pattern.permute.xlu0 0
    %5500 = vperm.xlu0 %5499, %v3221
    %v5501 = vpop.permute.xlu0 %5500
    %5504 = vset.pattern.permute.xlu0 0
    %5505 = vperm.xlu0 %5504, %v3222
    %v5506 = vpop.permute.xlu0 %5505
    %5509 = vset.pattern.permute.xlu0 0
    %5510 = vperm.xlu0 %5509, %v3223
    %v5511 = vpop.permute.xlu0 %5510
    %5514 = vset.pattern.permute.xlu0 0
    %5515 = vperm.xlu0 %5514, %v3224
    %v5516 = vpop.permute.xlu0 %5515
    %v5518 = vmul.f32 %v5422, %v5441
    %v5519 = vmul.f32 %v5423, %v5446
    %v5520 = vmul.f32 %v5424, %v5451
    %v5521 = vmul.f32 %v5425, %v5456
    %v5522 = vmul.f32 %v5426, %v5461
    %v5523 = vmul.f32 %v5427, %v5466
    %v5524 = vmul.f32 %v5428, %v5471
    %v5525 = vmul.f32 %v5429, %v5476
    %v5526 = vmul.f32 %v5430, %v5481
    %v5527 = vmul.f32 %v5431, %v5486
    %v5528 = vmul.f32 %v5432, %v5491
    %v5529 = vmul.f32 %v5433, %v5496
    %v5530 = vmul.f32 %v5434, %v5501
    %v5531 = vmul.f32 %v5435, %v5506
    %v5532 = vmul.f32 %v5436, %v5511
    %v5533 = vmul.f32 %v5437, %v5516
    %5535 = vset.pattern.permute.xlu0 0
    %5536 = vperm.xlu0 %5535, %v3225
    %v5537 = vpop.permute.xlu0 %5536
    %5540 = vset.pattern.permute.xlu0 0
    %5541 = vperm.xlu0 %5540, %v3226
    %v5542 = vpop.permute.xlu0 %5541
    %5545 = vset.pattern.permute.xlu0 0
    %5546 = vperm.xlu0 %5545, %v3227
    %v5547 = vpop.permute.xlu0 %5546
    %5550 = vset.pattern.permute.xlu0 0
    %5551 = vperm.xlu0 %5550, %v3228
    %v5552 = vpop.permute.xlu0 %5551
    %5555 = vset.pattern.permute.xlu0 0
    %5556 = vperm.xlu0 %5555, %v3229
    %v5557 = vpop.permute.xlu0 %5556
    %5560 = vset.pattern.permute.xlu0 0
    %5561 = vperm.xlu0 %5560, %v3230
    %v5562 = vpop.permute.xlu0 %5561
    %5565 = vset.pattern.permute.xlu0 0
    %5566 = vperm.xlu0 %5565, %v3231
    %v5567 = vpop.permute.xlu0 %5566
    %5570 = vset.pattern.permute.xlu0 0
    %5571 = vperm.xlu0 %5570, %v3232
    %v5572 = vpop.permute.xlu0 %5571
    %5575 = vset.pattern.permute.xlu0 0
    %5576 = vperm.xlu0 %5575, %v3233
    %v5577 = vpop.permute.xlu0 %5576
    %5580 = vset.pattern.permute.xlu0 0
    %5581 = vperm.xlu0 %5580, %v3234
    %v5582 = vpop.permute.xlu0 %5581
    %5585 = vset.pattern.permute.xlu0 0
    %5586 = vperm.xlu0 %5585, %v3235
    %v5587 = vpop.permute.xlu0 %5586
    %5590 = vset.pattern.permute.xlu0 0
    %5591 = vperm.xlu0 %5590, %v3236
    %v5592 = vpop.permute.xlu0 %5591
    %5595 = vset.pattern.permute.xlu0 0
    %5596 = vperm.xlu0 %5595, %v3237
    %v5597 = vpop.permute.xlu0 %5596
    %5600 = vset.pattern.permute.xlu0 0
    %5601 = vperm.xlu0 %5600, %v3238
    %v5602 = vpop.permute.xlu0 %5601
    %5605 = vset.pattern.permute.xlu0 0
    %5606 = vperm.xlu0 %5605, %v3239
    %v5607 = vpop.permute.xlu0 %5606
    %5610 = vset.pattern.permute.xlu0 0
    %5611 = vperm.xlu0 %5610, %v3240
    %v5612 = vpop.permute.xlu0 %5611
    %v5614 = vadd.f32 %v5518, %v5537
    %v5615 = vadd.f32 %v5519, %v5542
    %v5616 = vadd.f32 %v5520, %v5547
    %v5617 = vadd.f32 %v5521, %v5552
    %v5618 = vadd.f32 %v5522, %v5557
    %v5619 = vadd.f32 %v5523, %v5562
    %v5620 = vadd.f32 %v5524, %v5567
    %v5621 = vadd.f32 %v5525, %v5572
    %v5622 = vadd.f32 %v5526, %v5577
    %v5623 = vadd.f32 %v5527, %v5582
    %v5624 = vadd.f32 %v5528, %v5587
    %v5625 = vadd.f32 %v5529, %v5592
    %v5626 = vadd.f32 %v5530, %v5597
    %v5627 = vadd.f32 %v5531, %v5602
    %v5628 = vadd.f32 %v5532, %v5607
    %v5629 = vadd.f32 %v5533, %v5612
    %v5630 = vadd.f32 %v5614, %v4364
    %v5631 = vadd.f32 %v5615, %v4369
    %v5632 = vadd.f32 %v5616, %v4374
    %v5633 = vadd.f32 %v5617, %v4379
    %v5634 = vadd.f32 %v5618, %v4384
    %v5635 = vadd.f32 %v5619, %v4389
    %v5636 = vadd.f32 %v5620, %v4394
    %v5637 = vadd.f32 %v5621, %v4399
    %v5638 = vadd.f32 %v5622, %v4404
    %v5639 = vadd.f32 %v5623, %v4409
    %v5640 = vadd.f32 %v5624, %v4414
    %v5641 = vadd.f32 %v5625, %v4419
    %v5642 = vadd.f32 %v5626, %v4424
    %v5643 = vadd.f32 %v5627, %v4429
    %v5644 = vadd.f32 %v5628, %v4434
    %v5645 = vadd.f32 %v5629, %v4439
    %v5646 = vmax.f32 %v5630, 0.0
    %v5647 = vmax.f32 %v5631, 0.0
    %v5648 = vmax.f32 %v5632, 0.0
    %v5649 = vmax.f32 %v5633, 0.0
    %v5650 = vmax.f32 %v5634, 0.0
    %v5651 = vmax.f32 %v5635, 0.0
    %v5652 = vmax.f32 %v5636, 0.0
    %v5653 = vmax.f32 %v5637, 0.0
    %v5654 = vmax.f32 %v5638, 0.0
    %v5655 = vmax.f32 %v5639, 0.0
    %v5656 = vmax.f32 %v5640, 0.0
    %v5657 = vmax.f32 %v5641, 0.0
    %v5658 = vmax.f32 %v5642, 0.0
    %v5659 = vmax.f32 %v5643, 0.0
    %v5660 = vmax.f32 %v5644, 0.0
    %v5661 = vmax.f32 %v5645, 0.0
    %v5663 = vsel %vm621, %v5646, 0
    %v5666 = vsel %vm621, %v5647, 0
    %v5669 = vsel %vm621, %v5648, 0
    %v5672 = vsel %vm621, %v5649, 0
    %v5675 = vsel %vm621, %v5650, 0
    %v5678 = vsel %vm621, %v5651, 0
    %v5681 = vsel %vm621, %v5652, 0
    %v5684 = vsel %vm621, %v5653, 0
    %v5687 = vsel %vm621, %v5654, 0
    %v5690 = vsel %vm621, %v5655, 0
    %v5693 = vsel %vm621, %v5656, 0
    %v5696 = vsel %vm621, %v5657, 0
    %v5699 = vsel %vm621, %v5658, 0
    %v5702 = vsel %vm621, %v5659, 0
    %v5705 = vsel %vm621, %v5660, 0
    %v5708 = vsel %vm621, %v5661, 0
    %5710 = vmatprep.subr.mxu0 0.0
    %5711 = vmatpush1.msra.mxu0 %v164
    %5712 = vmatprep.subr.mxu0 0.0
    %5713 = vmatpush1.msra.mxu0 %v165
    %5714 = vmatprep.subr.mxu0 0.0
    %5715 = vmatpush1.msra.mxu0 %v166
    %5716 = vmatprep.subr.mxu0 0.0
    %5717 = vmatpush1.msra.mxu0 %v167
    %5718 = vmatprep.subr.mxu0 0.0
    %5719 = vmatpush1.msra.mxu0 %v168
    %5720 = vmatprep.subr.mxu0 0.0
    %5721 = vmatpush1.msra.mxu0 %v169
    %5722 = vmatprep.subr.mxu0 0.0
    %5723 = vmatpush1.msra.mxu0 %v170
    %5724 = vmatprep.subr.mxu0 0.0
    %5725 = vmatpush1.msra.mxu0 %v171
    %5726 = vmatprep.subr.mxu0 0.0
    %5727 = vmatpush1.msra.mxu0 %v172
    %5728 = vmatprep.subr.mxu0 0.0
    %5729 = vmatpush1.msra.mxu0 %v173
    %5730 = vmatprep.subr.mxu0 0.0
    %5731 = vmatpush1.msra.mxu0 %v174
    %5732 = vmatprep.subr.mxu0 0.0
    %5733 = vmatpush1.msra.mxu0 %v175
    %5734 = vmatprep.subr.mxu0 0.0
    %5735 = vmatpush1.msra.mxu0 %v176
    %5736 = vmatprep.subr.mxu0 0.0
    %5737 = vmatpush1.msra.mxu0 %v177
    %5738 = vmatprep.subr.mxu0 0.0
    %5739 = vmatpush1.msra.mxu0 %v178
    %5740 = vmatprep.subr.mxu0 0.0
    %5741 = vmatpush1.msra.mxu0 %v962
    %5742 = vmatprep.subr.mxu0 0.0
    %5743 = vmatpush1.msra.mxu0 0.0
    %5744 = vmatprep.subr.mxu0 0.0
    %5745 = vmatpush1.msra.mxu0 0.0
    %5746 = vmatprep.subr.mxu0 0.0
    %5747 = vmatpush1.msra.mxu0 0.0
    %5748 = vmatprep.subr.mxu0 0.0
    %5749 = vmatpush1.msra.mxu0 0.0
    %5750 = vmatprep.subr.mxu0 0.0
    %5751 = vmatpush1.msra.mxu0 0.0
    %5752 = vmatprep.subr.mxu0 0.0
    %5753 = vmatpush1.msra.mxu0 0.0
    %5754 = vmatprep.subr.mxu0 0.0
    %5755 = vmatpush1.msra.mxu0 0.0
    %5756 = vmatprep.subr.mxu0 0.0
    %5757 = vmatpush1.msra.mxu0 0.0
    %5758 = vmatprep.subr.mxu0 0.0
    %5759 = vmatpush1.msra.mxu0 0.0
    %5760 = vmatprep.subr.mxu0 0.0
    %5761 = vmatpush1.msra.mxu0 0.0
    %5762 = vmatprep.subr.mxu0 0.0
    %5763 = vmatpush1.msra.mxu0 0.0
    %5764 = vmatprep.subr.mxu0 0.0
    %5765 = vmatpush1.msra.mxu0 0.0
    %5766 = vmatprep.subr.mxu0 0.0
    %5767 = vmatpush1.msra.mxu0 0.0
    %5768 = vmatprep.subr.mxu0 0.0
    %5769 = vmatpush1.msra.mxu0 0.0
    %5770 = vmatprep.subr.mxu0 0.0
    %5771 = vmatpush1.msra.mxu0 0.0
    %5772 = vmatprep.subr.mxu0 0.0
    %5773 = vmatpush1.msra.mxu0 0.0
    %5774 = vmatprep.mubr.f32.mxu0 0.0
    %5775 = vmatmul.mubr.f32.gmra.mrb[0].mxu0 %v5663
    %v5776 = vpop.f32.mrb[0].mxu0
    %v5777 = vadd.f32 0.0, %v5776
    %v5778 = vpop.f32.mrb[0].mxu0
    %5779 = vmatprep.mubr.f32.mxu0 0.0
    %5780 = vmatmul.mubr.f32.gmra.mrb[0].mxu0 %v5666
    %v5781 = vpop.f32.mrb[0].mxu0
    %v5782 = vadd.f32 0.0, %v5781
    %v5783 = vpop.f32.mrb[0].mxu0
    %5784 = vmatprep.mubr.f32.mxu0 0.0
    %5785 = vmatmul.mubr.f32.gmra.mrb[0].mxu0 %v5669
    %v5786 = vpop.f32.mrb[0].mxu0
    %v5787 = vadd.f32 0.0, %v5786
    %v5788 = vpop.f32.mrb[0].mxu0
    %5789 = vmatprep.mubr.f32.mxu0 0.0
    %5790 = vmatmul.mubr.f32.gmra.mrb[0].mxu0 %v5672
    %v5791 = vpop.f32.mrb[0].mxu0
    %v5792 = vadd.f32 0.0, %v5791
    %v5793 = vpop.f32.mrb[0].mxu0
    %5794 = vmatprep.mubr.f32.mxu0 0.0
    %5795 = vmatmul.mubr.f32.gmra.mrb[0].mxu0 %v5675
    %v5796 = vpop.f32.mrb[0].mxu0
    %v5797 = vadd.f32 0.0, %v5796
    %v5798 = vpop.f32.mrb[0].mxu0
    %5799 = vmatprep.mubr.f32.mxu0 0.0
    %5800 = vmatmul.mubr.f32.gmra.mrb[0].mxu0 %v5678
    %v5801 = vpop.f32.mrb[0].mxu0
    %v5802 = vadd.f32 0.0, %v5801
    %v5803 = vpop.f32.mrb[0].mxu0
    %5804 = vmatprep.mubr.f32.mxu0 0.0
    %5805 = vmatmul.mubr.f32.gmra.mrb[0].mxu0 %v5681
    %v5806 = vpop.f32.mrb[0].mxu0
    %v5807 = vadd.f32 0.0, %v5806
    %v5808 = vpop.f32.mrb[0].mxu0
    %5809 = vmatprep.mubr.f32.mxu0 0.0
    %5810 = vmatmul.mubr.f32.gmra.mrb[0].mxu0 %v5684
    %v5811 = vpop.f32.mrb[0].mxu0
    %v5812 = vadd.f32 0.0, %v5811
    %v5813 = vpop.f32.mrb[0].mxu0
    %5814 = vmatprep.mubr.f32.mxu0 0.0
    %5815 = vmatmul.mubr.f32.gmra.mrb[0].mxu0 %v5687
    %v5816 = vpop.f32.mrb[0].mxu0
    %v5817 = vadd.f32 0.0, %v5816
    %v5818 = vpop.f32.mrb[0].mxu0
    %5819 = vmatprep.mubr.f32.mxu0 0.0
    %5820 = vmatmul.mubr.f32.gmra.mrb[0].mxu0 %v5690
    %v5821 = vpop.f32.mrb[0].mxu0
    %v5822 = vadd.f32 0.0, %v5821
    %v5823 = vpop.f32.mrb[0].mxu0
    %5824 = vmatprep.mubr.f32.mxu0 0.0
    %5825 = vmatmul.mubr.f32.gmra.mrb[0].mxu0 %v5693
    %v5826 = vpop.f32.mrb[0].mxu0
    %v5827 = vadd.f32 0.0, %v5826
    %v5828 = vpop.f32.mrb[0].mxu0
    %5829 = vmatprep.mubr.f32.mxu0 0.0
    %5830 = vmatmul.mubr.f32.gmra.mrb[0].mxu0 %v5696
    %v5831 = vpop.f32.mrb[0].mxu0
    %v5832 = vadd.f32 0.0, %v5831
    %v5833 = vpop.f32.mrb[0].mxu0
    %5834 = vmatprep.mubr.f32.mxu0 0.0
    %5835 = vmatmul.mubr.f32.gmra.mrb[0].mxu0 %v5699
    %v5836 = vpop.f32.mrb[0].mxu0
    %v5837 = vadd.f32 0.0, %v5836
    %v5838 = vpop.f32.mrb[0].mxu0
    %5839 = vmatprep.mubr.f32.mxu0 0.0
    %5840 = vmatmul.mubr.f32.gmra.mrb[0].mxu0 %v5702
    %v5841 = vpop.f32.mrb[0].mxu0
    %v5842 = vadd.f32 0.0, %v5841
    %v5843 = vpop.f32.mrb[0].mxu0
    %5844 = vmatprep.mubr.f32.mxu0 0.0
    %5845 = vmatmul.mubr.f32.gmra.mrb[0].mxu0 %v5705
    %v5846 = vpop.f32.mrb[0].mxu0
    %v5847 = vadd.f32 0.0, %v5846
    %v5848 = vpop.f32.mrb[0].mxu0
    %5849 = vmatprep.mubr.f32.mxu0 0.0
    %5850 = vmatmul.mubr.f32.gmra.mrb[0].mxu0 %v5708
    %v5851 = vpop.f32.mrb[0].mxu0
    %v5852 = vadd.f32 0.0, %v5851
    %v5853 = vpop.f32.mrb[0].mxu0
    %5854 = vdwg.mxu0
    %5855 = vst.msk [vmem:[%s67] sm:$0xff] %vm1291, %v5777
    %5856 = vst.msk [vmem:[%s67 + $0x8] sm:$0xff] %vm1291, %v5782
    %5857 = vst.msk [vmem:[%s67 + $0x10] sm:$0xff] %vm1291, %v5787
    %5858 = vst.msk [vmem:[%s67 + $0x18] sm:$0xff] %vm1291, %v5792
    %5859 = vst.msk [vmem:[%s67 + $0x20] sm:$0xff] %vm1291, %v5797
    %5860 = vst.msk [vmem:[%s67 + $0x28] sm:$0xff] %vm1291, %v5802
    %5861 = vst.msk [vmem:[%s67 + $0x30] sm:$0xff] %vm1291, %v5807
    %5862 = vst.msk [vmem:[%s67 + $0x38] sm:$0xff] %vm1291, %v5812
    %5863 = vst.msk [vmem:[%s67 + $0x40] sm:$0xff] %vm1291, %v5817
    %5864 = vst.msk [vmem:[%s67 + $0x48] sm:$0xff] %vm1291, %v5822
    %5865 = vst.msk [vmem:[%s67 + $0x50] sm:$0xff] %vm1291, %v5827
    %5866 = vst.msk [vmem:[%s67 + $0x58] sm:$0xff] %vm1291, %v5832
    %5867 = vst.msk [vmem:[%s67 + $0x60] sm:$0xff] %vm1291, %v5837
    %5868 = vst.msk [vmem:[%s67 + $0x68] sm:$0xff] %vm1291, %v5842
    %5869 = vst.msk [vmem:[%s67 + $0x70] sm:$0xff] %vm1291, %v5847
    %5870 = vst.msk [vmem:[%s67 + $0x78] sm:$0xff] %vm1291, %v5852
    // Predicated region
    $region130: #{shared_net_forward.1} parent=1 // pred_check
      _
    $region131: #{shared_net_forward.1} parent=1 // pred_check_branch
      %5872 = sbr.rel (0) target = $region133
    $region132: #{shared_net_forward.1} parent=1 // pred_region
      _
    $region133: #{shared_net_forward.1} parent=1 // pred_fallthru
      _
    // Predicated region
    $region134: #{shared_net_forward.1} parent=1 // pred_check
      _
    $region135: #{shared_net_forward.1} parent=1 // pred_check_branch
      %5874 = sbr.rel (0) target = $region137
    $region136: #{shared_net_forward.1} parent=1 // pred_region
      _
    $region137: #{shared_net_forward.1} parent=1 // pred_fallthru
      _
    // Predicated region
    $region138: #{shared_net_forward.1} parent=1 // pred_check
      _
    $region139: #{shared_net_forward.1} parent=1 // pred_check_branch
      %5876 = sbr.rel (0) target = $region141
    $region140: #{shared_net_forward.1} parent=1 // pred_region
      _
    $region141: #{shared_net_forward.1} parent=1 // pred_fallthru
      _
    // Predicated region
    $region142: #{shared_net_forward.1} parent=1 // pred_check
      _
    $region143: #{shared_net_forward.1} parent=1 // pred_check_branch
      %5878 = sbr.rel (0) target = $region145
    $region144: #{shared_net_forward.1} parent=1 // pred_region
      _
    $region145: #{shared_net_forward.1} parent=1 // pred_fallthru
      _
    // Predicated region
    $region146: #{shared_net_forward.1} parent=1 // pred_check
      _
    $region147: #{shared_net_forward.1} parent=1 // pred_check_branch
      %5880 = sbr.rel (0) target = $region149
    $region148: #{shared_net_forward.1} parent=1 // pred_region
      _
    $region149: #{shared_net_forward.1} parent=1 // pred_fallthru
      _
    // Predicated region
    $region150: #{shared_net_forward.1} parent=1 // pred_check
      _
    $region151: #{shared_net_forward.1} parent=1 // pred_check_branch
      %5882 = sbr.rel (0) target = $region153
    $region152: #{shared_net_forward.1} parent=1 // pred_region
      _
    $region153: #{shared_net_forward.1} parent=1 // pred_fallthru
      _
    %5883 = vsyncpa [#allocation3], 1

</llo_original>
